<compile_context>
chip_gen: v6e
topology: v6e:2x2x1
jax: 0.10.0
libtpu: 0.0.40
codegen_flags: <defaults>
</compile_context>

<pallas_src>
import jax
import jax.numpy as jnp
from jax.experimental import pallas as pl
from jax.experimental.pallas import tpu as pltpu
import numpy as np

_EPS = 1e-5  # nn.InstanceNorm2d default


def resblock_kernel(xp_ref, w1_ref, b1_ref, w2_ref, b2_ref, o_ref):
    # xp_ref: (1, H+2, W+2, C) bf16 -- input already reflect-padded by 1 (wrapper).
    # w*_ref: (9, C, C) bf16 -- tap-major weights, w[t][ci, co] = conv_w[co, ci, dy, dx].
    # b*_ref: (1, C) f32
    # o_ref : (1, H, W, C) f32
    _, H, W, C = o_ref.shape
    HW = H * W

    xp = xp_ref[0]  # (H+2, W+2, C) bf16

    def conv3x3(tp, w_ref, b_ref):
        # tp: reflect-padded activation (H+2, W+2, C) bf16.
        # 9-tap accumulation: one (H*W, C) @ (C, C) bf16 MXU matmul per tap,
        # accumulated in f32 (no im2col concat, no per-row matmul loop).
        acc = jnp.zeros((HW, C), jnp.float32)
        for t in range(9):
            dy, dx = t // 3, t % 3
            tap = tp[dy:dy + H, dx:dx + W, :].reshape(HW, C)  # bf16, layout-preserving merge
            acc = acc + jnp.dot(tap, w_ref[t], preferred_element_type=jnp.float32)
        return acc + b_ref[...]  # (HW, C) f32; bias folded into same sweep

    def instance_norm(y):
        # InstanceNorm2d(affine=False), biased variance, single-pass statistics.
        inv_n = 1.0 / HW
        s = jnp.sum(y, axis=0, keepdims=True)
        s2 = jnp.sum(y * y, axis=0, keepdims=True)
        mu = s * inv_n
        var = s2 * inv_n - mu * mu
        return (y - mu) * jax.lax.rsqrt(var + _EPS)

    def reflect_pad1(t):
        # t: (H, W, C); ReflectionPad2d(1). Requires H >= 2 and W >= 2.
        t = jnp.concatenate([t[1:2], t, t[H - 2:H - 1]], axis=0)
        t = jnp.concatenate([t[:, 1:2, :], t, t[:, W - 2:W - 1, :]], axis=1)
        return t

    # conv1 -> IN -> ReLU
    y = jnp.maximum(instance_norm(conv3x3(xp, w1_ref, b1_ref)), 0.0)   # (HW, C) f32

    # conv2 -> IN  (pad the intermediate in-kernel)
    yp = reflect_pad1(y.reshape(H, W, C).astype(xp.dtype))             # (H+2, W+2, C) bf16
    y = instance_norm(conv3x3(yp, w2_ref, b2_ref))                     # (HW, C) f32

    # residual add (interior of the padded input) + final ReLU
    x_in = xp[1:H + 1, 1:W + 1, :].reshape(HW, C).astype(jnp.float32)
    o_ref[0] = jnp.maximum(x_in + y, 0.0).reshape(H, W, C).astype(o_ref.dtype)


def resblock_forward(x_nchw, w1, b1, w2, b2):
    """x_nchw: (B, C, H, W) f32; w*: (C, C, 3, 3) PyTorch OIHW; b*: (C,). Returns NCHW f32."""
    B, C, H, W = x_nchw.shape
    assert H >= 2 and W >= 2, "ReflectionPad2d(1) requires H >= 2 and W >= 2"

    # NHWC, bf16 activations in HBM (halves DMA); reflect-pad once in XLA so the kernel
    # only pads the intermediate activation.
    x = jnp.transpose(x_nchw, (0, 2, 3, 1)).astype(jnp.bfloat16)          # (B, H, W, C)
    xp = jnp.pad(x, ((0, 0), (1, 1), (1, 1), (0, 0)), mode="reflect")     # (B, H+2, W+2, C)

    def pack_w(w):
        # (Co, Ci, kh, kw) -> (kh, kw, Ci, Co) -> (9, Ci, Co); tap index t = kh*3 + kw.
        return jnp.transpose(w, (2, 3, 1, 0)).reshape(9, C, C).astype(jnp.bfloat16)

    w1m, w2m = pack_w(w1), pack_w(w2)
    b1m = b1.reshape(1, C).astype(jnp.float32)
    b2m = b2.reshape(1, C).astype(jnp.float32)

    # VMEM budget: double-buffered in/out blocks + weights + in-kernel temporaries.
    in_block = (H + 2) * (W + 2) * C * 2          # bf16
    out_block = H * W * C * 4                     # f32
    w_bytes = 2 * (9 * C * C * 2) + 2 * C * 4
    vmem_est = 2 * (in_block + out_block + w_bytes) + 16 * H * W * C * 4 + (1 << 20)
    vmem_limit = int(min(max(vmem_est, 32 * 1024 * 1024), 64 * 1024 * 1024))

    flops = B * 2 * (2 * H * W * 9 * C * C)       # 2 convs, 2 flops/MAC
    bytes_accessed = int(xp.size) * 2 + B * H * W * C * 4 + 2 * 9 * C * C * 2 + 2 * C * 4

    out_nhwc = pl.pallas_call(
        resblock_kernel,
        out_shape=jax.ShapeDtypeStruct((B, H, W, C), jnp.float32),
        grid=(B,),
        in_specs=[
            pl.BlockSpec((1, H + 2, W + 2, C), lambda b: (b, 0, 0, 0)),
            pl.BlockSpec((9, C, C), lambda b: (0, 0, 0)),
            pl.BlockSpec((1, C), lambda b: (0, 0)),
            pl.BlockSpec((9, C, C), lambda b: (0, 0, 0)),
            pl.BlockSpec((1, C), lambda b: (0, 0)),
        ],
        out_specs=pl.BlockSpec((1, H, W, C), lambda b: (b, 0, 0, 0)),
        compiler_params=pltpu.CompilerParams(
            dimension_semantics=("parallel",),
            vmem_limit_bytes=vmem_limit),
        cost_estimate=pl.CostEstimate(
            flops=flops, transcendentals=2 * B * C, bytes_accessed=bytes_accessed),
    )(xp, w1m, b1m, w2m, b2m)

    return jnp.transpose(out_nhwc, (0, 3, 1, 2))  # back to NCHW


def resblock_reference(x, w1, b1, w2, b2):
    """Pure-JAX f32 reference (NCHW), independent implementation for checking."""
    def pad_reflect(t):
        return jnp.pad(t, ((0, 0), (0, 0), (1, 1), (1, 1)), mode="reflect")

    def conv(t, w, b):
        y = jax.lax.conv_general_dilated(
            pad_reflect(t), w, window_strides=(1, 1), padding="VALID",
            dimension_numbers=("NCHW", "OIHW", "NCHW"),
            precision=jax.lax.Precision.HIGHEST)
        return y + b[None, :, None, None]

    def inorm(t):
        mu = jnp.mean(t, axis=(2, 3), keepdims=True)
        var = jnp.mean((t - mu) ** 2, axis=(2, 3), keepdims=True)
        return (t - mu) * jax.lax.rsqrt(var + _EPS)

    y = jax.nn.relu(inorm(conv(x, w1, b1)))
    y = inorm(conv(y, w2, b2))
    return jax.nn.relu(x + y)


if __name__ == "__main__":
    B, DIM, H, W = 2, 4, 16, 16

    key = jax.random.PRNGKey(0)
    kx, kw1, kb1, kw2, kb2 = jax.random.split(key, 5)

    x = jax.random.normal(kx, (B, DIM, H, W), dtype=jnp.float32)

    # Deterministic Conv2d-style init: U(-k, k), k = 1/sqrt(fan_in), fan_in = DIM*3*3
    bound = 1.0 / np.sqrt(DIM * 3 * 3)
    w1 = jax.random.uniform(kw1, (DIM, DIM, 3, 3), jnp.float32, -bound, bound)
    b1 = jax.random.uniform(kb1, (DIM,), jnp.float32, -bound, bound)
    w2 = jax.random.uniform(kw2, (DIM, DIM, 3, 3), jnp.float32, -bound, bound)
    b2 = jax.random.uniform(kb2, (DIM,), jnp.float32, -bound, bound)

    out = jax.block_until_ready(resblock_forward(x, w1, b1, w2, b2))
    ref = jax.block_until_ready(resblock_reference(x, w1, b1, w2, b2))

    # Kernel uses bf16 MXU inputs with f32 accumulation; reference is f32 HIGHEST,
    # so tolerances account for bf16 quantization noise (real bugs are O(0.1+)).
    np.testing.assert_allclose(np.asarray(out), np.asarray(ref), rtol=2e-2, atol=3e-2)

    print("KERNEL_OK")
</pallas_src>

<mosaic_0001>
module attributes {stable_mosaic.version = 11 : i64} {
  func.func @resblock_kernel(%arg0: i32, %arg1: memref<1x18x18x4xbf16, #tpu.memory_space<vmem>>, %arg2: memref<9x4x4xbf16, #tpu.memory_space<vmem>>, %arg3: memref<1x4xf32, #tpu.memory_space<vmem>>, %arg4: memref<9x4x4xbf16, #tpu.memory_space<vmem>>, %arg5: memref<1x4xf32, #tpu.memory_space<vmem>>, %arg6: memref<1x16x16x4xf32, #tpu.memory_space<vmem>>) attributes {dimension_semantics = [#tpu.dimension_semantics<parallel>], iteration_bounds = array<i64: 2>, scalar_prefetch = 0 : i64, scratch_operands = 0 : i64, tpu.core_type = #tpu.core_type<tc>, window_params = [{transform_indices = @transform_0, window_bounds = array<i64: 1, 18, 18, 4>}, {pipeline_mode = #tpu.pipeline_mode<synchronous>, transform_indices = @transform_1, window_bounds = array<i64: 9, 4, 4>}, {pipeline_mode = #tpu.pipeline_mode<synchronous>, transform_indices = @transform_2, window_bounds = array<i64: 1, 4>}, {pipeline_mode = #tpu.pipeline_mode<synchronous>, transform_indices = @transform_3, window_bounds = array<i64: 9, 4, 4>}, {pipeline_mode = #tpu.pipeline_mode<synchronous>, transform_indices = @transform_4, window_bounds = array<i64: 1, 4>}, {transform_indices = @transform_5, window_bounds = array<i64: 1, 16, 16, 4>}]} {
    %c0 = arith.constant 0 : index
    %c0_0 = arith.constant 0 : index
    %c0_1 = arith.constant 0 : index
    %c0_2 = arith.constant 0 : index
    %0 = vector.load %arg1[%c0, %c0_0, %c0_1, %c0_2] : memref<1x18x18x4xbf16, #tpu.memory_space<vmem>>, vector<1x18x18x4xbf16>
    %1 = vector.shape_cast %0 : vector<1x18x18x4xbf16> to vector<18x18x4xbf16>
    %cst = arith.constant 0.000000e+00 : f32
    %2 = vector.broadcast %cst : f32 to vector<256x4xf32>
    %3 = vector.extract_strided_slice %1 {offsets = [0, 0, 0], sizes = [16, 16, 4], strides = [1, 1, 1]} : vector<18x18x4xbf16> to vector<16x16x4xbf16>
    %4 = vector.shape_cast %3 : vector<16x16x4xbf16> to vector<256x4xbf16>
    %c0_3 = arith.constant 0 : index
    %c0_4 = arith.constant 0 : index
    %c0_5 = arith.constant 0 : index
    %5 = vector.load %arg2[%c0_3, %c0_4, %c0_5] : memref<9x4x4xbf16, #tpu.memory_space<vmem>>, vector<1x4x4xbf16>
    %6 = vector.shape_cast %5 : vector<1x4x4xbf16> to vector<4x4xbf16>
    %cst_6 = arith.constant dense<0.000000e+00> : vector<256x4xf32>
    %7 = tpu.matmul %4, %6, %cst_6 {dimension_numbers = #tpu.dot_dimension_numbers<[1], [0], [0], [1], [0, 0, 1, 1], [], []>} : vector<256x4xbf16>, vector<4x4xbf16>, vector<256x4xf32> -> vector<256x4xf32>
    %8 = arith.addf %2, %7 : vector<256x4xf32>
    %9 = vector.extract_strided_slice %1 {offsets = [0, 1, 0], sizes = [16, 16, 4], strides = [1, 1, 1]} : vector<18x18x4xbf16> to vector<16x16x4xbf16>
    %10 = vector.shape_cast %9 : vector<16x16x4xbf16> to vector<256x4xbf16>
    %c1 = arith.constant 1 : index
    %c0_7 = arith.constant 0 : index
    %c0_8 = arith.constant 0 : index
    %11 = vector.load %arg2[%c1, %c0_7, %c0_8] : memref<9x4x4xbf16, #tpu.memory_space<vmem>>, vector<1x4x4xbf16>
    %12 = vector.shape_cast %11 : vector<1x4x4xbf16> to vector<4x4xbf16>
    %cst_9 = arith.constant dense<0.000000e+00> : vector<256x4xf32>
    %13 = tpu.matmul %10, %12, %cst_9 {dimension_numbers = #tpu.dot_dimension_numbers<[1], [0], [0], [1], [0, 0, 1, 1], [], []>} : vector<256x4xbf16>, vector<4x4xbf16>, vector<256x4xf32> -> vector<256x4xf32>
    %14 = arith.addf %8, %13 : vector<256x4xf32>
    %15 = vector.extract_strided_slice %1 {offsets = [0, 2, 0], sizes = [16, 16, 4], strides = [1, 1, 1]} : vector<18x18x4xbf16> to vector<16x16x4xbf16>
    %16 = vector.shape_cast %15 : vector<16x16x4xbf16> to vector<256x4xbf16>
    %c2 = arith.constant 2 : index
    %c0_10 = arith.constant 0 : index
    %c0_11 = arith.constant 0 : index
    %17 = vector.load %arg2[%c2, %c0_10, %c0_11] : memref<9x4x4xbf16, #tpu.memory_space<vmem>>, vector<1x4x4xbf16>
    %18 = vector.shape_cast %17 : vector<1x4x4xbf16> to vector<4x4xbf16>
    %cst_12 = arith.constant dense<0.000000e+00> : vector<256x4xf32>
    %19 = tpu.matmul %16, %18, %cst_12 {dimension_numbers = #tpu.dot_dimension_numbers<[1], [0], [0], [1], [0, 0, 1, 1], [], []>} : vector<256x4xbf16>, vector<4x4xbf16>, vector<256x4xf32> -> vector<256x4xf32>
    %20 = arith.addf %14, %19 : vector<256x4xf32>
    %21 = vector.extract_strided_slice %1 {offsets = [1, 0, 0], sizes = [16, 16, 4], strides = [1, 1, 1]} : vector<18x18x4xbf16> to vector<16x16x4xbf16>
    %22 = vector.shape_cast %21 : vector<16x16x4xbf16> to vector<256x4xbf16>
    %c3 = arith.constant 3 : index
    %c0_13 = arith.constant 0 : index
    %c0_14 = arith.constant 0 : index
    %23 = vector.load %arg2[%c3, %c0_13, %c0_14] : memref<9x4x4xbf16, #tpu.memory_space<vmem>>, vector<1x4x4xbf16>
    %24 = vector.shape_cast %23 : vector<1x4x4xbf16> to vector<4x4xbf16>
    %cst_15 = arith.constant dense<0.000000e+00> : vector<256x4xf32>
    %25 = tpu.matmul %22, %24, %cst_15 {dimension_numbers = #tpu.dot_dimension_numbers<[1], [0], [0], [1], [0, 0, 1, 1], [], []>} : vector<256x4xbf16>, vector<4x4xbf16>, vector<256x4xf32> -> vector<256x4xf32>
    %26 = arith.addf %20, %25 : vector<256x4xf32>
    %27 = vector.extract_strided_slice %1 {offsets = [1, 1, 0], sizes = [16, 16, 4], strides = [1, 1, 1]} : vector<18x18x4xbf16> to vector<16x16x4xbf16>
    %28 = vector.shape_cast %27 : vector<16x16x4xbf16> to vector<256x4xbf16>
    %c4 = arith.constant 4 : index
    %c0_16 = arith.constant 0 : index
    %c0_17 = arith.constant 0 : index
    %29 = vector.load %arg2[%c4, %c0_16, %c0_17] : memref<9x4x4xbf16, #tpu.memory_space<vmem>>, vector<1x4x4xbf16>
    %30 = vector.shape_cast %29 : vector<1x4x4xbf16> to vector<4x4xbf16>
    %cst_18 = arith.constant dense<0.000000e+00> : vector<256x4xf32>
    %31 = tpu.matmul %28, %30, %cst_18 {dimension_numbers = #tpu.dot_dimension_numbers<[1], [0], [0], [1], [0, 0, 1, 1], [], []>} : vector<256x4xbf16>, vector<4x4xbf16>, vector<256x4xf32> -> vector<256x4xf32>
    %32 = arith.addf %26, %31 : vector<256x4xf32>
    %33 = vector.extract_strided_slice %1 {offsets = [1, 2, 0], sizes = [16, 16, 4], strides = [1, 1, 1]} : vector<18x18x4xbf16> to vector<16x16x4xbf16>
    %34 = vector.shape_cast %33 : vector<16x16x4xbf16> to vector<256x4xbf16>
    %c5 = arith.constant 5 : index
    %c0_19 = arith.constant 0 : index
    %c0_20 = arith.constant 0 : index
    %35 = vector.load %arg2[%c5, %c0_19, %c0_20] : memref<9x4x4xbf16, #tpu.memory_space<vmem>>, vector<1x4x4xbf16>
    %36 = vector.shape_cast %35 : vector<1x4x4xbf16> to vector<4x4xbf16>
    %cst_21 = arith.constant dense<0.000000e+00> : vector<256x4xf32>
    %37 = tpu.matmul %34, %36, %cst_21 {dimension_numbers = #tpu.dot_dimension_numbers<[1], [0], [0], [1], [0, 0, 1, 1], [], []>} : vector<256x4xbf16>, vector<4x4xbf16>, vector<256x4xf32> -> vector<256x4xf32>
    %38 = arith.addf %32, %37 : vector<256x4xf32>
    %39 = vector.extract_strided_slice %1 {offsets = [2, 0, 0], sizes = [16, 16, 4], strides = [1, 1, 1]} : vector<18x18x4xbf16> to vector<16x16x4xbf16>
    %40 = vector.shape_cast %39 : vector<16x16x4xbf16> to vector<256x4xbf16>
    %c6 = arith.constant 6 : index
    %c0_22 = arith.constant 0 : index
    %c0_23 = arith.constant 0 : index
    %41 = vector.load %arg2[%c6, %c0_22, %c0_23] : memref<9x4x4xbf16, #tpu.memory_space<vmem>>, vector<1x4x4xbf16>
    %42 = vector.shape_cast %41 : vector<1x4x4xbf16> to vector<4x4xbf16>
    %cst_24 = arith.constant dense<0.000000e+00> : vector<256x4xf32>
    %43 = tpu.matmul %40, %42, %cst_24 {dimension_numbers = #tpu.dot_dimension_numbers<[1], [0], [0], [1], [0, 0, 1, 1], [], []>} : vector<256x4xbf16>, vector<4x4xbf16>, vector<256x4xf32> -> vector<256x4xf32>
    %44 = arith.addf %38, %43 : vector<256x4xf32>
    %45 = vector.extract_strided_slice %1 {offsets = [2, 1, 0], sizes = [16, 16, 4], strides = [1, 1, 1]} : vector<18x18x4xbf16> to vector<16x16x4xbf16>
    %46 = vector.shape_cast %45 : vector<16x16x4xbf16> to vector<256x4xbf16>
    %c7 = arith.constant 7 : index
    %c0_25 = arith.constant 0 : index
    %c0_26 = arith.constant 0 : index
    %47 = vector.load %arg2[%c7, %c0_25, %c0_26] : memref<9x4x4xbf16, #tpu.memory_space<vmem>>, vector<1x4x4xbf16>
    %48 = vector.shape_cast %47 : vector<1x4x4xbf16> to vector<4x4xbf16>
    %cst_27 = arith.constant dense<0.000000e+00> : vector<256x4xf32>
    %49 = tpu.matmul %46, %48, %cst_27 {dimension_numbers = #tpu.dot_dimension_numbers<[1], [0], [0], [1], [0, 0, 1, 1], [], []>} : vector<256x4xbf16>, vector<4x4xbf16>, vector<256x4xf32> -> vector<256x4xf32>
    %50 = arith.addf %44, %49 : vector<256x4xf32>
    %51 = vector.extract_strided_slice %1 {offsets = [2, 2, 0], sizes = [16, 16, 4], strides = [1, 1, 1]} : vector<18x18x4xbf16> to vector<16x16x4xbf16>
    %52 = vector.shape_cast %51 : vector<16x16x4xbf16> to vector<256x4xbf16>
    %c8 = arith.constant 8 : index
    %c0_28 = arith.constant 0 : index
    %c0_29 = arith.constant 0 : index
    %53 = vector.load %arg2[%c8, %c0_28, %c0_29] : memref<9x4x4xbf16, #tpu.memory_space<vmem>>, vector<1x4x4xbf16>
    %54 = vector.shape_cast %53 : vector<1x4x4xbf16> to vector<4x4xbf16>
    %cst_30 = arith.constant dense<0.000000e+00> : vector<256x4xf32>
    %55 = tpu.matmul %52, %54, %cst_30 {dimension_numbers = #tpu.dot_dimension_numbers<[1], [0], [0], [1], [0, 0, 1, 1], [], []>} : vector<256x4xbf16>, vector<4x4xbf16>, vector<256x4xf32> -> vector<256x4xf32>
    %56 = arith.addf %50, %55 : vector<256x4xf32>
    %c0_31 = arith.constant 0 : index
    %c0_32 = arith.constant 0 : index
    %57 = vector.load %arg3[%c0_31, %c0_32] : memref<1x4xf32, #tpu.memory_space<vmem>>, vector<1x4xf32>
    %58 = vector.broadcast %57 : vector<1x4xf32> to vector<256x4xf32>
    %59 = arith.addf %56, %58 : vector<256x4xf32>
    %cst_33 = arith.constant dense<0.000000e+00> : vector<4xf32>
    %60 = vector.multi_reduction <add>, %59, %cst_33 [0] : vector<256x4xf32> to vector<4xf32>
    %61 = vector.shape_cast %60 : vector<4xf32> to vector<1x4xf32>
    %62 = arith.mulf %59, %59 : vector<256x4xf32>
    %cst_34 = arith.constant dense<0.000000e+00> : vector<4xf32>
    %63 = vector.multi_reduction <add>, %62, %cst_34 [0] : vector<256x4xf32> to vector<4xf32>
    %64 = vector.shape_cast %63 : vector<4xf32> to vector<1x4xf32>
    %cst_35 = arith.constant 3.906250e-03 : f32
    %65 = vector.broadcast %cst_35 : f32 to vector<1x4xf32>
    %66 = arith.mulf %61, %65 : vector<1x4xf32>
    %cst_36 = arith.constant 3.906250e-03 : f32
    %67 = vector.broadcast %cst_36 : f32 to vector<1x4xf32>
    %68 = arith.mulf %64, %67 : vector<1x4xf32>
    %69 = arith.mulf %66, %66 : vector<1x4xf32>
    %70 = arith.subf %68, %69 : vector<1x4xf32>
    %71 = vector.broadcast %66 : vector<1x4xf32> to vector<256x4xf32>
    %72 = arith.subf %59, %71 : vector<256x4xf32>
    %cst_37 = arith.constant 9.99999974E-6 : f32
    %73 = vector.broadcast %cst_37 : f32 to vector<1x4xf32>
    %74 = arith.addf %70, %73 : vector<1x4xf32>
    %75 = math.rsqrt %74 : vector<1x4xf32>
    %76 = vector.broadcast %75 : vector<1x4xf32> to vector<256x4xf32>
    %77 = arith.mulf %72, %76 : vector<256x4xf32>
    %cst_38 = arith.constant 0.000000e+00 : f32
    %78 = vector.broadcast %cst_38 : f32 to vector<256x4xf32>
    %79 = arith.maximumf %77, %78 : vector<256x4xf32>
    %80 = vector.shape_cast %79 : vector<256x4xf32> to vector<16x16x4xf32>
    %81 = arith.truncf %80 : vector<16x16x4xf32> to vector<16x16x4xbf16>
    %82 = vector.extract_strided_slice %81 {offsets = [1, 0, 0], sizes = [1, 16, 4], strides = [1, 1, 1]} : vector<16x16x4xbf16> to vector<1x16x4xbf16>
    %83 = vector.extract_strided_slice %81 {offsets = [14, 0, 0], sizes = [1, 16, 4], strides = [1, 1, 1]} : vector<16x16x4xbf16> to vector<1x16x4xbf16>
    %84 = tpu.concatenate %82, %81, %83 in 0 : vector<1x16x4xbf16>, vector<16x16x4xbf16>, vector<1x16x4xbf16> -> vector<18x16x4xbf16>
    %85 = vector.extract_strided_slice %84 {offsets = [0, 1, 0], sizes = [18, 1, 4], strides = [1, 1, 1]} : vector<18x16x4xbf16> to vector<18x1x4xbf16>
    %86 = vector.extract_strided_slice %84 {offsets = [0, 14, 0], sizes = [18, 1, 4], strides = [1, 1, 1]} : vector<18x16x4xbf16> to vector<18x1x4xbf16>
    %87 = tpu.concatenate %85, %84, %86 in 1 : vector<18x1x4xbf16>, vector<18x16x4xbf16>, vector<18x1x4xbf16> -> vector<18x18x4xbf16>
    %cst_39 = arith.constant 0.000000e+00 : f32
    %88 = vector.broadcast %cst_39 : f32 to vector<256x4xf32>
    %89 = vector.extract_strided_slice %87 {offsets = [0, 0, 0], sizes = [16, 16, 4], strides = [1, 1, 1]} : vector<18x18x4xbf16> to vector<16x16x4xbf16>
    %90 = vector.shape_cast %89 : vector<16x16x4xbf16> to vector<256x4xbf16>
    %c0_40 = arith.constant 0 : index
    %c0_41 = arith.constant 0 : index
    %c0_42 = arith.constant 0 : index
    %91 = vector.load %arg4[%c0_40, %c0_41, %c0_42] : memref<9x4x4xbf16, #tpu.memory_space<vmem>>, vector<1x4x4xbf16>
    %92 = vector.shape_cast %91 : vector<1x4x4xbf16> to vector<4x4xbf16>
    %cst_43 = arith.constant dense<0.000000e+00> : vector<256x4xf32>
    %93 = tpu.matmul %90, %92, %cst_43 {dimension_numbers = #tpu.dot_dimension_numbers<[1], [0], [0], [1], [0, 0, 1, 1], [], []>} : vector<256x4xbf16>, vector<4x4xbf16>, vector<256x4xf32> -> vector<256x4xf32>
    %94 = arith.addf %88, %93 : vector<256x4xf32>
    %95 = vector.extract_strided_slice %87 {offsets = [0, 1, 0], sizes = [16, 16, 4], strides = [1, 1, 1]} : vector<18x18x4xbf16> to vector<16x16x4xbf16>
    %96 = vector.shape_cast %95 : vector<16x16x4xbf16> to vector<256x4xbf16>
    %c1_44 = arith.constant 1 : index
    %c0_45 = arith.constant 0 : index
    %c0_46 = arith.constant 0 : index
    %97 = vector.load %arg4[%c1_44, %c0_45, %c0_46] : memref<9x4x4xbf16, #tpu.memory_space<vmem>>, vector<1x4x4xbf16>
    %98 = vector.shape_cast %97 : vector<1x4x4xbf16> to vector<4x4xbf16>
    %cst_47 = arith.constant dense<0.000000e+00> : vector<256x4xf32>
    %99 = tpu.matmul %96, %98, %cst_47 {dimension_numbers = #tpu.dot_dimension_numbers<[1], [0], [0], [1], [0, 0, 1, 1], [], []>} : vector<256x4xbf16>, vector<4x4xbf16>, vector<256x4xf32> -> vector<256x4xf32>
    %100 = arith.addf %94, %99 : vector<256x4xf32>
    %101 = vector.extract_strided_slice %87 {offsets = [0, 2, 0], sizes = [16, 16, 4], strides = [1, 1, 1]} : vector<18x18x4xbf16> to vector<16x16x4xbf16>
    %102 = vector.shape_cast %101 : vector<16x16x4xbf16> to vector<256x4xbf16>
    %c2_48 = arith.constant 2 : index
    %c0_49 = arith.constant 0 : index
    %c0_50 = arith.constant 0 : index
    %103 = vector.load %arg4[%c2_48, %c0_49, %c0_50] : memref<9x4x4xbf16, #tpu.memory_space<vmem>>, vector<1x4x4xbf16>
    %104 = vector.shape_cast %103 : vector<1x4x4xbf16> to vector<4x4xbf16>
    %cst_51 = arith.constant dense<0.000000e+00> : vector<256x4xf32>
    %105 = tpu.matmul %102, %104, %cst_51 {dimension_numbers = #tpu.dot_dimension_numbers<[1], [0], [0], [1], [0, 0, 1, 1], [], []>} : vector<256x4xbf16>, vector<4x4xbf16>, vector<256x4xf32> -> vector<256x4xf32>
    %106 = arith.addf %100, %105 : vector<256x4xf32>
    %107 = vector.extract_strided_slice %87 {offsets = [1, 0, 0], sizes = [16, 16, 4], strides = [1, 1, 1]} : vector<18x18x4xbf16> to vector<16x16x4xbf16>
    %108 = vector.shape_cast %107 : vector<16x16x4xbf16> to vector<256x4xbf16>
    %c3_52 = arith.constant 3 : index
    %c0_53 = arith.constant 0 : index
    %c0_54 = arith.constant 0 : index
    %109 = vector.load %arg4[%c3_52, %c0_53, %c0_54] : memref<9x4x4xbf16, #tpu.memory_space<vmem>>, vector<1x4x4xbf16>
    %110 = vector.shape_cast %109 : vector<1x4x4xbf16> to vector<4x4xbf16>
    %cst_55 = arith.constant dense<0.000000e+00> : vector<256x4xf32>
    %111 = tpu.matmul %108, %110, %cst_55 {dimension_numbers = #tpu.dot_dimension_numbers<[1], [0], [0], [1], [0, 0, 1, 1], [], []>} : vector<256x4xbf16>, vector<4x4xbf16>, vector<256x4xf32> -> vector<256x4xf32>
    %112 = arith.addf %106, %111 : vector<256x4xf32>
    %113 = vector.extract_strided_slice %87 {offsets = [1, 1, 0], sizes = [16, 16, 4], strides = [1, 1, 1]} : vector<18x18x4xbf16> to vector<16x16x4xbf16>
    %114 = vector.shape_cast %113 : vector<16x16x4xbf16> to vector<256x4xbf16>
    %c4_56 = arith.constant 4 : index
    %c0_57 = arith.constant 0 : index
    %c0_58 = arith.constant 0 : index
    %115 = vector.load %arg4[%c4_56, %c0_57, %c0_58] : memref<9x4x4xbf16, #tpu.memory_space<vmem>>, vector<1x4x4xbf16>
    %116 = vector.shape_cast %115 : vector<1x4x4xbf16> to vector<4x4xbf16>
    %cst_59 = arith.constant dense<0.000000e+00> : vector<256x4xf32>
    %117 = tpu.matmul %114, %116, %cst_59 {dimension_numbers = #tpu.dot_dimension_numbers<[1], [0], [0], [1], [0, 0, 1, 1], [], []>} : vector<256x4xbf16>, vector<4x4xbf16>, vector<256x4xf32> -> vector<256x4xf32>
    %118 = arith.addf %112, %117 : vector<256x4xf32>
    %119 = vector.extract_strided_slice %87 {offsets = [1, 2, 0], sizes = [16, 16, 4], strides = [1, 1, 1]} : vector<18x18x4xbf16> to vector<16x16x4xbf16>
    %120 = vector.shape_cast %119 : vector<16x16x4xbf16> to vector<256x4xbf16>
    %c5_60 = arith.constant 5 : index
    %c0_61 = arith.constant 0 : index
    %c0_62 = arith.constant 0 : index
    %121 = vector.load %arg4[%c5_60, %c0_61, %c0_62] : memref<9x4x4xbf16, #tpu.memory_space<vmem>>, vector<1x4x4xbf16>
    %122 = vector.shape_cast %121 : vector<1x4x4xbf16> to vector<4x4xbf16>
    %cst_63 = arith.constant dense<0.000000e+00> : vector<256x4xf32>
    %123 = tpu.matmul %120, %122, %cst_63 {dimension_numbers = #tpu.dot_dimension_numbers<[1], [0], [0], [1], [0, 0, 1, 1], [], []>} : vector<256x4xbf16>, vector<4x4xbf16>, vector<256x4xf32> -> vector<256x4xf32>
    %124 = arith.addf %118, %123 : vector<256x4xf32>
    %125 = vector.extract_strided_slice %87 {offsets = [2, 0, 0], sizes = [16, 16, 4], strides = [1, 1, 1]} : vector<18x18x4xbf16> to vector<16x16x4xbf16>
    %126 = vector.shape_cast %125 : vector<16x16x4xbf16> to vector<256x4xbf16>
    %c6_64 = arith.constant 6 : index
    %c0_65 = arith.constant 0 : index
    %c0_66 = arith.constant 0 : index
    %127 = vector.load %arg4[%c6_64, %c0_65, %c0_66] : memref<9x4x4xbf16, #tpu.memory_space<vmem>>, vector<1x4x4xbf16>
    %128 = vector.shape_cast %127 : vector<1x4x4xbf16> to vector<4x4xbf16>
    %cst_67 = arith.constant dense<0.000000e+00> : vector<256x4xf32>
    %129 = tpu.matmul %126, %128, %cst_67 {dimension_numbers = #tpu.dot_dimension_numbers<[1], [0], [0], [1], [0, 0, 1, 1], [], []>} : vector<256x4xbf16>, vector<4x4xbf16>, vector<256x4xf32> -> vector<256x4xf32>
    %130 = arith.addf %124, %129 : vector<256x4xf32>
    %131 = vector.extract_strided_slice %87 {offsets = [2, 1, 0], sizes = [16, 16, 4], strides = [1, 1, 1]} : vector<18x18x4xbf16> to vector<16x16x4xbf16>
    %132 = vector.shape_cast %131 : vector<16x16x4xbf16> to vector<256x4xbf16>
    %c7_68 = arith.constant 7 : index
    %c0_69 = arith.constant 0 : index
    %c0_70 = arith.constant 0 : index
    %133 = vector.load %arg4[%c7_68, %c0_69, %c0_70] : memref<9x4x4xbf16, #tpu.memory_space<vmem>>, vector<1x4x4xbf16>
    %134 = vector.shape_cast %133 : vector<1x4x4xbf16> to vector<4x4xbf16>
    %cst_71 = arith.constant dense<0.000000e+00> : vector<256x4xf32>
    %135 = tpu.matmul %132, %134, %cst_71 {dimension_numbers = #tpu.dot_dimension_numbers<[1], [0], [0], [1], [0, 0, 1, 1], [], []>} : vector<256x4xbf16>, vector<4x4xbf16>, vector<256x4xf32> -> vector<256x4xf32>
    %136 = arith.addf %130, %135 : vector<256x4xf32>
    %137 = vector.extract_strided_slice %87 {offsets = [2, 2, 0], sizes = [16, 16, 4], strides = [1, 1, 1]} : vector<18x18x4xbf16> to vector<16x16x4xbf16>
    %138 = vector.shape_cast %137 : vector<16x16x4xbf16> to vector<256x4xbf16>
    %c8_72 = arith.constant 8 : index
    %c0_73 = arith.constant 0 : index
    %c0_74 = arith.constant 0 : index
    %139 = vector.load %arg4[%c8_72, %c0_73, %c0_74] : memref<9x4x4xbf16, #tpu.memory_space<vmem>>, vector<1x4x4xbf16>
    %140 = vector.shape_cast %139 : vector<1x4x4xbf16> to vector<4x4xbf16>
    %cst_75 = arith.constant dense<0.000000e+00> : vector<256x4xf32>
    %141 = tpu.matmul %138, %140, %cst_75 {dimension_numbers = #tpu.dot_dimension_numbers<[1], [0], [0], [1], [0, 0, 1, 1], [], []>} : vector<256x4xbf16>, vector<4x4xbf16>, vector<256x4xf32> -> vector<256x4xf32>
    %142 = arith.addf %136, %141 : vector<256x4xf32>
    %c0_76 = arith.constant 0 : index
    %c0_77 = arith.constant 0 : index
    %143 = vector.load %arg5[%c0_76, %c0_77] : memref<1x4xf32, #tpu.memory_space<vmem>>, vector<1x4xf32>
    %144 = vector.broadcast %143 : vector<1x4xf32> to vector<256x4xf32>
    %145 = arith.addf %142, %144 : vector<256x4xf32>
    %cst_78 = arith.constant dense<0.000000e+00> : vector<4xf32>
    %146 = vector.multi_reduction <add>, %145, %cst_78 [0] : vector<256x4xf32> to vector<4xf32>
    %147 = vector.shape_cast %146 : vector<4xf32> to vector<1x4xf32>
    %148 = arith.mulf %145, %145 : vector<256x4xf32>
    %cst_79 = arith.constant dense<0.000000e+00> : vector<4xf32>
    %149 = vector.multi_reduction <add>, %148, %cst_79 [0] : vector<256x4xf32> to vector<4xf32>
    %150 = vector.shape_cast %149 : vector<4xf32> to vector<1x4xf32>
    %cst_80 = arith.constant 3.906250e-03 : f32
    %151 = vector.broadcast %cst_80 : f32 to vector<1x4xf32>
    %152 = arith.mulf %147, %151 : vector<1x4xf32>
    %cst_81 = arith.constant 3.906250e-03 : f32
    %153 = vector.broadcast %cst_81 : f32 to vector<1x4xf32>
    %154 = arith.mulf %150, %153 : vector<1x4xf32>
    %155 = arith.mulf %152, %152 : vector<1x4xf32>
    %156 = arith.subf %154, %155 : vector<1x4xf32>
    %157 = vector.broadcast %152 : vector<1x4xf32> to vector<256x4xf32>
    %158 = arith.subf %145, %157 : vector<256x4xf32>
    %cst_82 = arith.constant 9.99999974E-6 : f32
    %159 = vector.broadcast %cst_82 : f32 to vector<1x4xf32>
    %160 = arith.addf %156, %159 : vector<1x4xf32>
    %161 = math.rsqrt %160 : vector<1x4xf32>
    %162 = vector.broadcast %161 : vector<1x4xf32> to vector<256x4xf32>
    %163 = arith.mulf %158, %162 : vector<256x4xf32>
    %164 = vector.extract_strided_slice %1 {offsets = [1, 1, 0], sizes = [16, 16, 4], strides = [1, 1, 1]} : vector<18x18x4xbf16> to vector<16x16x4xbf16>
    %165 = vector.shape_cast %164 : vector<16x16x4xbf16> to vector<256x4xbf16>
    %166 = arith.extf %165 : vector<256x4xbf16> to vector<256x4xf32>
    %167 = arith.addf %166, %163 : vector<256x4xf32>
    %cst_83 = arith.constant 0.000000e+00 : f32
    %168 = vector.broadcast %cst_83 : f32 to vector<256x4xf32>
    %169 = arith.maximumf %167, %168 : vector<256x4xf32>
    %170 = vector.shape_cast %169 : vector<256x4xf32> to vector<16x16x4xf32>
    %c0_84 = arith.constant 0 : index
    %c0_85 = arith.constant 0 : index
    %c0_86 = arith.constant 0 : index
    %c0_87 = arith.constant 0 : index
    %171 = vector.load %arg6[%c0_84, %c0_85, %c0_86, %c0_87] : memref<1x16x16x4xf32, #tpu.memory_space<vmem>>, vector<1x16x16x4xf32>
    %172 = vector.shape_cast %171 : vector<1x16x16x4xf32> to vector<16x16x4xf32>
    %173 = vector.shape_cast %170 : vector<16x16x4xf32> to vector<1x16x16x4xf32>
    tpu.vector_store %arg6[%c0_84, %c0_85, %c0_86, %c0_87], %173 {strides = array<i32>} : memref<1x16x16x4xf32, #tpu.memory_space<vmem>>, vector<1x16x16x4xf32>,
    return
  }
  func.func @transform_0(%arg0: i32) -> (i32, i32, i32, i32) {
    %c0_i32 = arith.constant 0 : i32
    %c0_i32_0 = arith.constant 0 : i32
    %c0_i32_1 = arith.constant 0 : i32
    %c0_i32_2 = arith.constant 0 : i32
    return %arg0, %c0_i32, %c0_i32_0, %c0_i32_1 : i32, i32, i32, i32
  }
  func.func @transform_1(%arg0: i32) -> (i32, i32, i32) {
    %c0_i32 = arith.constant 0 : i32
    %c0_i32_0 = arith.constant 0 : i32
    %c0_i32_1 = arith.constant 0 : i32
    %c0_i32_2 = arith.constant 0 : i32
    return %c0_i32, %c0_i32_0, %c0_i32_1 : i32, i32, i32
  }
  func.func @transform_2(%arg0: i32) -> (i32, i32) {
    %c0_i32 = arith.constant 0 : i32
    %c0_i32_0 = arith.constant 0 : i32
    %c0_i32_1 = arith.constant 0 : i32
    return %c0_i32, %c0_i32_0 : i32, i32
  }
  func.func @transform_3(%arg0: i32) -> (i32, i32, i32) {
    %c0_i32 = arith.constant 0 : i32
    %c0_i32_0 = arith.constant 0 : i32
    %c0_i32_1 = arith.constant 0 : i32
    %c0_i32_2 = arith.constant 0 : i32
    return %c0_i32, %c0_i32_0, %c0_i32_1 : i32, i32, i32
  }
  func.func @transform_4(%arg0: i32) -> (i32, i32) {
    %c0_i32 = arith.constant 0 : i32
    %c0_i32_0 = arith.constant 0 : i32
    %c0_i32_1 = arith.constant 0 : i32
    return %c0_i32, %c0_i32_0 : i32, i32
  }
  func.func @transform_5(%arg0: i32) -> (i32, i32, i32, i32) {
    %c0_i32 = arith.constant 0 : i32
    %c0_i32_0 = arith.constant 0 : i32
    %c0_i32_1 = arith.constant 0 : i32
    %c0_i32_2 = arith.constant 0 : i32
    return %arg0, %c0_i32, %c0_i32_0, %c0_i32_1 : i32, i32, i32, i32
  }
}

</mosaic_0001>

<llo_original>
// kernel: tpu_custom_call.1
$region0: #{tpu_custom_call.1}
  #allocation0 [shape = 'u32[]', space=smem, size = 0x4, offset = 0x4, fixed_abs, tag = 'smem constant byte address 0x4 - core index']
  #allocation1 [shape = 'u32[144,128]{1,0:T(1,128)}', space=vmem, size = 0x12000, scoped, tag = 'internal scratch']
  %s0 = inlined_call_operand.vmem [shape: bf16[2,18,18,4], index: 0, kind: input, shape index: {}]
  %s1 = inlined_call_operand.vmem [shape: bf16[9,4,4], index: 1, kind: input, shape index: {}]
  %s2 = inlined_call_operand.vmem [shape: f32[1,4], index: 2, kind: input, shape index: {}]
  %s3 = inlined_call_operand.vmem [shape: bf16[9,4,4], index: 3, kind: input, shape index: {}]
  %s4 = inlined_call_operand.vmem [shape: f32[1,4], index: 4, kind: input, shape index: {}]
  %s5 = inlined_call_operand.vmem [shape: f32[2,16,16,4], index: 5, kind: output, shape index: {}]
  %s6 = sld [smem:[#allocation0]]
  $region53: #{tpu_custom_call.1} parent=0
    _
  %s8 = ssub.s32 1, %s6
  %s9 = scalar_select 0, %s8, %s6
  loop: start=0, step=1, limit=4
  $region2: #{tpu_custom_call.1} parent=0 // loop_pre_header
    _
  $region3: #{tpu_custom_call.1} parent=0 // loop_header
    %s11 = sphi 0, %s15
    %p12 = scmp.ge.s32.totalorder %s11, 4
    %s21 = sphi 0, %s23
    %s24 = sphi 0, %s21
    %s25 = sphi 0, %s24
    %s41 = sphi 0, %s25
    %s45 = sphi 0, %s45
    %s47 = sphi 0, %s45
    %s48 = sphi 0, %s47
    %s62 = sphi 0, %s48
    %s66 = sphi 0, %s66
    %s68 = sphi 0, %s66
    %s69 = sphi 0, %s68
    %s83 = sphi 0, %s69
    %s87 = sphi 0, %s87
    %s89 = sphi 0, %s87
    %s90 = sphi 0, %s89
    %s104 = sphi 0, %s90
    %s108 = sphi 0, %s108
    %s110 = sphi 0, %s108
    %s111 = sphi 0, %s110
    %s125 = sphi 0, %s111
    %s131 = sphi 0, %s133
    %s134 = sphi 0, %s131
    %s135 = sphi 0, %s134
    %s151 = sphi 0, %s135
  $region4: #{tpu_custom_call.1} parent=0 // loop_header_branch
    %14 = sbr.rel (%p12) target = $region8
  $region5: #{tpu_custom_call.1} parent=0 // loop_body
    %s16 = ssub.s32 %s11, 1
    %s17 = ssub.s32 %s11, 2
    %s18 = sadd.s32 %s11, 1
    %s19 = ssub.s32 %s11, %s18
    %p20 = scmp.eq.s32.totalorder %s19, 0
    %s22 = sadd.s32 %s21, 1
    %s23 = scalar_select %p20, %s21, %s22
    %p26 = pneg %p20
    %p27 = scmp.eq.s32.totalorder %s11, 1
    %p28 = por %p26, %p27
    %p29 = scmp.ne.s32.totalorder %s21, %s24
    %p30 = scmp.eq.s32.totalorder %s11, 0
    %p31 = por %p29, %p30
    %p32 = scmp.ne.s32.totalorder %s21, %s24
    %p33 = scmp.eq.s32.totalorder %s16, 1
    %p34 = por %p32, %p33
    %p35 = scmp.ne.s32.totalorder %s24, %s25
    %p36 = scmp.eq.s32.totalorder %s16, 0
    %p37 = por %p35, %p36
    %p38 = scmp.ne.s32.totalorder %s24, %s25
    %p39 = scmp.eq.s32.totalorder %s17, 1
    %p40 = por %p38, %p39
    %p42 = scmp.ne.s32.totalorder %s25, %s41
    %p43 = scmp.eq.s32.totalorder %s17, 0
    %p44 = por %p42, %p43
    %s46 = sadd.s32 %s45, 1
    %p49 = scmp.eq.s32.totalorder %s11, 1
    %p50 = scmp.ne.s32.totalorder %s45, %s47
    %p51 = scmp.eq.s32.totalorder %s11, 0
    %p52 = por %p50, %p51
    %p53 = scmp.ne.s32.totalorder %s45, %s47
    %p54 = scmp.eq.s32.totalorder %s16, 1
    %p55 = por %p53, %p54
    %p56 = scmp.ne.s32.totalorder %s47, %s48
    %p57 = scmp.eq.s32.totalorder %s16, 0
    %p58 = por %p56, %p57
    %p59 = scmp.ne.s32.totalorder %s47, %s48
    %p60 = scmp.eq.s32.totalorder %s17, 1
    %p61 = por %p59, %p60
    %p63 = scmp.ne.s32.totalorder %s48, %s62
    %p64 = scmp.eq.s32.totalorder %s17, 0
    %p65 = por %p63, %p64
    %s67 = sadd.s32 %s66, 1
    %p70 = scmp.eq.s32.totalorder %s11, 1
    %p71 = scmp.ne.s32.totalorder %s66, %s68
    %p72 = scmp.eq.s32.totalorder %s11, 0
    %p73 = por %p71, %p72
    %p74 = scmp.ne.s32.totalorder %s66, %s68
    %p75 = scmp.eq.s32.totalorder %s16, 1
    %p76 = por %p74, %p75
    %p77 = scmp.ne.s32.totalorder %s68, %s69
    %p78 = scmp.eq.s32.totalorder %s16, 0
    %p79 = por %p77, %p78
    %p80 = scmp.ne.s32.totalorder %s68, %s69
    %p81 = scmp.eq.s32.totalorder %s17, 1
    %p82 = por %p80, %p81
    %p84 = scmp.ne.s32.totalorder %s69, %s83
    %p85 = scmp.eq.s32.totalorder %s17, 0
    %p86 = por %p84, %p85
    %s88 = sadd.s32 %s87, 1
    %p91 = scmp.eq.s32.totalorder %s11, 1
    %p92 = scmp.ne.s32.totalorder %s87, %s89
    %p93 = scmp.eq.s32.totalorder %s11, 0
    %p94 = por %p92, %p93
    %p95 = scmp.ne.s32.totalorder %s87, %s89
    %p96 = scmp.eq.s32.totalorder %s16, 1
    %p97 = por %p95, %p96
    %p98 = scmp.ne.s32.totalorder %s89, %s90
    %p99 = scmp.eq.s32.totalorder %s16, 0
    %p100 = por %p98, %p99
    %p101 = scmp.ne.s32.totalorder %s89, %s90
    %p102 = scmp.eq.s32.totalorder %s17, 1
    %p103 = por %p101, %p102
    %p105 = scmp.ne.s32.totalorder %s90, %s104
    %p106 = scmp.eq.s32.totalorder %s17, 0
    %p107 = por %p105, %p106
    %s109 = sadd.s32 %s108, 1
    %p112 = scmp.eq.s32.totalorder %s11, 1
    %p113 = scmp.ne.s32.totalorder %s108, %s110
    %p114 = scmp.eq.s32.totalorder %s11, 0
    %p115 = por %p113, %p114
    %p116 = scmp.ne.s32.totalorder %s108, %s110
    %p117 = scmp.eq.s32.totalorder %s16, 1
    %p118 = por %p116, %p117
    %p119 = scmp.ne.s32.totalorder %s110, %s111
    %p120 = scmp.eq.s32.totalorder %s16, 0
    %p121 = por %p119, %p120
    %p122 = scmp.ne.s32.totalorder %s110, %s111
    %p123 = scmp.eq.s32.totalorder %s17, 1
    %p124 = por %p122, %p123
    %p126 = scmp.ne.s32.totalorder %s111, %s125
    %p127 = scmp.eq.s32.totalorder %s17, 0
    %p128 = por %p126, %p127
    %s129 = ssub.s32 %s11, %s18
    %p130 = scmp.eq.s32.totalorder %s129, 0
    %s132 = sadd.s32 %s131, 1
    %s133 = scalar_select %p130, %s131, %s132
    %p136 = pneg %p130
    %p137 = scmp.eq.s32.totalorder %s11, 1
    %p138 = por %p136, %p137
    %p139 = scmp.ne.s32.totalorder %s131, %s134
    %p140 = scmp.eq.s32.totalorder %s11, 0
    %p141 = por %p139, %p140
    %p142 = scmp.ne.s32.totalorder %s131, %s134
    %p143 = scmp.eq.s32.totalorder %s16, 1
    %p144 = por %p142, %p143
    %p145 = scmp.ne.s32.totalorder %s134, %s135
    %p146 = scmp.eq.s32.totalorder %s16, 0
    %p147 = por %p145, %p146
    %p148 = scmp.ne.s32.totalorder %s134, %s135
    %p149 = scmp.eq.s32.totalorder %s17, 1
    %p150 = por %p148, %p149
    %p152 = scmp.ne.s32.totalorder %s135, %s151
    %p153 = scmp.eq.s32.totalorder %s17, 0
    %p154 = por %p152, %p153
    %p155 = scmp.le.s32.totalorder 1, %s11
    %p156 = scmp.lt.s32.totalorder %s11, 3
    %p157 = pnand %p155, %p156
    %p158 = pneg %p157
    // Predicated region
    $region9: #{tpu_custom_call.1} parent=5 // pred_check
      _
    $region10: #{tpu_custom_call.1} parent=5 // pred_check_branch
      %160 = sbr.rel (%p157) target = $region12
    $region11: #{tpu_custom_call.1} parent=5 // pred_region
      %s161 = ssub.s32 %s11, 1
      // Predicated region
      $region13: #{tpu_custom_call.1} parent=11 // pred_check
        %p162 = pneg %p58
      $region14: #{tpu_custom_call.1} parent=11 // pred_check_branch
        %164 = sbr.rel (%p162) target = $region16
      $region15: #{tpu_custom_call.1} parent=11 // pred_region
        _
      $region16: #{tpu_custom_call.1} parent=11 // pred_fallthru
        _
      // Predicated region
      $region17: #{tpu_custom_call.1} parent=11 // pred_check
        %p165 = pneg %p79
      $region18: #{tpu_custom_call.1} parent=11 // pred_check_branch
        %167 = sbr.rel (%p165) target = $region20
      $region19: #{tpu_custom_call.1} parent=11 // pred_region
        _
      $region20: #{tpu_custom_call.1} parent=11 // pred_fallthru
        _
      // Predicated region
      $region21: #{tpu_custom_call.1} parent=11 // pred_check
        %p168 = pneg %p100
      $region22: #{tpu_custom_call.1} parent=11 // pred_check_branch
        %170 = sbr.rel (%p168) target = $region24
      $region23: #{tpu_custom_call.1} parent=11 // pred_region
        _
      $region24: #{tpu_custom_call.1} parent=11 // pred_fallthru
        _
      // Predicated region
      $region25: #{tpu_custom_call.1} parent=11 // pred_check
        %p171 = pneg %p121
      $region26: #{tpu_custom_call.1} parent=11 // pred_check_branch
        %173 = sbr.rel (%p171) target = $region28
      $region27: #{tpu_custom_call.1} parent=11 // pred_region
        _
      $region28: #{tpu_custom_call.1} parent=11 // pred_fallthru
        _
    $region12: #{tpu_custom_call.1} parent=5 // pred_fallthru
      _
    %p174 = scmp.lt.s32.totalorder %s11, 2
    // Predicated region
    $region29: #{tpu_custom_call.1} parent=5 // pred_check
      %p175 = pneg %p174
    $region30: #{tpu_custom_call.1} parent=5 // pred_check_branch
      %177 = sbr.rel (%p175) target = $region32
    $region31: #{tpu_custom_call.1} parent=5 // pred_region
      // Predicated region
      $region33: #{tpu_custom_call.1} parent=31 // pred_check
        %p178 = pneg %p31
      $region34: #{tpu_custom_call.1} parent=31 // pred_check_branch
        %180 = sbr.rel (%p178) target = $region36
      $region35: #{tpu_custom_call.1} parent=31 // pred_region
        %p181 = scmp.lt.s32.totalorder %s11, 1
        %s182 = scalar_select %p181, %s11, 1
        %s183 = smul.addr %s182, 54
        %s184 = smul.addr %s183, 4
        %s185 = scalar_lea.vmem %s0, %s184
      $region36: #{tpu_custom_call.1} parent=31 // pred_fallthru
        _
    $region32: #{tpu_custom_call.1} parent=5 // pred_fallthru
      _
    %p186 = scmp.le.s32.totalorder 1, %s11
    %p187 = scmp.lt.s32.totalorder %s11, 3
    %p188 = pnand %p186, %p187
    %p189 = pneg %p188
    // Predicated region
    $region37: #{tpu_custom_call.1} parent=5 // pred_check
      _
    $region38: #{tpu_custom_call.1} parent=5 // pred_check_branch
      %191 = sbr.rel (%p188) target = $region40
    $region39: #{tpu_custom_call.1} parent=5 // pred_region
      %s192 = ssub.s32 %s11, 1
      %p193 = scmp.lt.s32.totalorder %s16, 1
      %s194 = scalar_select %p193, %s16, 1
      %s195 = smul.addr %s194, 54
      %s196 = smul.addr %s195, 4
      %s197 = scalar_lea.vmem %s0, %s196
      %p198 = pneg %p37
      %p199 = pneg %p34
      %p200 = pneg %p58
      %p201 = pneg %p55
      %p202 = pneg %p79
      %p203 = pneg %p76
      %p204 = pneg %p100
      %p205 = pneg %p97
      %p206 = pneg %p121
      %p207 = pneg %p118
      %p208 = pneg %p147
      %p209 = pneg %p144
      %p210 = scmp.lt.s32.totalorder %s16, 1
      %s211 = scalar_select %p210, %s16, 1
      %s212 = smul.addr %s211, 32
      %s213 = smul.addr %s212, 8
      %s214 = scalar_lea.vmem %s5, %s213
      %p215 = scmp.lt.s32.totalorder %s16, 1
      %s216 = scalar_select %p215, %s16, 1
      %s217 = smul.addr %s216, 54
      %s218 = smul.addr %s217, 4
      %s219 = scalar_lea.vmem %s0, %s218
      %p220 = scmp.lt.s32.totalorder %s16, 1
      %s221 = scalar_select %p220, %s16, 1
      %s222 = smul.addr %s221, 32
      %s223 = smul.addr %s222, 8
      %s224 = scalar_lea.vmem %s5, %s223
      %v226 = vld [vmem:[%s219] sm:$0xf]
      %v227 = vld [vmem:[%s219 + $0x4] sm:$0xf]
      %v228 = vld [vmem:[%s219 + $0x8] sm:$0x1]
      %v229 = vld [vmem:[%s219 + $0xc] sm:$0xf]
      %v230 = vld [vmem:[%s219 + $0x10] sm:$0xf]
      %v231 = vld [vmem:[%s219 + $0x14] sm:$0x1]
      %v232 = vld [vmem:[%s219 + $0x18] sm:$0xf]
      %v233 = vld [vmem:[%s219 + $0x1c] sm:$0xf]
      %v234 = vld [vmem:[%s219 + $0x20] sm:$0x1]
      %v235 = vld [vmem:[%s219 + $0x24] sm:$0xf]
      %v236 = vld [vmem:[%s219 + $0x28] sm:$0xf]
      %v237 = vld [vmem:[%s219 + $0x2c] sm:$0x1]
      %v238 = vld [vmem:[%s219 + $0x30] sm:$0xf]
      %v239 = vld [vmem:[%s219 + $0x34] sm:$0xf]
      %v240 = vld [vmem:[%s219 + $0x38] sm:$0x1]
      %v241 = vld [vmem:[%s219 + $0x3c] sm:$0xf]
      %v242 = vld [vmem:[%s219 + $0x40] sm:$0xf]
      %v243 = vld [vmem:[%s219 + $0x44] sm:$0x1]
      %v244 = vld [vmem:[%s219 + $0x48] sm:$0xf]
      %v245 = vld [vmem:[%s219 + $0x4c] sm:$0xf]
      %v246 = vld [vmem:[%s219 + $0x50] sm:$0x1]
      %v247 = vld [vmem:[%s219 + $0x54] sm:$0xf]
      %v248 = vld [vmem:[%s219 + $0x58] sm:$0xf]
      %v249 = vld [vmem:[%s219 + $0x5c] sm:$0x1]
      %v250 = vld [vmem:[%s219 + $0x60] sm:$0xf]
      %v251 = vld [vmem:[%s219 + $0x64] sm:$0xf]
      %v252 = vld [vmem:[%s219 + $0x68] sm:$0x1]
      %v253 = vld [vmem:[%s219 + $0x6c] sm:$0xf]
      %v254 = vld [vmem:[%s219 + $0x70] sm:$0xf]
      %v255 = vld [vmem:[%s219 + $0x74] sm:$0x1]
      %v256 = vld [vmem:[%s219 + $0x78] sm:$0xf]
      %v257 = vld [vmem:[%s219 + $0x7c] sm:$0xf]
      %v258 = vld [vmem:[%s219 + $0x80] sm:$0x1]
      %v259 = vld [vmem:[%s219 + $0x84] sm:$0xf]
      %v260 = vld [vmem:[%s219 + $0x88] sm:$0xf]
      %v261 = vld [vmem:[%s219 + $0x8c] sm:$0x1]
      %v262 = vld [vmem:[%s219 + $0x90] sm:$0xf]
      %v263 = vld [vmem:[%s219 + $0x94] sm:$0xf]
      %v264 = vld [vmem:[%s219 + $0x98] sm:$0x1]
      %v265 = vld [vmem:[%s219 + $0x9c] sm:$0xf]
      %v266 = vld [vmem:[%s219 + $0xa0] sm:$0xf]
      %v267 = vld [vmem:[%s219 + $0xa4] sm:$0x1]
      %v268 = vld [vmem:[%s219 + $0xa8] sm:$0xf]
      %v269 = vld [vmem:[%s219 + $0xac] sm:$0xf]
      %v270 = vld [vmem:[%s219 + $0xb0] sm:$0x1]
      %v271 = vld [vmem:[%s219 + $0xb4] sm:$0xf]
      %v272 = vld [vmem:[%s219 + $0xb8] sm:$0xf]
      %v273 = vld [vmem:[%s219 + $0xbc] sm:$0x1]
      %v274 = vld [vmem:[%s219 + $0xc0] sm:$0xf]
      %v275 = vld [vmem:[%s219 + $0xc4] sm:$0xf]
      %v276 = vld [vmem:[%s219 + $0xc8] sm:$0x1]
      %v277 = vld [vmem:[%s219 + $0xcc] sm:$0xf]
      %v278 = vld [vmem:[%s219 + $0xd0] sm:$0xf]
      %v279 = vld [vmem:[%s219 + $0xd4] sm:$0x1]
      %v280 = vld [vmem:[%s1] sm:$0x3]
      %vm281 = vsmask.f32 3328
      %vm282 = vsmask.f32 7440
      %vm283 = vmor %vm281, %vm282
      %v285 = vshrl.u32 %v226, 16
      %v287 = vrot.slane %v285, 4
      %v288 = vshll.u32 %v226, 16
      %v290 = vrot.slane %v288, 5
      %v291 = vor.u32 %v287, %v290
      %v292 = vrot.slane %v291, 4
      %v294 = vshll.u32 %v227, 16
      %v296 = vrot.slane %v294, 5
      %v297 = vsel %vm283, %v292, %v296
      %v298 = vshrl.u32 %v227, 16
      %v300 = vrot.slane %v298, 4
      %v301 = vor.u32 %v300, %v296
      %v302 = vrot.slane %v301, 4
      %v304 = vshll.u32 %v228, 16
      %v306 = vrot.slane %v304, 5
      %v307 = vsel %vm283, %v302, %v306
      %v309 = vshrl.u32 %v229, 16
      %v311 = vrot.slane %v309, 4
      %v312 = vshll.u32 %v229, 16
      %v314 = vrot.slane %v312, 5
      %v315 = vor.u32 %v311, %v314
      %v316 = vrot.slane %v315, 4
      %v318 = vshll.u32 %v230, 16
      %v320 = vrot.slane %v318, 5
      %v321 = vsel %vm283, %v316, %v320
      %v322 = vshrl.u32 %v230, 16
      %v324 = vrot.slane %v322, 4
      %v325 = vor.u32 %v324, %v320
      %v326 = vrot.slane %v325, 4
      %v328 = vshll.u32 %v231, 16
      %v330 = vrot.slane %v328, 5
      %v331 = vsel %vm283, %v326, %v330
      %v333 = vshrl.u32 %v232, 16
      %v335 = vrot.slane %v333, 4
      %v336 = vshll.u32 %v232, 16
      %v338 = vrot.slane %v336, 5
      %v339 = vor.u32 %v335, %v338
      %v340 = vrot.slane %v339, 4
      %v342 = vshll.u32 %v233, 16
      %v344 = vrot.slane %v342, 5
      %v345 = vsel %vm283, %v340, %v344
      %v346 = vshrl.u32 %v233, 16
      %v348 = vrot.slane %v346, 4
      %v349 = vor.u32 %v348, %v344
      %v350 = vrot.slane %v349, 4
      %v352 = vshll.u32 %v234, 16
      %v354 = vrot.slane %v352, 5
      %v355 = vsel %vm283, %v350, %v354
      %v357 = vshrl.u32 %v235, 16
      %v359 = vrot.slane %v357, 4
      %v360 = vshll.u32 %v235, 16
      %v362 = vrot.slane %v360, 5
      %v363 = vor.u32 %v359, %v362
      %v364 = vrot.slane %v363, 4
      %v366 = vshll.u32 %v236, 16
      %v368 = vrot.slane %v366, 5
      %v369 = vsel %vm283, %v364, %v368
      %v370 = vshrl.u32 %v236, 16
      %v372 = vrot.slane %v370, 4
      %v373 = vor.u32 %v372, %v368
      %v374 = vrot.slane %v373, 4
      %v376 = vshll.u32 %v237, 16
      %v378 = vrot.slane %v376, 5
      %v379 = vsel %vm283, %v374, %v378
      %v381 = vshrl.u32 %v238, 16
      %v383 = vrot.slane %v381, 4
      %v384 = vshll.u32 %v238, 16
      %v386 = vrot.slane %v384, 5
      %v387 = vor.u32 %v383, %v386
      %v388 = vrot.slane %v387, 4
      %v390 = vshll.u32 %v239, 16
      %v392 = vrot.slane %v390, 5
      %v393 = vsel %vm283, %v388, %v392
      %v394 = vshrl.u32 %v239, 16
      %v396 = vrot.slane %v394, 4
      %v397 = vor.u32 %v396, %v392
      %v398 = vrot.slane %v397, 4
      %v400 = vshll.u32 %v240, 16
      %v402 = vrot.slane %v400, 5
      %v403 = vsel %vm283, %v398, %v402
      %v405 = vshrl.u32 %v241, 16
      %v407 = vrot.slane %v405, 4
      %v408 = vshll.u32 %v241, 16
      %v410 = vrot.slane %v408, 5
      %v411 = vor.u32 %v407, %v410
      %v412 = vrot.slane %v411, 4
      %v414 = vshll.u32 %v242, 16
      %v416 = vrot.slane %v414, 5
      %v417 = vsel %vm283, %v412, %v416
      %v418 = vshrl.u32 %v242, 16
      %v420 = vrot.slane %v418, 4
      %v421 = vor.u32 %v420, %v416
      %v422 = vrot.slane %v421, 4
      %v424 = vshll.u32 %v243, 16
      %v426 = vrot.slane %v424, 5
      %v427 = vsel %vm283, %v422, %v426
      %v429 = vshrl.u32 %v244, 16
      %v431 = vrot.slane %v429, 4
      %v432 = vshll.u32 %v244, 16
      %v434 = vrot.slane %v432, 5
      %v435 = vor.u32 %v431, %v434
      %v436 = vrot.slane %v435, 4
      %v438 = vshll.u32 %v245, 16
      %v440 = vrot.slane %v438, 5
      %v441 = vsel %vm283, %v436, %v440
      %v442 = vshrl.u32 %v245, 16
      %v444 = vrot.slane %v442, 4
      %v445 = vor.u32 %v444, %v440
      %v446 = vrot.slane %v445, 4
      %v448 = vshll.u32 %v246, 16
      %v450 = vrot.slane %v448, 5
      %v451 = vsel %vm283, %v446, %v450
      %v453 = vshrl.u32 %v247, 16
      %v455 = vrot.slane %v453, 4
      %v456 = vshll.u32 %v247, 16
      %v458 = vrot.slane %v456, 5
      %v459 = vor.u32 %v455, %v458
      %v460 = vrot.slane %v459, 4
      %v462 = vshll.u32 %v248, 16
      %v464 = vrot.slane %v462, 5
      %v465 = vsel %vm283, %v460, %v464
      %v466 = vshrl.u32 %v248, 16
      %v468 = vrot.slane %v466, 4
      %v469 = vor.u32 %v468, %v464
      %v470 = vrot.slane %v469, 4
      %v472 = vshll.u32 %v249, 16
      %v474 = vrot.slane %v472, 5
      %v475 = vsel %vm283, %v470, %v474
      %v477 = vshrl.u32 %v250, 16
      %v479 = vrot.slane %v477, 4
      %v480 = vshll.u32 %v250, 16
      %v482 = vrot.slane %v480, 5
      %v483 = vor.u32 %v479, %v482
      %v484 = vrot.slane %v483, 4
      %v486 = vshll.u32 %v251, 16
      %v488 = vrot.slane %v486, 5
      %v489 = vsel %vm283, %v484, %v488
      %v490 = vshrl.u32 %v251, 16
      %v492 = vrot.slane %v490, 4
      %v493 = vor.u32 %v492, %v488
      %v494 = vrot.slane %v493, 4
      %v496 = vshll.u32 %v252, 16
      %v498 = vrot.slane %v496, 5
      %v499 = vsel %vm283, %v494, %v498
      %v501 = vshrl.u32 %v253, 16
      %v503 = vrot.slane %v501, 4
      %v504 = vshll.u32 %v253, 16
      %v506 = vrot.slane %v504, 5
      %v507 = vor.u32 %v503, %v506
      %v508 = vrot.slane %v507, 4
      %v510 = vshll.u32 %v254, 16
      %v512 = vrot.slane %v510, 5
      %v513 = vsel %vm283, %v508, %v512
      %v514 = vshrl.u32 %v254, 16
      %v516 = vrot.slane %v514, 4
      %v517 = vor.u32 %v516, %v512
      %v518 = vrot.slane %v517, 4
      %v520 = vshll.u32 %v255, 16
      %v522 = vrot.slane %v520, 5
      %v523 = vsel %vm283, %v518, %v522
      %v525 = vshrl.u32 %v256, 16
      %v527 = vrot.slane %v525, 4
      %v528 = vshll.u32 %v256, 16
      %v530 = vrot.slane %v528, 5
      %v531 = vor.u32 %v527, %v530
      %v532 = vrot.slane %v531, 4
      %v534 = vshll.u32 %v257, 16
      %v536 = vrot.slane %v534, 5
      %v537 = vsel %vm283, %v532, %v536
      %v538 = vshrl.u32 %v257, 16
      %v540 = vrot.slane %v538, 4
      %v541 = vor.u32 %v540, %v536
      %v542 = vrot.slane %v541, 4
      %v544 = vshll.u32 %v258, 16
      %v546 = vrot.slane %v544, 5
      %v547 = vsel %vm283, %v542, %v546
      %v549 = vshrl.u32 %v259, 16
      %v551 = vrot.slane %v549, 4
      %v552 = vshll.u32 %v259, 16
      %v554 = vrot.slane %v552, 5
      %v555 = vor.u32 %v551, %v554
      %v556 = vrot.slane %v555, 4
      %v558 = vshll.u32 %v260, 16
      %v560 = vrot.slane %v558, 5
      %v561 = vsel %vm283, %v556, %v560
      %v562 = vshrl.u32 %v260, 16
      %v564 = vrot.slane %v562, 4
      %v565 = vor.u32 %v564, %v560
      %v566 = vrot.slane %v565, 4
      %v568 = vshll.u32 %v261, 16
      %v570 = vrot.slane %v568, 5
      %v571 = vsel %vm283, %v566, %v570
      %v573 = vshrl.u32 %v262, 16
      %v575 = vrot.slane %v573, 4
      %v576 = vshll.u32 %v262, 16
      %v578 = vrot.slane %v576, 5
      %v579 = vor.u32 %v575, %v578
      %v580 = vrot.slane %v579, 4
      %v582 = vshll.u32 %v263, 16
      %v584 = vrot.slane %v582, 5
      %v585 = vsel %vm283, %v580, %v584
      %v586 = vshrl.u32 %v263, 16
      %v588 = vrot.slane %v586, 4
      %v589 = vor.u32 %v588, %v584
      %v590 = vrot.slane %v589, 4
      %v592 = vshll.u32 %v264, 16
      %v594 = vrot.slane %v592, 5
      %v595 = vsel %vm283, %v590, %v594
      %v597 = vshrl.u32 %v265, 16
      %v599 = vrot.slane %v597, 4
      %v600 = vshll.u32 %v265, 16
      %v602 = vrot.slane %v600, 5
      %v603 = vor.u32 %v599, %v602
      %v604 = vrot.slane %v603, 4
      %v606 = vshll.u32 %v266, 16
      %v608 = vrot.slane %v606, 5
      %v609 = vsel %vm283, %v604, %v608
      %v610 = vshrl.u32 %v266, 16
      %v612 = vrot.slane %v610, 4
      %v613 = vor.u32 %v612, %v608
      %v614 = vrot.slane %v613, 4
      %v616 = vshll.u32 %v267, 16
      %v618 = vrot.slane %v616, 5
      %v619 = vsel %vm283, %v614, %v618
      %v621 = vshrl.u32 %v268, 16
      %v623 = vrot.slane %v621, 4
      %v624 = vshll.u32 %v268, 16
      %v626 = vrot.slane %v624, 5
      %v627 = vor.u32 %v623, %v626
      %v628 = vrot.slane %v627, 4
      %v630 = vshll.u32 %v269, 16
      %v632 = vrot.slane %v630, 5
      %v633 = vsel %vm283, %v628, %v632
      %v634 = vshrl.u32 %v269, 16
      %v636 = vrot.slane %v634, 4
      %v637 = vor.u32 %v636, %v632
      %v638 = vrot.slane %v637, 4
      %v640 = vshll.u32 %v270, 16
      %v642 = vrot.slane %v640, 5
      %v643 = vsel %vm283, %v638, %v642
      %v645 = vshrl.u32 %v271, 16
      %v647 = vrot.slane %v645, 4
      %v648 = vshll.u32 %v271, 16
      %v650 = vrot.slane %v648, 5
      %v651 = vor.u32 %v647, %v650
      %v652 = vrot.slane %v651, 4
      %v654 = vshll.u32 %v272, 16
      %v656 = vrot.slane %v654, 5
      %v657 = vsel %vm283, %v652, %v656
      %v658 = vshrl.u32 %v272, 16
      %v660 = vrot.slane %v658, 4
      %v661 = vor.u32 %v660, %v656
      %v662 = vrot.slane %v661, 4
      %v664 = vshll.u32 %v273, 16
      %v666 = vrot.slane %v664, 5
      %v667 = vsel %vm283, %v662, %v666
      %s668 = scalar_lea.vmem %s1, 2
      %v669 = vld [vmem:[%s668] sm:$0x3]
      %v670 = vunpack.c.l.b16 %v297
      %v671 = vunpack.c.l.b16 %v307
      %v672 = vunpack.c.l.b16 %v321
      %v673 = vunpack.c.l.b16 %v331
      %v674 = vunpack.c.l.b16 %v345
      %v675 = vunpack.c.l.b16 %v355
      %v676 = vunpack.c.l.b16 %v369
      %v677 = vunpack.c.l.b16 %v379
      %v678 = vunpack.c.l.b16 %v393
      %v679 = vunpack.c.l.b16 %v403
      %v680 = vunpack.c.l.b16 %v417
      %v681 = vunpack.c.l.b16 %v427
      %v682 = vunpack.c.l.b16 %v441
      %v683 = vunpack.c.l.b16 %v451
      %v684 = vunpack.c.l.b16 %v465
      %v685 = vunpack.c.l.b16 %v475
      %v686 = vunpack.c.l.b16 %v489
      %v687 = vunpack.c.l.b16 %v499
      %v688 = vunpack.c.l.b16 %v513
      %v689 = vunpack.c.l.b16 %v523
      %v690 = vunpack.c.l.b16 %v537
      %v691 = vunpack.c.l.b16 %v547
      %v692 = vunpack.c.l.b16 %v561
      %v693 = vunpack.c.l.b16 %v571
      %v694 = vunpack.c.l.b16 %v585
      %v695 = vunpack.c.l.b16 %v595
      %v696 = vunpack.c.l.b16 %v609
      %v697 = vunpack.c.l.b16 %v619
      %v698 = vunpack.c.l.b16 %v633
      %v699 = vunpack.c.l.b16 %v643
      %v700 = vunpack.c.l.b16 %v657
      %v701 = vunpack.c.l.b16 %v667
      %v702 = vpack.c.b16 %v671, %v670
      %v703 = vpack.c.b16 %v673, %v672
      %v704 = vpack.c.b16 %v675, %v674
      %v705 = vpack.c.b16 %v677, %v676
      %v706 = vpack.c.b16 %v679, %v678
      %v707 = vpack.c.b16 %v681, %v680
      %v708 = vpack.c.b16 %v683, %v682
      %v709 = vpack.c.b16 %v685, %v684
      %v710 = vpack.c.b16 %v687, %v686
      %v711 = vpack.c.b16 %v689, %v688
      %v712 = vpack.c.b16 %v691, %v690
      %v713 = vpack.c.b16 %v693, %v692
      %v714 = vpack.c.b16 %v695, %v694
      %v715 = vpack.c.b16 %v697, %v696
      %v716 = vpack.c.b16 %v699, %v698
      %v717 = vpack.c.b16 %v701, %v700
      %vm718 = vcmask 31744
      %v720 = vsel %vm718, %v702, 0
      %v723 = vsel %vm718, %v703, 0
      %v726 = vsel %vm718, %v704, 0
      %v729 = vsel %vm718, %v705, 0
      %v732 = vsel %vm718, %v706, 0
      %v735 = vsel %vm718, %v707, 0
      %v738 = vsel %vm718, %v708, 0
      %v741 = vsel %vm718, %v709, 0
      %v744 = vsel %vm718, %v710, 0
      %v747 = vsel %vm718, %v711, 0
      %v750 = vsel %vm718, %v712, 0
      %v753 = vsel %vm718, %v713, 0
      %v756 = vsel %vm718, %v714, 0
      %v759 = vsel %vm718, %v715, 0
      %v762 = vsel %vm718, %v716, 0
      %v765 = vsel %vm718, %v717, 0
      %vm767 = vcmask 1041408
      %v769 = vsel %vm767, %v669, 0
      %771 = vmatprep.subr.bf16.mxu0 0
      %772 = vmatpush1.bf16.msra.mxu0 0
      %773 = vmatprep.subr.bf16.mxu0 0
      %774 = vmatpush1.bf16.msra.mxu0 0
      %775 = vmatprep.subr.bf16.mxu0 0
      %776 = vmatpush1.bf16.msra.mxu0 0
      %777 = vmatprep.subr.bf16.mxu0 0
      %778 = vmatpush1.bf16.msra.mxu0 0
      %779 = vmatprep.subr.bf16.mxu0 0
      %780 = vmatpush1.bf16.msra.mxu0 0
      %781 = vmatprep.subr.bf16.mxu0 0
      %782 = vmatpush1.bf16.msra.mxu0 0
      %783 = vmatprep.subr.bf16.mxu0 0
      %784 = vmatpush1.bf16.msra.mxu0 0
      %785 = vmatprep.subr.bf16.mxu0 0
      %786 = vmatpush1.bf16.msra.mxu0 %v769
      %787 = vmatprep.subr.bf16.mxu0 0
      %788 = vmatpush2.bf16.msra.mxu0 0
      %789 = vmatprep.subr.bf16.mxu0 0
      %790 = vmatpush2.bf16.msra.mxu0 0
      %791 = vmatprep.subr.bf16.mxu0 0
      %792 = vmatpush2.bf16.msra.mxu0 0
      %793 = vmatprep.subr.bf16.mxu0 0
      %794 = vmatpush2.bf16.msra.mxu0 0
      %795 = vmatprep.subr.bf16.mxu0 0
      %796 = vmatpush2.bf16.msra.mxu0 0
      %797 = vmatprep.subr.bf16.mxu0 0
      %798 = vmatpush2.bf16.msra.mxu0 0
      %799 = vmatprep.subr.bf16.mxu0 0
      %800 = vmatpush2.bf16.msra.mxu0 0
      %801 = vmatprep.subr.bf16.mxu0 0
      %802 = vmatpush2.bf16.msra.mxu0 0
      %803 = vmatprep.mubr.bf16.mxu0 0
      %804 = vmatmul.mubr.bf16.gmra.mxu0 %v720
      %v805 = vpop.f32.mrf.mxu0
      %v806 = vadd.f32 0.0, %v805
      %v807 = vpop.f32.mrf.mxu0
      %v808 = vpop.f32.mrf.mxu0
      %v809 = vadd.f32 0.0, %v808
      %v810 = vpop.f32.mrf.mxu0
      %811 = vmatprep.mubr.bf16.mxu0 0
      %812 = vmatmul.mubr.bf16.gmra.mxu0 %v723
      %v813 = vpop.f32.mrf.mxu0
      %v814 = vadd.f32 0.0, %v813
      %v815 = vpop.f32.mrf.mxu0
      %v816 = vpop.f32.mrf.mxu0
      %v817 = vadd.f32 0.0, %v816
      %v818 = vpop.f32.mrf.mxu0
      %819 = vmatprep.mubr.bf16.mxu0 0
      %820 = vmatmul.mubr.bf16.gmra.mxu0 %v726
      %v821 = vpop.f32.mrf.mxu0
      %v822 = vadd.f32 0.0, %v821
      %v823 = vpop.f32.mrf.mxu0
      %v824 = vpop.f32.mrf.mxu0
      %v825 = vadd.f32 0.0, %v824
      %v826 = vpop.f32.mrf.mxu0
      %827 = vmatprep.mubr.bf16.mxu0 0
      %828 = vmatmul.mubr.bf16.gmra.mxu0 %v729
      %v829 = vpop.f32.mrf.mxu0
      %v830 = vadd.f32 0.0, %v829
      %v831 = vpop.f32.mrf.mxu0
      %v832 = vpop.f32.mrf.mxu0
      %v833 = vadd.f32 0.0, %v832
      %v834 = vpop.f32.mrf.mxu0
      %835 = vmatprep.mubr.bf16.mxu0 0
      %836 = vmatmul.mubr.bf16.gmra.mxu0 %v732
      %v837 = vpop.f32.mrf.mxu0
      %v838 = vadd.f32 0.0, %v837
      %v839 = vpop.f32.mrf.mxu0
      %v840 = vpop.f32.mrf.mxu0
      %v841 = vadd.f32 0.0, %v840
      %v842 = vpop.f32.mrf.mxu0
      %843 = vmatprep.mubr.bf16.mxu0 0
      %844 = vmatmul.mubr.bf16.gmra.mxu0 %v735
      %v845 = vpop.f32.mrf.mxu0
      %v846 = vadd.f32 0.0, %v845
      %v847 = vpop.f32.mrf.mxu0
      %v848 = vpop.f32.mrf.mxu0
      %v849 = vadd.f32 0.0, %v848
      %v850 = vpop.f32.mrf.mxu0
      %851 = vmatprep.mubr.bf16.mxu0 0
      %852 = vmatmul.mubr.bf16.gmra.mxu0 %v738
      %v853 = vpop.f32.mrf.mxu0
      %v854 = vadd.f32 0.0, %v853
      %v855 = vpop.f32.mrf.mxu0
      %v856 = vpop.f32.mrf.mxu0
      %v857 = vadd.f32 0.0, %v856
      %v858 = vpop.f32.mrf.mxu0
      %859 = vmatprep.mubr.bf16.mxu0 0
      %860 = vmatmul.mubr.bf16.gmra.mxu0 %v741
      %v861 = vpop.f32.mrf.mxu0
      %v862 = vadd.f32 0.0, %v861
      %v863 = vpop.f32.mrf.mxu0
      %v864 = vpop.f32.mrf.mxu0
      %v865 = vadd.f32 0.0, %v864
      %v866 = vpop.f32.mrf.mxu0
      %867 = vmatprep.mubr.bf16.mxu0 0
      %868 = vmatmul.mubr.bf16.gmra.mxu0 %v744
      %v869 = vpop.f32.mrf.mxu0
      %v870 = vadd.f32 0.0, %v869
      %v871 = vpop.f32.mrf.mxu0
      %v872 = vpop.f32.mrf.mxu0
      %v873 = vadd.f32 0.0, %v872
      %v874 = vpop.f32.mrf.mxu0
      %875 = vmatprep.mubr.bf16.mxu0 0
      %876 = vmatmul.mubr.bf16.gmra.mxu0 %v747
      %v877 = vpop.f32.mrf.mxu0
      %v878 = vadd.f32 0.0, %v877
      %v879 = vpop.f32.mrf.mxu0
      %v880 = vpop.f32.mrf.mxu0
      %v881 = vadd.f32 0.0, %v880
      %v882 = vpop.f32.mrf.mxu0
      %883 = vmatprep.mubr.bf16.mxu0 0
      %884 = vmatmul.mubr.bf16.gmra.mxu0 %v750
      %v885 = vpop.f32.mrf.mxu0
      %v886 = vadd.f32 0.0, %v885
      %v887 = vpop.f32.mrf.mxu0
      %v888 = vpop.f32.mrf.mxu0
      %v889 = vadd.f32 0.0, %v888
      %v890 = vpop.f32.mrf.mxu0
      %891 = vmatprep.mubr.bf16.mxu0 0
      %892 = vmatmul.mubr.bf16.gmra.mxu0 %v753
      %v893 = vpop.f32.mrf.mxu0
      %v894 = vadd.f32 0.0, %v893
      %v895 = vpop.f32.mrf.mxu0
      %v896 = vpop.f32.mrf.mxu0
      %v897 = vadd.f32 0.0, %v896
      %v898 = vpop.f32.mrf.mxu0
      %899 = vmatprep.mubr.bf16.mxu0 0
      %900 = vmatmul.mubr.bf16.gmra.mxu0 %v756
      %v901 = vpop.f32.mrf.mxu0
      %v902 = vadd.f32 0.0, %v901
      %v903 = vpop.f32.mrf.mxu0
      %v904 = vpop.f32.mrf.mxu0
      %v905 = vadd.f32 0.0, %v904
      %v906 = vpop.f32.mrf.mxu0
      %907 = vmatprep.mubr.bf16.mxu0 0
      %908 = vmatmul.mubr.bf16.gmra.mxu0 %v759
      %v909 = vpop.f32.mrf.mxu0
      %v910 = vadd.f32 0.0, %v909
      %v911 = vpop.f32.mrf.mxu0
      %v912 = vpop.f32.mrf.mxu0
      %v913 = vadd.f32 0.0, %v912
      %v914 = vpop.f32.mrf.mxu0
      %915 = vmatprep.mubr.bf16.mxu0 0
      %916 = vmatmul.mubr.bf16.gmra.mxu0 %v762
      %v917 = vpop.f32.mrf.mxu0
      %v918 = vadd.f32 0.0, %v917
      %v919 = vpop.f32.mrf.mxu0
      %v920 = vpop.f32.mrf.mxu0
      %v921 = vadd.f32 0.0, %v920
      %v922 = vpop.f32.mrf.mxu0
      %923 = vmatprep.mubr.bf16.mxu0 0
      %924 = vmatmul.mubr.bf16.gmra.mxu0 %v765
      %v925 = vpop.f32.mrf.mxu0
      %v926 = vadd.f32 0.0, %v925
      %v927 = vpop.f32.mrf.mxu0
      %v928 = vpop.f32.mrf.mxu0
      %v929 = vadd.f32 0.0, %v928
      %v930 = vpop.f32.mrf.mxu0
      %931 = vdwg.mxu0
      %v964 = vunpack.c.l.b16 %v226
      %v965 = vunpack.c.l.b16 %v227
      %v966 = vunpack.c.l.b16 %v229
      %v967 = vunpack.c.l.b16 %v230
      %v968 = vunpack.c.l.b16 %v232
      %v969 = vunpack.c.l.b16 %v233
      %v970 = vunpack.c.l.b16 %v235
      %v971 = vunpack.c.l.b16 %v236
      %v972 = vunpack.c.l.b16 %v238
      %v973 = vunpack.c.l.b16 %v239
      %v974 = vunpack.c.l.b16 %v241
      %v975 = vunpack.c.l.b16 %v242
      %v976 = vunpack.c.l.b16 %v244
      %v977 = vunpack.c.l.b16 %v245
      %v978 = vunpack.c.l.b16 %v247
      %v979 = vunpack.c.l.b16 %v248
      %v980 = vunpack.c.l.b16 %v250
      %v981 = vunpack.c.l.b16 %v251
      %v982 = vunpack.c.l.b16 %v253
      %v983 = vunpack.c.l.b16 %v254
      %v984 = vunpack.c.l.b16 %v256
      %v985 = vunpack.c.l.b16 %v257
      %v986 = vunpack.c.l.b16 %v259
      %v987 = vunpack.c.l.b16 %v260
      %v988 = vunpack.c.l.b16 %v262
      %v989 = vunpack.c.l.b16 %v263
      %v990 = vunpack.c.l.b16 %v265
      %v991 = vunpack.c.l.b16 %v266
      %v992 = vunpack.c.l.b16 %v268
      %v993 = vunpack.c.l.b16 %v269
      %v994 = vunpack.c.l.b16 %v271
      %v995 = vunpack.c.l.b16 %v272
      %v996 = vpack.c.b16 %v965, %v964
      %v997 = vpack.c.b16 %v967, %v966
      %v998 = vpack.c.b16 %v969, %v968
      %v999 = vpack.c.b16 %v971, %v970
      %v1000 = vpack.c.b16 %v973, %v972
      %v1001 = vpack.c.b16 %v975, %v974
      %v1002 = vpack.c.b16 %v977, %v976
      %v1003 = vpack.c.b16 %v979, %v978
      %v1004 = vpack.c.b16 %v981, %v980
      %v1005 = vpack.c.b16 %v983, %v982
      %v1006 = vpack.c.b16 %v985, %v984
      %v1007 = vpack.c.b16 %v987, %v986
      %v1008 = vpack.c.b16 %v989, %v988
      %v1009 = vpack.c.b16 %v991, %v990
      %v1010 = vpack.c.b16 %v993, %v992
      %v1011 = vpack.c.b16 %v995, %v994
      %v1013 = vsel %vm718, %v996, 0
      %v1016 = vsel %vm718, %v997, 0
      %v1019 = vsel %vm718, %v998, 0
      %v1022 = vsel %vm718, %v999, 0
      %v1025 = vsel %vm718, %v1000, 0
      %v1028 = vsel %vm718, %v1001, 0
      %v1031 = vsel %vm718, %v1002, 0
      %v1034 = vsel %vm718, %v1003, 0
      %v1037 = vsel %vm718, %v1004, 0
      %v1040 = vsel %vm718, %v1005, 0
      %v1043 = vsel %vm718, %v1006, 0
      %v1046 = vsel %vm718, %v1007, 0
      %v1049 = vsel %vm718, %v1008, 0
      %v1052 = vsel %vm718, %v1009, 0
      %v1055 = vsel %vm718, %v1010, 0
      %v1058 = vsel %vm718, %v1011, 0
      %v1061 = vsel %vm767, %v280, 0
      %1063 = vmatprep.subr.bf16.mxu0 0
      %1064 = vmatpush1.bf16.msra.mxu0 0
      %1065 = vmatprep.subr.bf16.mxu0 0
      %1066 = vmatpush1.bf16.msra.mxu0 0
      %1067 = vmatprep.subr.bf16.mxu0 0
      %1068 = vmatpush1.bf16.msra.mxu0 0
      %1069 = vmatprep.subr.bf16.mxu0 0
      %1070 = vmatpush1.bf16.msra.mxu0 0
      %1071 = vmatprep.subr.bf16.mxu0 0
      %1072 = vmatpush1.bf16.msra.mxu0 0
      %1073 = vmatprep.subr.bf16.mxu0 0
      %1074 = vmatpush1.bf16.msra.mxu0 0
      %1075 = vmatprep.subr.bf16.mxu0 0
      %1076 = vmatpush1.bf16.msra.mxu0 0
      %1077 = vmatprep.subr.bf16.mxu0 0
      %1078 = vmatpush1.bf16.msra.mxu0 %v1061
      %1079 = vmatprep.subr.bf16.mxu0 0
      %1080 = vmatpush2.bf16.msra.mxu0 0
      %1081 = vmatprep.subr.bf16.mxu0 0
      %1082 = vmatpush2.bf16.msra.mxu0 0
      %1083 = vmatprep.subr.bf16.mxu0 0
      %1084 = vmatpush2.bf16.msra.mxu0 0
      %1085 = vmatprep.subr.bf16.mxu0 0
      %1086 = vmatpush2.bf16.msra.mxu0 0
      %1087 = vmatprep.subr.bf16.mxu0 0
      %1088 = vmatpush2.bf16.msra.mxu0 0
      %1089 = vmatprep.subr.bf16.mxu0 0
      %1090 = vmatpush2.bf16.msra.mxu0 0
      %1091 = vmatprep.subr.bf16.mxu0 0
      %1092 = vmatpush2.bf16.msra.mxu0 0
      %1093 = vmatprep.subr.bf16.mxu0 0
      %1094 = vmatpush2.bf16.msra.mxu0 0
      %1095 = vmatprep.mubr.bf16.mxu0 0
      %1096 = vmatmul.mubr.bf16.gmra.mxu0 %v1013
      %v1097 = vpop.f32.mrf.mxu0
      %v1098 = vadd.f32 %v806, %v1097
      %v1099 = vpop.f32.mrf.mxu0
      %v1100 = vpop.f32.mrf.mxu0
      %v1101 = vadd.f32 %v809, %v1100
      %v1102 = vpop.f32.mrf.mxu0
      %1103 = vmatprep.mubr.bf16.mxu0 0
      %1104 = vmatmul.mubr.bf16.gmra.mxu0 %v1016
      %v1105 = vpop.f32.mrf.mxu0
      %v1106 = vadd.f32 %v814, %v1105
      %v1107 = vpop.f32.mrf.mxu0
      %v1108 = vpop.f32.mrf.mxu0
      %v1109 = vadd.f32 %v817, %v1108
      %v1110 = vpop.f32.mrf.mxu0
      %1111 = vmatprep.mubr.bf16.mxu0 0
      %1112 = vmatmul.mubr.bf16.gmra.mxu0 %v1019
      %v1113 = vpop.f32.mrf.mxu0
      %v1114 = vadd.f32 %v822, %v1113
      %v1115 = vpop.f32.mrf.mxu0
      %v1116 = vpop.f32.mrf.mxu0
      %v1117 = vadd.f32 %v825, %v1116
      %v1118 = vpop.f32.mrf.mxu0
      %1119 = vmatprep.mubr.bf16.mxu0 0
      %1120 = vmatmul.mubr.bf16.gmra.mxu0 %v1022
      %v1121 = vpop.f32.mrf.mxu0
      %v1122 = vadd.f32 %v830, %v1121
      %v1123 = vpop.f32.mrf.mxu0
      %v1124 = vpop.f32.mrf.mxu0
      %v1125 = vadd.f32 %v833, %v1124
      %v1126 = vpop.f32.mrf.mxu0
      %1127 = vmatprep.mubr.bf16.mxu0 0
      %1128 = vmatmul.mubr.bf16.gmra.mxu0 %v1025
      %v1129 = vpop.f32.mrf.mxu0
      %v1130 = vadd.f32 %v838, %v1129
      %v1131 = vpop.f32.mrf.mxu0
      %v1132 = vpop.f32.mrf.mxu0
      %v1133 = vadd.f32 %v841, %v1132
      %v1134 = vpop.f32.mrf.mxu0
      %1135 = vmatprep.mubr.bf16.mxu0 0
      %1136 = vmatmul.mubr.bf16.gmra.mxu0 %v1028
      %v1137 = vpop.f32.mrf.mxu0
      %v1138 = vadd.f32 %v846, %v1137
      %v1139 = vpop.f32.mrf.mxu0
      %v1140 = vpop.f32.mrf.mxu0
      %v1141 = vadd.f32 %v849, %v1140
      %v1142 = vpop.f32.mrf.mxu0
      %1143 = vmatprep.mubr.bf16.mxu0 0
      %1144 = vmatmul.mubr.bf16.gmra.mxu0 %v1031
      %v1145 = vpop.f32.mrf.mxu0
      %v1146 = vadd.f32 %v854, %v1145
      %v1147 = vpop.f32.mrf.mxu0
      %v1148 = vpop.f32.mrf.mxu0
      %v1149 = vadd.f32 %v857, %v1148
      %v1150 = vpop.f32.mrf.mxu0
      %1151 = vmatprep.mubr.bf16.mxu0 0
      %1152 = vmatmul.mubr.bf16.gmra.mxu0 %v1034
      %v1153 = vpop.f32.mrf.mxu0
      %v1154 = vadd.f32 %v862, %v1153
      %v1155 = vpop.f32.mrf.mxu0
      %v1156 = vpop.f32.mrf.mxu0
      %v1157 = vadd.f32 %v865, %v1156
      %v1158 = vpop.f32.mrf.mxu0
      %1159 = vmatprep.mubr.bf16.mxu0 0
      %1160 = vmatmul.mubr.bf16.gmra.mxu0 %v1037
      %v1161 = vpop.f32.mrf.mxu0
      %v1162 = vadd.f32 %v870, %v1161
      %v1163 = vpop.f32.mrf.mxu0
      %v1164 = vpop.f32.mrf.mxu0
      %v1165 = vadd.f32 %v873, %v1164
      %v1166 = vpop.f32.mrf.mxu0
      %1167 = vmatprep.mubr.bf16.mxu0 0
      %1168 = vmatmul.mubr.bf16.gmra.mxu0 %v1040
      %v1169 = vpop.f32.mrf.mxu0
      %v1170 = vadd.f32 %v878, %v1169
      %v1171 = vpop.f32.mrf.mxu0
      %v1172 = vpop.f32.mrf.mxu0
      %v1173 = vadd.f32 %v881, %v1172
      %v1174 = vpop.f32.mrf.mxu0
      %1175 = vmatprep.mubr.bf16.mxu0 0
      %1176 = vmatmul.mubr.bf16.gmra.mxu0 %v1043
      %v1177 = vpop.f32.mrf.mxu0
      %v1178 = vadd.f32 %v886, %v1177
      %v1179 = vpop.f32.mrf.mxu0
      %v1180 = vpop.f32.mrf.mxu0
      %v1181 = vadd.f32 %v889, %v1180
      %v1182 = vpop.f32.mrf.mxu0
      %1183 = vmatprep.mubr.bf16.mxu0 0
      %1184 = vmatmul.mubr.bf16.gmra.mxu0 %v1046
      %v1185 = vpop.f32.mrf.mxu0
      %v1186 = vadd.f32 %v894, %v1185
      %v1187 = vpop.f32.mrf.mxu0
      %v1188 = vpop.f32.mrf.mxu0
      %v1189 = vadd.f32 %v897, %v1188
      %v1190 = vpop.f32.mrf.mxu0
      %1191 = vmatprep.mubr.bf16.mxu0 0
      %1192 = vmatmul.mubr.bf16.gmra.mxu0 %v1049
      %v1193 = vpop.f32.mrf.mxu0
      %v1194 = vadd.f32 %v902, %v1193
      %v1195 = vpop.f32.mrf.mxu0
      %v1196 = vpop.f32.mrf.mxu0
      %v1197 = vadd.f32 %v905, %v1196
      %v1198 = vpop.f32.mrf.mxu0
      %1199 = vmatprep.mubr.bf16.mxu0 0
      %1200 = vmatmul.mubr.bf16.gmra.mxu0 %v1052
      %v1201 = vpop.f32.mrf.mxu0
      %v1202 = vadd.f32 %v910, %v1201
      %v1203 = vpop.f32.mrf.mxu0
      %v1204 = vpop.f32.mrf.mxu0
      %v1205 = vadd.f32 %v913, %v1204
      %v1206 = vpop.f32.mrf.mxu0
      %1207 = vmatprep.mubr.bf16.mxu0 0
      %1208 = vmatmul.mubr.bf16.gmra.mxu0 %v1055
      %v1209 = vpop.f32.mrf.mxu0
      %v1210 = vadd.f32 %v918, %v1209
      %v1211 = vpop.f32.mrf.mxu0
      %v1212 = vpop.f32.mrf.mxu0
      %v1213 = vadd.f32 %v921, %v1212
      %v1214 = vpop.f32.mrf.mxu0
      %1215 = vmatprep.mubr.bf16.mxu0 0
      %1216 = vmatmul.mubr.bf16.gmra.mxu0 %v1058
      %v1217 = vpop.f32.mrf.mxu0
      %v1218 = vadd.f32 %v926, %v1217
      %v1219 = vpop.f32.mrf.mxu0
      %v1220 = vpop.f32.mrf.mxu0
      %v1221 = vadd.f32 %v929, %v1220
      %v1222 = vpop.f32.mrf.mxu0
      %1223 = vdwg.mxu0
      %vm1240 = vcmask 1042432
      %vm1241 = vcmask 1046532
      %vm1242 = vmor %vm1240, %vm1241
      %v1243 = vrot.slane %v226, 5
      %v1244 = vrot.slane %v1243, 4
      %v1245 = vrot.slane %v227, 5
      %v1246 = vsel %vm1242, %v1244, %v1245
      %v1247 = vrot.slane %v1245, 4
      %v1248 = vrot.slane %v228, 5
      %v1249 = vsel %vm1242, %v1247, %v1248
      %v1250 = vrot.slane %v229, 5
      %v1251 = vrot.slane %v1250, 4
      %v1252 = vrot.slane %v230, 5
      %v1253 = vsel %vm1242, %v1251, %v1252
      %v1254 = vrot.slane %v1252, 4
      %v1255 = vrot.slane %v231, 5
      %v1256 = vsel %vm1242, %v1254, %v1255
      %v1257 = vrot.slane %v232, 5
      %v1258 = vrot.slane %v1257, 4
      %v1259 = vrot.slane %v233, 5
      %v1260 = vsel %vm1242, %v1258, %v1259
      %v1261 = vrot.slane %v1259, 4
      %v1262 = vrot.slane %v234, 5
      %v1263 = vsel %vm1242, %v1261, %v1262
      %v1264 = vrot.slane %v235, 5
      %v1265 = vrot.slane %v1264, 4
      %v1266 = vrot.slane %v236, 5
      %v1267 = vsel %vm1242, %v1265, %v1266
      %v1268 = vrot.slane %v1266, 4
      %v1269 = vrot.slane %v237, 5
      %v1270 = vsel %vm1242, %v1268, %v1269
      %v1271 = vrot.slane %v238, 5
      %v1272 = vrot.slane %v1271, 4
      %v1273 = vrot.slane %v239, 5
      %v1274 = vsel %vm1242, %v1272, %v1273
      %v1275 = vrot.slane %v1273, 4
      %v1276 = vrot.slane %v240, 5
      %v1277 = vsel %vm1242, %v1275, %v1276
      %v1278 = vrot.slane %v241, 5
      %v1279 = vrot.slane %v1278, 4
      %v1280 = vrot.slane %v242, 5
      %v1281 = vsel %vm1242, %v1279, %v1280
      %v1282 = vrot.slane %v1280, 4
      %v1283 = vrot.slane %v243, 5
      %v1284 = vsel %vm1242, %v1282, %v1283
      %v1285 = vrot.slane %v244, 5
      %v1286 = vrot.slane %v1285, 4
      %v1287 = vrot.slane %v245, 5
      %v1288 = vsel %vm1242, %v1286, %v1287
      %v1289 = vrot.slane %v1287, 4
      %v1290 = vrot.slane %v246, 5
      %v1291 = vsel %vm1242, %v1289, %v1290
      %v1292 = vrot.slane %v247, 5
      %v1293 = vrot.slane %v1292, 4
      %v1294 = vrot.slane %v248, 5
      %v1295 = vsel %vm1242, %v1293, %v1294
      %v1296 = vrot.slane %v1294, 4
      %v1297 = vrot.slane %v249, 5
      %v1298 = vsel %vm1242, %v1296, %v1297
      %v1299 = vrot.slane %v250, 5
      %v1300 = vrot.slane %v1299, 4
      %v1301 = vrot.slane %v251, 5
      %v1302 = vsel %vm1242, %v1300, %v1301
      %v1303 = vrot.slane %v1301, 4
      %v1304 = vrot.slane %v252, 5
      %v1305 = vsel %vm1242, %v1303, %v1304
      %v1306 = vrot.slane %v253, 5
      %v1307 = vrot.slane %v1306, 4
      %v1308 = vrot.slane %v254, 5
      %v1309 = vsel %vm1242, %v1307, %v1308
      %v1310 = vrot.slane %v1308, 4
      %v1311 = vrot.slane %v255, 5
      %v1312 = vsel %vm1242, %v1310, %v1311
      %v1313 = vrot.slane %v256, 5
      %v1314 = vrot.slane %v1313, 4
      %v1315 = vrot.slane %v257, 5
      %v1316 = vsel %vm1242, %v1314, %v1315
      %v1317 = vrot.slane %v1315, 4
      %v1318 = vrot.slane %v258, 5
      %v1319 = vsel %vm1242, %v1317, %v1318
      %v1320 = vrot.slane %v259, 5
      %v1321 = vrot.slane %v1320, 4
      %v1322 = vrot.slane %v260, 5
      %v1323 = vsel %vm1242, %v1321, %v1322
      %v1324 = vrot.slane %v1322, 4
      %v1325 = vrot.slane %v261, 5
      %v1326 = vsel %vm1242, %v1324, %v1325
      %v1327 = vrot.slane %v262, 5
      %v1328 = vrot.slane %v1327, 4
      %v1329 = vrot.slane %v263, 5
      %v1330 = vsel %vm1242, %v1328, %v1329
      %v1331 = vrot.slane %v1329, 4
      %v1332 = vrot.slane %v264, 5
      %v1333 = vsel %vm1242, %v1331, %v1332
      %v1334 = vrot.slane %v265, 5
      %v1335 = vrot.slane %v1334, 4
      %v1336 = vrot.slane %v266, 5
      %v1337 = vsel %vm1242, %v1335, %v1336
      %v1338 = vrot.slane %v1336, 4
      %v1339 = vrot.slane %v267, 5
      %v1340 = vsel %vm1242, %v1338, %v1339
      %v1341 = vrot.slane %v268, 5
      %v1342 = vrot.slane %v1341, 4
      %v1343 = vrot.slane %v269, 5
      %v1344 = vsel %vm1242, %v1342, %v1343
      %v1345 = vrot.slane %v1343, 4
      %v1346 = vrot.slane %v270, 5
      %v1347 = vsel %vm1242, %v1345, %v1346
      %v1348 = vrot.slane %v271, 5
      %v1349 = vrot.slane %v1348, 4
      %v1350 = vrot.slane %v272, 5
      %v1351 = vsel %vm1242, %v1349, %v1350
      %v1352 = vrot.slane %v1350, 4
      %v1353 = vrot.slane %v273, 5
      %v1354 = vsel %vm1242, %v1352, %v1353
      %s1355 = scalar_lea.vmem %s1, 4
      %v1356 = vld [vmem:[%s1355] sm:$0x3]
      %v1357 = vunpack.c.l.b16 %v1246
      %v1358 = vunpack.c.l.b16 %v1249
      %v1359 = vunpack.c.l.b16 %v1253
      %v1360 = vunpack.c.l.b16 %v1256
      %v1361 = vunpack.c.l.b16 %v1260
      %v1362 = vunpack.c.l.b16 %v1263
      %v1363 = vunpack.c.l.b16 %v1267
      %v1364 = vunpack.c.l.b16 %v1270
      %v1365 = vunpack.c.l.b16 %v1274
      %v1366 = vunpack.c.l.b16 %v1277
      %v1367 = vunpack.c.l.b16 %v1281
      %v1368 = vunpack.c.l.b16 %v1284
      %v1369 = vunpack.c.l.b16 %v1288
      %v1370 = vunpack.c.l.b16 %v1291
      %v1371 = vunpack.c.l.b16 %v1295
      %v1372 = vunpack.c.l.b16 %v1298
      %v1373 = vunpack.c.l.b16 %v1302
      %v1374 = vunpack.c.l.b16 %v1305
      %v1375 = vunpack.c.l.b16 %v1309
      %v1376 = vunpack.c.l.b16 %v1312
      %v1377 = vunpack.c.l.b16 %v1316
      %v1378 = vunpack.c.l.b16 %v1319
      %v1379 = vunpack.c.l.b16 %v1323
      %v1380 = vunpack.c.l.b16 %v1326
      %v1381 = vunpack.c.l.b16 %v1330
      %v1382 = vunpack.c.l.b16 %v1333
      %v1383 = vunpack.c.l.b16 %v1337
      %v1384 = vunpack.c.l.b16 %v1340
      %v1385 = vunpack.c.l.b16 %v1344
      %v1386 = vunpack.c.l.b16 %v1347
      %v1387 = vunpack.c.l.b16 %v1351
      %v1388 = vunpack.c.l.b16 %v1354
      %v1389 = vpack.c.b16 %v1358, %v1357
      %v1390 = vpack.c.b16 %v1360, %v1359
      %v1391 = vpack.c.b16 %v1362, %v1361
      %v1392 = vpack.c.b16 %v1364, %v1363
      %v1393 = vpack.c.b16 %v1366, %v1365
      %v1394 = vpack.c.b16 %v1368, %v1367
      %v1395 = vpack.c.b16 %v1370, %v1369
      %v1396 = vpack.c.b16 %v1372, %v1371
      %v1397 = vpack.c.b16 %v1374, %v1373
      %v1398 = vpack.c.b16 %v1376, %v1375
      %v1399 = vpack.c.b16 %v1378, %v1377
      %v1400 = vpack.c.b16 %v1380, %v1379
      %v1401 = vpack.c.b16 %v1382, %v1381
      %v1402 = vpack.c.b16 %v1384, %v1383
      %v1403 = vpack.c.b16 %v1386, %v1385
      %v1404 = vpack.c.b16 %v1388, %v1387
      %v1406 = vsel %vm718, %v1389, 0
      %v1409 = vsel %vm718, %v1390, 0
      %v1412 = vsel %vm718, %v1391, 0
      %v1415 = vsel %vm718, %v1392, 0
      %v1418 = vsel %vm718, %v1393, 0
      %v1421 = vsel %vm718, %v1394, 0
      %v1424 = vsel %vm718, %v1395, 0
      %v1427 = vsel %vm718, %v1396, 0
      %v1430 = vsel %vm718, %v1397, 0
      %v1433 = vsel %vm718, %v1398, 0
      %v1436 = vsel %vm718, %v1399, 0
      %v1439 = vsel %vm718, %v1400, 0
      %v1442 = vsel %vm718, %v1401, 0
      %v1445 = vsel %vm718, %v1402, 0
      %v1448 = vsel %vm718, %v1403, 0
      %v1451 = vsel %vm718, %v1404, 0
      %v1454 = vsel %vm767, %v1356, 0
      %1456 = vmatprep.subr.bf16.mxu0 0
      %1457 = vmatpush1.bf16.msra.mxu0 0
      %1458 = vmatprep.subr.bf16.mxu0 0
      %1459 = vmatpush1.bf16.msra.mxu0 0
      %1460 = vmatprep.subr.bf16.mxu0 0
      %1461 = vmatpush1.bf16.msra.mxu0 0
      %1462 = vmatprep.subr.bf16.mxu0 0
      %1463 = vmatpush1.bf16.msra.mxu0 0
      %1464 = vmatprep.subr.bf16.mxu0 0
      %1465 = vmatpush1.bf16.msra.mxu0 0
      %1466 = vmatprep.subr.bf16.mxu0 0
      %1467 = vmatpush1.bf16.msra.mxu0 0
      %1468 = vmatprep.subr.bf16.mxu0 0
      %1469 = vmatpush1.bf16.msra.mxu0 0
      %1470 = vmatprep.subr.bf16.mxu0 0
      %1471 = vmatpush1.bf16.msra.mxu0 %v1454
      %1472 = vmatprep.subr.bf16.mxu0 0
      %1473 = vmatpush2.bf16.msra.mxu0 0
      %1474 = vmatprep.subr.bf16.mxu0 0
      %1475 = vmatpush2.bf16.msra.mxu0 0
      %1476 = vmatprep.subr.bf16.mxu0 0
      %1477 = vmatpush2.bf16.msra.mxu0 0
      %1478 = vmatprep.subr.bf16.mxu0 0
      %1479 = vmatpush2.bf16.msra.mxu0 0
      %1480 = vmatprep.subr.bf16.mxu0 0
      %1481 = vmatpush2.bf16.msra.mxu0 0
      %1482 = vmatprep.subr.bf16.mxu0 0
      %1483 = vmatpush2.bf16.msra.mxu0 0
      %1484 = vmatprep.subr.bf16.mxu0 0
      %1485 = vmatpush2.bf16.msra.mxu0 0
      %1486 = vmatprep.subr.bf16.mxu0 0
      %1487 = vmatpush2.bf16.msra.mxu0 0
      %1488 = vmatprep.mubr.bf16.mxu0 0
      %1489 = vmatmul.mubr.bf16.gmra.mxu0 %v1406
      %v1490 = vpop.f32.mrf.mxu0
      %v1491 = vadd.f32 0.0, %v1490
      %v1492 = vpop.f32.mrf.mxu0
      %v1493 = vpop.f32.mrf.mxu0
      %v1494 = vadd.f32 0.0, %v1493
      %v1495 = vpop.f32.mrf.mxu0
      %1496 = vmatprep.mubr.bf16.mxu0 0
      %1497 = vmatmul.mubr.bf16.gmra.mxu0 %v1409
      %v1498 = vpop.f32.mrf.mxu0
      %v1499 = vadd.f32 0.0, %v1498
      %v1500 = vpop.f32.mrf.mxu0
      %v1501 = vpop.f32.mrf.mxu0
      %v1502 = vadd.f32 0.0, %v1501
      %v1503 = vpop.f32.mrf.mxu0
      %1504 = vmatprep.mubr.bf16.mxu0 0
      %1505 = vmatmul.mubr.bf16.gmra.mxu0 %v1412
      %v1506 = vpop.f32.mrf.mxu0
      %v1507 = vadd.f32 0.0, %v1506
      %v1508 = vpop.f32.mrf.mxu0
      %v1509 = vpop.f32.mrf.mxu0
      %v1510 = vadd.f32 0.0, %v1509
      %v1511 = vpop.f32.mrf.mxu0
      %1512 = vmatprep.mubr.bf16.mxu0 0
      %1513 = vmatmul.mubr.bf16.gmra.mxu0 %v1415
      %v1514 = vpop.f32.mrf.mxu0
      %v1515 = vadd.f32 0.0, %v1514
      %v1516 = vpop.f32.mrf.mxu0
      %v1517 = vpop.f32.mrf.mxu0
      %v1518 = vadd.f32 0.0, %v1517
      %v1519 = vpop.f32.mrf.mxu0
      %1520 = vmatprep.mubr.bf16.mxu0 0
      %1521 = vmatmul.mubr.bf16.gmra.mxu0 %v1418
      %v1522 = vpop.f32.mrf.mxu0
      %v1523 = vadd.f32 0.0, %v1522
      %v1524 = vpop.f32.mrf.mxu0
      %v1525 = vpop.f32.mrf.mxu0
      %v1526 = vadd.f32 0.0, %v1525
      %v1527 = vpop.f32.mrf.mxu0
      %1528 = vmatprep.mubr.bf16.mxu0 0
      %1529 = vmatmul.mubr.bf16.gmra.mxu0 %v1421
      %v1530 = vpop.f32.mrf.mxu0
      %v1531 = vadd.f32 0.0, %v1530
      %v1532 = vpop.f32.mrf.mxu0
      %v1533 = vpop.f32.mrf.mxu0
      %v1534 = vadd.f32 0.0, %v1533
      %v1535 = vpop.f32.mrf.mxu0
      %1536 = vmatprep.mubr.bf16.mxu0 0
      %1537 = vmatmul.mubr.bf16.gmra.mxu0 %v1424
      %v1538 = vpop.f32.mrf.mxu0
      %v1539 = vadd.f32 0.0, %v1538
      %v1540 = vpop.f32.mrf.mxu0
      %v1541 = vpop.f32.mrf.mxu0
      %v1542 = vadd.f32 0.0, %v1541
      %v1543 = vpop.f32.mrf.mxu0
      %1544 = vmatprep.mubr.bf16.mxu0 0
      %1545 = vmatmul.mubr.bf16.gmra.mxu0 %v1427
      %v1546 = vpop.f32.mrf.mxu0
      %v1547 = vadd.f32 0.0, %v1546
      %v1548 = vpop.f32.mrf.mxu0
      %v1549 = vpop.f32.mrf.mxu0
      %v1550 = vadd.f32 0.0, %v1549
      %v1551 = vpop.f32.mrf.mxu0
      %1552 = vmatprep.mubr.bf16.mxu0 0
      %1553 = vmatmul.mubr.bf16.gmra.mxu0 %v1430
      %v1554 = vpop.f32.mrf.mxu0
      %v1555 = vadd.f32 0.0, %v1554
      %v1556 = vpop.f32.mrf.mxu0
      %v1557 = vpop.f32.mrf.mxu0
      %v1558 = vadd.f32 0.0, %v1557
      %v1559 = vpop.f32.mrf.mxu0
      %1560 = vmatprep.mubr.bf16.mxu0 0
      %1561 = vmatmul.mubr.bf16.gmra.mxu0 %v1433
      %v1562 = vpop.f32.mrf.mxu0
      %v1563 = vadd.f32 0.0, %v1562
      %v1564 = vpop.f32.mrf.mxu0
      %v1565 = vpop.f32.mrf.mxu0
      %v1566 = vadd.f32 0.0, %v1565
      %v1567 = vpop.f32.mrf.mxu0
      %1568 = vmatprep.mubr.bf16.mxu0 0
      %1569 = vmatmul.mubr.bf16.gmra.mxu0 %v1436
      %v1570 = vpop.f32.mrf.mxu0
      %v1571 = vadd.f32 0.0, %v1570
      %v1572 = vpop.f32.mrf.mxu0
      %v1573 = vpop.f32.mrf.mxu0
      %v1574 = vadd.f32 0.0, %v1573
      %v1575 = vpop.f32.mrf.mxu0
      %1576 = vmatprep.mubr.bf16.mxu0 0
      %1577 = vmatmul.mubr.bf16.gmra.mxu0 %v1439
      %v1578 = vpop.f32.mrf.mxu0
      %v1579 = vadd.f32 0.0, %v1578
      %v1580 = vpop.f32.mrf.mxu0
      %v1581 = vpop.f32.mrf.mxu0
      %v1582 = vadd.f32 0.0, %v1581
      %v1583 = vpop.f32.mrf.mxu0
      %1584 = vmatprep.mubr.bf16.mxu0 0
      %1585 = vmatmul.mubr.bf16.gmra.mxu0 %v1442
      %v1586 = vpop.f32.mrf.mxu0
      %v1587 = vadd.f32 0.0, %v1586
      %v1588 = vpop.f32.mrf.mxu0
      %v1589 = vpop.f32.mrf.mxu0
      %v1590 = vadd.f32 0.0, %v1589
      %v1591 = vpop.f32.mrf.mxu0
      %1592 = vmatprep.mubr.bf16.mxu0 0
      %1593 = vmatmul.mubr.bf16.gmra.mxu0 %v1445
      %v1594 = vpop.f32.mrf.mxu0
      %v1595 = vadd.f32 0.0, %v1594
      %v1596 = vpop.f32.mrf.mxu0
      %v1597 = vpop.f32.mrf.mxu0
      %v1598 = vadd.f32 0.0, %v1597
      %v1599 = vpop.f32.mrf.mxu0
      %1600 = vmatprep.mubr.bf16.mxu0 0
      %1601 = vmatmul.mubr.bf16.gmra.mxu0 %v1448
      %v1602 = vpop.f32.mrf.mxu0
      %v1603 = vadd.f32 0.0, %v1602
      %v1604 = vpop.f32.mrf.mxu0
      %v1605 = vpop.f32.mrf.mxu0
      %v1606 = vadd.f32 0.0, %v1605
      %v1607 = vpop.f32.mrf.mxu0
      %1608 = vmatprep.mubr.bf16.mxu0 0
      %1609 = vmatmul.mubr.bf16.gmra.mxu0 %v1451
      %v1610 = vpop.f32.mrf.mxu0
      %v1611 = vadd.f32 0.0, %v1610
      %v1612 = vpop.f32.mrf.mxu0
      %v1613 = vpop.f32.mrf.mxu0
      %v1614 = vadd.f32 0.0, %v1613
      %v1615 = vpop.f32.mrf.mxu0
      %1616 = vdwg.mxu0
      %v1617 = vadd.f32 %v1098, %v1491
      %v1618 = vadd.f32 %v1101, %v1494
      %v1619 = vadd.f32 %v1106, %v1499
      %v1620 = vadd.f32 %v1109, %v1502
      %v1621 = vadd.f32 %v1114, %v1507
      %v1622 = vadd.f32 %v1117, %v1510
      %v1623 = vadd.f32 %v1122, %v1515
      %v1624 = vadd.f32 %v1125, %v1518
      %v1625 = vadd.f32 %v1130, %v1523
      %v1626 = vadd.f32 %v1133, %v1526
      %v1627 = vadd.f32 %v1138, %v1531
      %v1628 = vadd.f32 %v1141, %v1534
      %v1629 = vadd.f32 %v1146, %v1539
      %v1630 = vadd.f32 %v1149, %v1542
      %v1631 = vadd.f32 %v1154, %v1547
      %v1632 = vadd.f32 %v1157, %v1550
      %v1633 = vadd.f32 %v1162, %v1555
      %v1634 = vadd.f32 %v1165, %v1558
      %v1635 = vadd.f32 %v1170, %v1563
      %v1636 = vadd.f32 %v1173, %v1566
      %v1637 = vadd.f32 %v1178, %v1571
      %v1638 = vadd.f32 %v1181, %v1574
      %v1639 = vadd.f32 %v1186, %v1579
      %v1640 = vadd.f32 %v1189, %v1582
      %v1641 = vadd.f32 %v1194, %v1587
      %v1642 = vadd.f32 %v1197, %v1590
      %v1643 = vadd.f32 %v1202, %v1595
      %v1644 = vadd.f32 %v1205, %v1598
      %v1645 = vadd.f32 %v1210, %v1603
      %v1646 = vadd.f32 %v1213, %v1606
      %v1647 = vadd.f32 %v1218, %v1611
      %v1648 = vadd.f32 %v1221, %v1614
      %s1649 = scalar_lea.vmem %s1, 6
      %v1650 = vld [vmem:[%s1649] sm:$0x3]
      %v1653 = vunpack.c.l.b16 %v274
      %v1654 = vunpack.c.l.b16 %v275
      %v1655 = vpack.c.b16 %v1654, %v1653
      %v1657 = vsel %vm718, %v1655, 0
      %v1660 = vsel %vm767, %v1650, 0
      %1662 = vmatprep.subr.bf16.mxu0 0
      %1663 = vmatpush1.bf16.msra.mxu0 0
      %1664 = vmatprep.subr.bf16.mxu0 0
      %1665 = vmatpush1.bf16.msra.mxu0 0
      %1666 = vmatprep.subr.bf16.mxu0 0
      %1667 = vmatpush1.bf16.msra.mxu0 0
      %1668 = vmatprep.subr.bf16.mxu0 0
      %1669 = vmatpush1.bf16.msra.mxu0 0
      %1670 = vmatprep.subr.bf16.mxu0 0
      %1671 = vmatpush1.bf16.msra.mxu0 0
      %1672 = vmatprep.subr.bf16.mxu0 0
      %1673 = vmatpush1.bf16.msra.mxu0 0
      %1674 = vmatprep.subr.bf16.mxu0 0
      %1675 = vmatpush1.bf16.msra.mxu0 0
      %1676 = vmatprep.subr.bf16.mxu0 0
      %1677 = vmatpush1.bf16.msra.mxu0 %v1660
      %1678 = vmatprep.subr.bf16.mxu0 0
      %1679 = vmatpush2.bf16.msra.mxu0 0
      %1680 = vmatprep.subr.bf16.mxu0 0
      %1681 = vmatpush2.bf16.msra.mxu0 0
      %1682 = vmatprep.subr.bf16.mxu0 0
      %1683 = vmatpush2.bf16.msra.mxu0 0
      %1684 = vmatprep.subr.bf16.mxu0 0
      %1685 = vmatpush2.bf16.msra.mxu0 0
      %1686 = vmatprep.subr.bf16.mxu0 0
      %1687 = vmatpush2.bf16.msra.mxu0 0
      %1688 = vmatprep.subr.bf16.mxu0 0
      %1689 = vmatpush2.bf16.msra.mxu0 0
      %1690 = vmatprep.subr.bf16.mxu0 0
      %1691 = vmatpush2.bf16.msra.mxu0 0
      %1692 = vmatprep.subr.bf16.mxu0 0
      %1693 = vmatpush2.bf16.msra.mxu0 0
      %1694 = vmatprep.mubr.bf16.mxu0 0
      %1695 = vmatmul.mubr.bf16.gmra.mxu0 %v1016
      %v1696 = vpop.f32.mrf.mxu0
      %v1697 = vadd.f32 0.0, %v1696
      %v1698 = vpop.f32.mrf.mxu0
      %v1699 = vpop.f32.mrf.mxu0
      %v1700 = vadd.f32 0.0, %v1699
      %v1701 = vpop.f32.mrf.mxu0
      %1702 = vmatprep.mubr.bf16.mxu0 0
      %1703 = vmatmul.mubr.bf16.gmra.mxu0 %v1019
      %v1704 = vpop.f32.mrf.mxu0
      %v1705 = vadd.f32 0.0, %v1704
      %v1706 = vpop.f32.mrf.mxu0
      %v1707 = vpop.f32.mrf.mxu0
      %v1708 = vadd.f32 0.0, %v1707
      %v1709 = vpop.f32.mrf.mxu0
      %1710 = vmatprep.mubr.bf16.mxu0 0
      %1711 = vmatmul.mubr.bf16.gmra.mxu0 %v1022
      %v1712 = vpop.f32.mrf.mxu0
      %v1713 = vadd.f32 0.0, %v1712
      %v1714 = vpop.f32.mrf.mxu0
      %v1715 = vpop.f32.mrf.mxu0
      %v1716 = vadd.f32 0.0, %v1715
      %v1717 = vpop.f32.mrf.mxu0
      %1718 = vmatprep.mubr.bf16.mxu0 0
      %1719 = vmatmul.mubr.bf16.gmra.mxu0 %v1025
      %v1720 = vpop.f32.mrf.mxu0
      %v1721 = vadd.f32 0.0, %v1720
      %v1722 = vpop.f32.mrf.mxu0
      %v1723 = vpop.f32.mrf.mxu0
      %v1724 = vadd.f32 0.0, %v1723
      %v1725 = vpop.f32.mrf.mxu0
      %1726 = vmatprep.mubr.bf16.mxu0 0
      %1727 = vmatmul.mubr.bf16.gmra.mxu0 %v1028
      %v1728 = vpop.f32.mrf.mxu0
      %v1729 = vadd.f32 0.0, %v1728
      %v1730 = vpop.f32.mrf.mxu0
      %v1731 = vpop.f32.mrf.mxu0
      %v1732 = vadd.f32 0.0, %v1731
      %v1733 = vpop.f32.mrf.mxu0
      %1734 = vmatprep.mubr.bf16.mxu0 0
      %1735 = vmatmul.mubr.bf16.gmra.mxu0 %v1031
      %v1736 = vpop.f32.mrf.mxu0
      %v1737 = vadd.f32 0.0, %v1736
      %v1738 = vpop.f32.mrf.mxu0
      %v1739 = vpop.f32.mrf.mxu0
      %v1740 = vadd.f32 0.0, %v1739
      %v1741 = vpop.f32.mrf.mxu0
      %1742 = vmatprep.mubr.bf16.mxu0 0
      %1743 = vmatmul.mubr.bf16.gmra.mxu0 %v1034
      %v1744 = vpop.f32.mrf.mxu0
      %v1745 = vadd.f32 0.0, %v1744
      %v1746 = vpop.f32.mrf.mxu0
      %v1747 = vpop.f32.mrf.mxu0
      %v1748 = vadd.f32 0.0, %v1747
      %v1749 = vpop.f32.mrf.mxu0
      %1750 = vmatprep.mubr.bf16.mxu0 0
      %1751 = vmatmul.mubr.bf16.gmra.mxu0 %v1037
      %v1752 = vpop.f32.mrf.mxu0
      %v1753 = vadd.f32 0.0, %v1752
      %v1754 = vpop.f32.mrf.mxu0
      %v1755 = vpop.f32.mrf.mxu0
      %v1756 = vadd.f32 0.0, %v1755
      %v1757 = vpop.f32.mrf.mxu0
      %1758 = vmatprep.mubr.bf16.mxu0 0
      %1759 = vmatmul.mubr.bf16.gmra.mxu0 %v1040
      %v1760 = vpop.f32.mrf.mxu0
      %v1761 = vadd.f32 0.0, %v1760
      %v1762 = vpop.f32.mrf.mxu0
      %v1763 = vpop.f32.mrf.mxu0
      %v1764 = vadd.f32 0.0, %v1763
      %v1765 = vpop.f32.mrf.mxu0
      %1766 = vmatprep.mubr.bf16.mxu0 0
      %1767 = vmatmul.mubr.bf16.gmra.mxu0 %v1043
      %v1768 = vpop.f32.mrf.mxu0
      %v1769 = vadd.f32 0.0, %v1768
      %v1770 = vpop.f32.mrf.mxu0
      %v1771 = vpop.f32.mrf.mxu0
      %v1772 = vadd.f32 0.0, %v1771
      %v1773 = vpop.f32.mrf.mxu0
      %1774 = vmatprep.mubr.bf16.mxu0 0
      %1775 = vmatmul.mubr.bf16.gmra.mxu0 %v1046
      %v1776 = vpop.f32.mrf.mxu0
      %v1777 = vadd.f32 0.0, %v1776
      %v1778 = vpop.f32.mrf.mxu0
      %v1779 = vpop.f32.mrf.mxu0
      %v1780 = vadd.f32 0.0, %v1779
      %v1781 = vpop.f32.mrf.mxu0
      %1782 = vmatprep.mubr.bf16.mxu0 0
      %1783 = vmatmul.mubr.bf16.gmra.mxu0 %v1049
      %v1784 = vpop.f32.mrf.mxu0
      %v1785 = vadd.f32 0.0, %v1784
      %v1786 = vpop.f32.mrf.mxu0
      %v1787 = vpop.f32.mrf.mxu0
      %v1788 = vadd.f32 0.0, %v1787
      %v1789 = vpop.f32.mrf.mxu0
      %1790 = vmatprep.mubr.bf16.mxu0 0
      %1791 = vmatmul.mubr.bf16.gmra.mxu0 %v1052
      %v1792 = vpop.f32.mrf.mxu0
      %v1793 = vadd.f32 0.0, %v1792
      %v1794 = vpop.f32.mrf.mxu0
      %v1795 = vpop.f32.mrf.mxu0
      %v1796 = vadd.f32 0.0, %v1795
      %v1797 = vpop.f32.mrf.mxu0
      %1798 = vmatprep.mubr.bf16.mxu0 0
      %1799 = vmatmul.mubr.bf16.gmra.mxu0 %v1055
      %v1800 = vpop.f32.mrf.mxu0
      %v1801 = vadd.f32 0.0, %v1800
      %v1802 = vpop.f32.mrf.mxu0
      %v1803 = vpop.f32.mrf.mxu0
      %v1804 = vadd.f32 0.0, %v1803
      %v1805 = vpop.f32.mrf.mxu0
      %1806 = vmatprep.mubr.bf16.mxu0 0
      %1807 = vmatmul.mubr.bf16.gmra.mxu0 %v1058
      %v1808 = vpop.f32.mrf.mxu0
      %v1809 = vadd.f32 0.0, %v1808
      %v1810 = vpop.f32.mrf.mxu0
      %v1811 = vpop.f32.mrf.mxu0
      %v1812 = vadd.f32 0.0, %v1811
      %v1813 = vpop.f32.mrf.mxu0
      %1814 = vmatprep.mubr.bf16.mxu0 0
      %1815 = vmatmul.mubr.bf16.gmra.mxu0 %v1657
      %v1816 = vpop.f32.mrf.mxu0
      %v1817 = vadd.f32 0.0, %v1816
      %v1818 = vpop.f32.mrf.mxu0
      %v1819 = vpop.f32.mrf.mxu0
      %v1820 = vadd.f32 0.0, %v1819
      %v1821 = vpop.f32.mrf.mxu0
      %1822 = vdwg.mxu0
      %v1823 = vadd.f32 %v1617, %v1697
      %v1824 = vadd.f32 %v1618, %v1700
      %v1825 = vadd.f32 %v1619, %v1705
      %v1826 = vadd.f32 %v1620, %v1708
      %v1827 = vadd.f32 %v1621, %v1713
      %v1828 = vadd.f32 %v1622, %v1716
      %v1829 = vadd.f32 %v1623, %v1721
      %v1830 = vadd.f32 %v1624, %v1724
      %v1831 = vadd.f32 %v1625, %v1729
      %v1832 = vadd.f32 %v1626, %v1732
      %v1833 = vadd.f32 %v1627, %v1737
      %v1834 = vadd.f32 %v1628, %v1740
      %v1835 = vadd.f32 %v1629, %v1745
      %v1836 = vadd.f32 %v1630, %v1748
      %v1837 = vadd.f32 %v1631, %v1753
      %v1838 = vadd.f32 %v1632, %v1756
      %v1839 = vadd.f32 %v1633, %v1761
      %v1840 = vadd.f32 %v1634, %v1764
      %v1841 = vadd.f32 %v1635, %v1769
      %v1842 = vadd.f32 %v1636, %v1772
      %v1843 = vadd.f32 %v1637, %v1777
      %v1844 = vadd.f32 %v1638, %v1780
      %v1845 = vadd.f32 %v1639, %v1785
      %v1846 = vadd.f32 %v1640, %v1788
      %v1847 = vadd.f32 %v1641, %v1793
      %v1848 = vadd.f32 %v1642, %v1796
      %v1849 = vadd.f32 %v1643, %v1801
      %v1850 = vadd.f32 %v1644, %v1804
      %v1851 = vadd.f32 %v1645, %v1809
      %v1852 = vadd.f32 %v1646, %v1812
      %v1853 = vadd.f32 %v1647, %v1817
      %v1854 = vadd.f32 %v1648, %v1820
      %v1856 = vshrl.u32 %v274, 16
      %v1858 = vrot.slane %v1856, 4
      %v1859 = vshll.u32 %v274, 16
      %v1861 = vrot.slane %v1859, 5
      %v1862 = vor.u32 %v1858, %v1861
      %v1863 = vrot.slane %v1862, 4
      %v1865 = vshll.u32 %v275, 16
      %v1867 = vrot.slane %v1865, 5
      %v1868 = vsel %vm283, %v1863, %v1867
      %v1869 = vshrl.u32 %v275, 16
      %v1871 = vrot.slane %v1869, 4
      %v1872 = vor.u32 %v1871, %v1867
      %v1873 = vrot.slane %v1872, 4
      %v1875 = vshll.u32 %v276, 16
      %v1877 = vrot.slane %v1875, 5
      %v1878 = vsel %vm283, %v1873, %v1877
      %s1911 = scalar_lea.vmem %s1, 8
      %v1912 = vld [vmem:[%s1911] sm:$0x3]
      %v1913 = vunpack.c.l.b16 %v1868
      %v1914 = vunpack.c.l.b16 %v1878
      %v1915 = vpack.c.b16 %v1914, %v1913
      %v1917 = vsel %vm718, %v1915, 0
      %v1920 = vsel %vm767, %v1912, 0
      %1922 = vmatprep.subr.bf16.mxu0 0
      %1923 = vmatpush1.bf16.msra.mxu0 0
      %1924 = vmatprep.subr.bf16.mxu0 0
      %1925 = vmatpush1.bf16.msra.mxu0 0
      %1926 = vmatprep.subr.bf16.mxu0 0
      %1927 = vmatpush1.bf16.msra.mxu0 0
      %1928 = vmatprep.subr.bf16.mxu0 0
      %1929 = vmatpush1.bf16.msra.mxu0 0
      %1930 = vmatprep.subr.bf16.mxu0 0
      %1931 = vmatpush1.bf16.msra.mxu0 0
      %1932 = vmatprep.subr.bf16.mxu0 0
      %1933 = vmatpush1.bf16.msra.mxu0 0
      %1934 = vmatprep.subr.bf16.mxu0 0
      %1935 = vmatpush1.bf16.msra.mxu0 0
      %1936 = vmatprep.subr.bf16.mxu0 0
      %1937 = vmatpush1.bf16.msra.mxu0 %v1920
      %1938 = vmatprep.subr.bf16.mxu0 0
      %1939 = vmatpush2.bf16.msra.mxu0 0
      %1940 = vmatprep.subr.bf16.mxu0 0
      %1941 = vmatpush2.bf16.msra.mxu0 0
      %1942 = vmatprep.subr.bf16.mxu0 0
      %1943 = vmatpush2.bf16.msra.mxu0 0
      %1944 = vmatprep.subr.bf16.mxu0 0
      %1945 = vmatpush2.bf16.msra.mxu0 0
      %1946 = vmatprep.subr.bf16.mxu0 0
      %1947 = vmatpush2.bf16.msra.mxu0 0
      %1948 = vmatprep.subr.bf16.mxu0 0
      %1949 = vmatpush2.bf16.msra.mxu0 0
      %1950 = vmatprep.subr.bf16.mxu0 0
      %1951 = vmatpush2.bf16.msra.mxu0 0
      %1952 = vmatprep.subr.bf16.mxu0 0
      %1953 = vmatpush2.bf16.msra.mxu0 0
      %1954 = vmatprep.mubr.bf16.mxu0 0
      %1955 = vmatmul.mubr.bf16.gmra.mxu0 %v723
      %v1956 = vpop.f32.mrf.mxu0
      %v1957 = vadd.f32 0.0, %v1956
      %v1958 = vpop.f32.mrf.mxu0
      %v1959 = vpop.f32.mrf.mxu0
      %v1960 = vadd.f32 0.0, %v1959
      %v1961 = vpop.f32.mrf.mxu0
      %1962 = vmatprep.mubr.bf16.mxu0 0
      %1963 = vmatmul.mubr.bf16.gmra.mxu0 %v726
      %v1964 = vpop.f32.mrf.mxu0
      %v1965 = vadd.f32 0.0, %v1964
      %v1966 = vpop.f32.mrf.mxu0
      %v1967 = vpop.f32.mrf.mxu0
      %v1968 = vadd.f32 0.0, %v1967
      %v1969 = vpop.f32.mrf.mxu0
      %1970 = vmatprep.mubr.bf16.mxu0 0
      %1971 = vmatmul.mubr.bf16.gmra.mxu0 %v729
      %v1972 = vpop.f32.mrf.mxu0
      %v1973 = vadd.f32 0.0, %v1972
      %v1974 = vpop.f32.mrf.mxu0
      %v1975 = vpop.f32.mrf.mxu0
      %v1976 = vadd.f32 0.0, %v1975
      %v1977 = vpop.f32.mrf.mxu0
      %1978 = vmatprep.mubr.bf16.mxu0 0
      %1979 = vmatmul.mubr.bf16.gmra.mxu0 %v732
      %v1980 = vpop.f32.mrf.mxu0
      %v1981 = vadd.f32 0.0, %v1980
      %v1982 = vpop.f32.mrf.mxu0
      %v1983 = vpop.f32.mrf.mxu0
      %v1984 = vadd.f32 0.0, %v1983
      %v1985 = vpop.f32.mrf.mxu0
      %1986 = vmatprep.mubr.bf16.mxu0 0
      %1987 = vmatmul.mubr.bf16.gmra.mxu0 %v735
      %v1988 = vpop.f32.mrf.mxu0
      %v1989 = vadd.f32 0.0, %v1988
      %v1990 = vpop.f32.mrf.mxu0
      %v1991 = vpop.f32.mrf.mxu0
      %v1992 = vadd.f32 0.0, %v1991
      %v1993 = vpop.f32.mrf.mxu0
      %1994 = vmatprep.mubr.bf16.mxu0 0
      %1995 = vmatmul.mubr.bf16.gmra.mxu0 %v738
      %v1996 = vpop.f32.mrf.mxu0
      %v1997 = vadd.f32 0.0, %v1996
      %v1998 = vpop.f32.mrf.mxu0
      %v1999 = vpop.f32.mrf.mxu0
      %v2000 = vadd.f32 0.0, %v1999
      %v2001 = vpop.f32.mrf.mxu0
      %2002 = vmatprep.mubr.bf16.mxu0 0
      %2003 = vmatmul.mubr.bf16.gmra.mxu0 %v741
      %v2004 = vpop.f32.mrf.mxu0
      %v2005 = vadd.f32 0.0, %v2004
      %v2006 = vpop.f32.mrf.mxu0
      %v2007 = vpop.f32.mrf.mxu0
      %v2008 = vadd.f32 0.0, %v2007
      %v2009 = vpop.f32.mrf.mxu0
      %2010 = vmatprep.mubr.bf16.mxu0 0
      %2011 = vmatmul.mubr.bf16.gmra.mxu0 %v744
      %v2012 = vpop.f32.mrf.mxu0
      %v2013 = vadd.f32 0.0, %v2012
      %v2014 = vpop.f32.mrf.mxu0
      %v2015 = vpop.f32.mrf.mxu0
      %v2016 = vadd.f32 0.0, %v2015
      %v2017 = vpop.f32.mrf.mxu0
      %2018 = vmatprep.mubr.bf16.mxu0 0
      %2019 = vmatmul.mubr.bf16.gmra.mxu0 %v747
      %v2020 = vpop.f32.mrf.mxu0
      %v2021 = vadd.f32 0.0, %v2020
      %v2022 = vpop.f32.mrf.mxu0
      %v2023 = vpop.f32.mrf.mxu0
      %v2024 = vadd.f32 0.0, %v2023
      %v2025 = vpop.f32.mrf.mxu0
      %2026 = vmatprep.mubr.bf16.mxu0 0
      %2027 = vmatmul.mubr.bf16.gmra.mxu0 %v750
      %v2028 = vpop.f32.mrf.mxu0
      %v2029 = vadd.f32 0.0, %v2028
      %v2030 = vpop.f32.mrf.mxu0
      %v2031 = vpop.f32.mrf.mxu0
      %v2032 = vadd.f32 0.0, %v2031
      %v2033 = vpop.f32.mrf.mxu0
      %2034 = vmatprep.mubr.bf16.mxu0 0
      %2035 = vmatmul.mubr.bf16.gmra.mxu0 %v753
      %v2036 = vpop.f32.mrf.mxu0
      %v2037 = vadd.f32 0.0, %v2036
      %v2038 = vpop.f32.mrf.mxu0
      %v2039 = vpop.f32.mrf.mxu0
      %v2040 = vadd.f32 0.0, %v2039
      %v2041 = vpop.f32.mrf.mxu0
      %2042 = vmatprep.mubr.bf16.mxu0 0
      %2043 = vmatmul.mubr.bf16.gmra.mxu0 %v756
      %v2044 = vpop.f32.mrf.mxu0
      %v2045 = vadd.f32 0.0, %v2044
      %v2046 = vpop.f32.mrf.mxu0
      %v2047 = vpop.f32.mrf.mxu0
      %v2048 = vadd.f32 0.0, %v2047
      %v2049 = vpop.f32.mrf.mxu0
      %2050 = vmatprep.mubr.bf16.mxu0 0
      %2051 = vmatmul.mubr.bf16.gmra.mxu0 %v759
      %v2052 = vpop.f32.mrf.mxu0
      %v2053 = vadd.f32 0.0, %v2052
      %v2054 = vpop.f32.mrf.mxu0
      %v2055 = vpop.f32.mrf.mxu0
      %v2056 = vadd.f32 0.0, %v2055
      %v2057 = vpop.f32.mrf.mxu0
      %2058 = vmatprep.mubr.bf16.mxu0 0
      %2059 = vmatmul.mubr.bf16.gmra.mxu0 %v762
      %v2060 = vpop.f32.mrf.mxu0
      %v2061 = vadd.f32 0.0, %v2060
      %v2062 = vpop.f32.mrf.mxu0
      %v2063 = vpop.f32.mrf.mxu0
      %v2064 = vadd.f32 0.0, %v2063
      %v2065 = vpop.f32.mrf.mxu0
      %2066 = vmatprep.mubr.bf16.mxu0 0
      %2067 = vmatmul.mubr.bf16.gmra.mxu0 %v765
      %v2068 = vpop.f32.mrf.mxu0
      %v2069 = vadd.f32 0.0, %v2068
      %v2070 = vpop.f32.mrf.mxu0
      %v2071 = vpop.f32.mrf.mxu0
      %v2072 = vadd.f32 0.0, %v2071
      %v2073 = vpop.f32.mrf.mxu0
      %2074 = vmatprep.mubr.bf16.mxu0 0
      %2075 = vmatmul.mubr.bf16.gmra.mxu0 %v1917
      %v2076 = vpop.f32.mrf.mxu0
      %v2077 = vadd.f32 0.0, %v2076
      %v2078 = vpop.f32.mrf.mxu0
      %v2079 = vpop.f32.mrf.mxu0
      %v2080 = vadd.f32 0.0, %v2079
      %v2081 = vpop.f32.mrf.mxu0
      %2082 = vdwg.mxu0
      %v2083 = vadd.f32 %v1823, %v1957
      %v2084 = vadd.f32 %v1824, %v1960
      %v2085 = vadd.f32 %v1825, %v1965
      %v2086 = vadd.f32 %v1826, %v1968
      %v2087 = vadd.f32 %v1827, %v1973
      %v2088 = vadd.f32 %v1828, %v1976
      %v2089 = vadd.f32 %v1829, %v1981
      %v2090 = vadd.f32 %v1830, %v1984
      %v2091 = vadd.f32 %v1831, %v1989
      %v2092 = vadd.f32 %v1832, %v1992
      %v2093 = vadd.f32 %v1833, %v1997
      %v2094 = vadd.f32 %v1834, %v2000
      %v2095 = vadd.f32 %v1835, %v2005
      %v2096 = vadd.f32 %v1836, %v2008
      %v2097 = vadd.f32 %v1837, %v2013
      %v2098 = vadd.f32 %v1838, %v2016
      %v2099 = vadd.f32 %v1839, %v2021
      %v2100 = vadd.f32 %v1840, %v2024
      %v2101 = vadd.f32 %v1841, %v2029
      %v2102 = vadd.f32 %v1842, %v2032
      %v2103 = vadd.f32 %v1843, %v2037
      %v2104 = vadd.f32 %v1844, %v2040
      %v2105 = vadd.f32 %v1845, %v2045
      %v2106 = vadd.f32 %v1846, %v2048
      %v2107 = vadd.f32 %v1847, %v2053
      %v2108 = vadd.f32 %v1848, %v2056
      %v2109 = vadd.f32 %v1849, %v2061
      %v2110 = vadd.f32 %v1850, %v2064
      %v2111 = vadd.f32 %v1851, %v2069
      %v2112 = vadd.f32 %v1852, %v2072
      %v2113 = vadd.f32 %v1853, %v2077
      %v2114 = vadd.f32 %v1854, %v2080
      %v2116 = vrot.slane %v274, 5
      %v2117 = vrot.slane %v2116, 4
      %v2118 = vrot.slane %v275, 5
      %v2119 = vsel %vm1242, %v2117, %v2118
      %v2120 = vrot.slane %v2118, 4
      %v2121 = vrot.slane %v276, 5
      %v2122 = vsel %vm1242, %v2120, %v2121
      %s2123 = scalar_lea.vmem %s1, 10
      %v2124 = vld [vmem:[%s2123] sm:$0x3]
      %v2125 = vunpack.c.l.b16 %v2119
      %v2126 = vunpack.c.l.b16 %v2122
      %v2127 = vpack.c.b16 %v2126, %v2125
      %v2129 = vsel %vm718, %v2127, 0
      %v2132 = vsel %vm767, %v2124, 0
      %2134 = vmatprep.subr.bf16.mxu0 0
      %2135 = vmatpush1.bf16.msra.mxu0 0
      %2136 = vmatprep.subr.bf16.mxu0 0
      %2137 = vmatpush1.bf16.msra.mxu0 0
      %2138 = vmatprep.subr.bf16.mxu0 0
      %2139 = vmatpush1.bf16.msra.mxu0 0
      %2140 = vmatprep.subr.bf16.mxu0 0
      %2141 = vmatpush1.bf16.msra.mxu0 0
      %2142 = vmatprep.subr.bf16.mxu0 0
      %2143 = vmatpush1.bf16.msra.mxu0 0
      %2144 = vmatprep.subr.bf16.mxu0 0
      %2145 = vmatpush1.bf16.msra.mxu0 0
      %2146 = vmatprep.subr.bf16.mxu0 0
      %2147 = vmatpush1.bf16.msra.mxu0 0
      %2148 = vmatprep.subr.bf16.mxu0 0
      %2149 = vmatpush1.bf16.msra.mxu0 %v2132
      %2150 = vmatprep.subr.bf16.mxu0 0
      %2151 = vmatpush2.bf16.msra.mxu0 0
      %2152 = vmatprep.subr.bf16.mxu0 0
      %2153 = vmatpush2.bf16.msra.mxu0 0
      %2154 = vmatprep.subr.bf16.mxu0 0
      %2155 = vmatpush2.bf16.msra.mxu0 0
      %2156 = vmatprep.subr.bf16.mxu0 0
      %2157 = vmatpush2.bf16.msra.mxu0 0
      %2158 = vmatprep.subr.bf16.mxu0 0
      %2159 = vmatpush2.bf16.msra.mxu0 0
      %2160 = vmatprep.subr.bf16.mxu0 0
      %2161 = vmatpush2.bf16.msra.mxu0 0
      %2162 = vmatprep.subr.bf16.mxu0 0
      %2163 = vmatpush2.bf16.msra.mxu0 0
      %2164 = vmatprep.subr.bf16.mxu0 0
      %2165 = vmatpush2.bf16.msra.mxu0 0
      %2166 = vmatprep.mubr.bf16.mxu0 0
      %2167 = vmatmul.mubr.bf16.gmra.mxu0 %v1409
      %v2168 = vpop.f32.mrf.mxu0
      %v2169 = vadd.f32 0.0, %v2168
      %v2170 = vpop.f32.mrf.mxu0
      %v2171 = vpop.f32.mrf.mxu0
      %v2172 = vadd.f32 0.0, %v2171
      %v2173 = vpop.f32.mrf.mxu0
      %2174 = vmatprep.mubr.bf16.mxu0 0
      %2175 = vmatmul.mubr.bf16.gmra.mxu0 %v1412
      %v2176 = vpop.f32.mrf.mxu0
      %v2177 = vadd.f32 0.0, %v2176
      %v2178 = vpop.f32.mrf.mxu0
      %v2179 = vpop.f32.mrf.mxu0
      %v2180 = vadd.f32 0.0, %v2179
      %v2181 = vpop.f32.mrf.mxu0
      %2182 = vmatprep.mubr.bf16.mxu0 0
      %2183 = vmatmul.mubr.bf16.gmra.mxu0 %v1415
      %v2184 = vpop.f32.mrf.mxu0
      %v2185 = vadd.f32 0.0, %v2184
      %v2186 = vpop.f32.mrf.mxu0
      %v2187 = vpop.f32.mrf.mxu0
      %v2188 = vadd.f32 0.0, %v2187
      %v2189 = vpop.f32.mrf.mxu0
      %2190 = vmatprep.mubr.bf16.mxu0 0
      %2191 = vmatmul.mubr.bf16.gmra.mxu0 %v1418
      %v2192 = vpop.f32.mrf.mxu0
      %v2193 = vadd.f32 0.0, %v2192
      %v2194 = vpop.f32.mrf.mxu0
      %v2195 = vpop.f32.mrf.mxu0
      %v2196 = vadd.f32 0.0, %v2195
      %v2197 = vpop.f32.mrf.mxu0
      %2198 = vmatprep.mubr.bf16.mxu0 0
      %2199 = vmatmul.mubr.bf16.gmra.mxu0 %v1421
      %v2200 = vpop.f32.mrf.mxu0
      %v2201 = vadd.f32 0.0, %v2200
      %v2202 = vpop.f32.mrf.mxu0
      %v2203 = vpop.f32.mrf.mxu0
      %v2204 = vadd.f32 0.0, %v2203
      %v2205 = vpop.f32.mrf.mxu0
      %2206 = vmatprep.mubr.bf16.mxu0 0
      %2207 = vmatmul.mubr.bf16.gmra.mxu0 %v1424
      %v2208 = vpop.f32.mrf.mxu0
      %v2209 = vadd.f32 0.0, %v2208
      %v2210 = vpop.f32.mrf.mxu0
      %v2211 = vpop.f32.mrf.mxu0
      %v2212 = vadd.f32 0.0, %v2211
      %v2213 = vpop.f32.mrf.mxu0
      %2214 = vmatprep.mubr.bf16.mxu0 0
      %2215 = vmatmul.mubr.bf16.gmra.mxu0 %v1427
      %v2216 = vpop.f32.mrf.mxu0
      %v2217 = vadd.f32 0.0, %v2216
      %v2218 = vpop.f32.mrf.mxu0
      %v2219 = vpop.f32.mrf.mxu0
      %v2220 = vadd.f32 0.0, %v2219
      %v2221 = vpop.f32.mrf.mxu0
      %2222 = vmatprep.mubr.bf16.mxu0 0
      %2223 = vmatmul.mubr.bf16.gmra.mxu0 %v1430
      %v2224 = vpop.f32.mrf.mxu0
      %v2225 = vadd.f32 0.0, %v2224
      %v2226 = vpop.f32.mrf.mxu0
      %v2227 = vpop.f32.mrf.mxu0
      %v2228 = vadd.f32 0.0, %v2227
      %v2229 = vpop.f32.mrf.mxu0
      %2230 = vmatprep.mubr.bf16.mxu0 0
      %2231 = vmatmul.mubr.bf16.gmra.mxu0 %v1433
      %v2232 = vpop.f32.mrf.mxu0
      %v2233 = vadd.f32 0.0, %v2232
      %v2234 = vpop.f32.mrf.mxu0
      %v2235 = vpop.f32.mrf.mxu0
      %v2236 = vadd.f32 0.0, %v2235
      %v2237 = vpop.f32.mrf.mxu0
      %2238 = vmatprep.mubr.bf16.mxu0 0
      %2239 = vmatmul.mubr.bf16.gmra.mxu0 %v1436
      %v2240 = vpop.f32.mrf.mxu0
      %v2241 = vadd.f32 0.0, %v2240
      %v2242 = vpop.f32.mrf.mxu0
      %v2243 = vpop.f32.mrf.mxu0
      %v2244 = vadd.f32 0.0, %v2243
      %v2245 = vpop.f32.mrf.mxu0
      %2246 = vmatprep.mubr.bf16.mxu0 0
      %2247 = vmatmul.mubr.bf16.gmra.mxu0 %v1439
      %v2248 = vpop.f32.mrf.mxu0
      %v2249 = vadd.f32 0.0, %v2248
      %v2250 = vpop.f32.mrf.mxu0
      %v2251 = vpop.f32.mrf.mxu0
      %v2252 = vadd.f32 0.0, %v2251
      %v2253 = vpop.f32.mrf.mxu0
      %2254 = vmatprep.mubr.bf16.mxu0 0
      %2255 = vmatmul.mubr.bf16.gmra.mxu0 %v1442
      %v2256 = vpop.f32.mrf.mxu0
      %v2257 = vadd.f32 0.0, %v2256
      %v2258 = vpop.f32.mrf.mxu0
      %v2259 = vpop.f32.mrf.mxu0
      %v2260 = vadd.f32 0.0, %v2259
      %v2261 = vpop.f32.mrf.mxu0
      %2262 = vmatprep.mubr.bf16.mxu0 0
      %2263 = vmatmul.mubr.bf16.gmra.mxu0 %v1445
      %v2264 = vpop.f32.mrf.mxu0
      %v2265 = vadd.f32 0.0, %v2264
      %v2266 = vpop.f32.mrf.mxu0
      %v2267 = vpop.f32.mrf.mxu0
      %v2268 = vadd.f32 0.0, %v2267
      %v2269 = vpop.f32.mrf.mxu0
      %2270 = vmatprep.mubr.bf16.mxu0 0
      %2271 = vmatmul.mubr.bf16.gmra.mxu0 %v1448
      %v2272 = vpop.f32.mrf.mxu0
      %v2273 = vadd.f32 0.0, %v2272
      %v2274 = vpop.f32.mrf.mxu0
      %v2275 = vpop.f32.mrf.mxu0
      %v2276 = vadd.f32 0.0, %v2275
      %v2277 = vpop.f32.mrf.mxu0
      %2278 = vmatprep.mubr.bf16.mxu0 0
      %2279 = vmatmul.mubr.bf16.gmra.mxu0 %v1451
      %v2280 = vpop.f32.mrf.mxu0
      %v2281 = vadd.f32 0.0, %v2280
      %v2282 = vpop.f32.mrf.mxu0
      %v2283 = vpop.f32.mrf.mxu0
      %v2284 = vadd.f32 0.0, %v2283
      %v2285 = vpop.f32.mrf.mxu0
      %2286 = vmatprep.mubr.bf16.mxu0 0
      %2287 = vmatmul.mubr.bf16.gmra.mxu0 %v2129
      %v2288 = vpop.f32.mrf.mxu0
      %v2289 = vadd.f32 0.0, %v2288
      %v2290 = vpop.f32.mrf.mxu0
      %v2291 = vpop.f32.mrf.mxu0
      %v2292 = vadd.f32 0.0, %v2291
      %v2293 = vpop.f32.mrf.mxu0
      %2294 = vdwg.mxu0
      %v2295 = vadd.f32 %v2083, %v2169
      %v2296 = vadd.f32 %v2084, %v2172
      %v2297 = vadd.f32 %v2085, %v2177
      %v2298 = vadd.f32 %v2086, %v2180
      %v2299 = vadd.f32 %v2087, %v2185
      %v2300 = vadd.f32 %v2088, %v2188
      %v2301 = vadd.f32 %v2089, %v2193
      %v2302 = vadd.f32 %v2090, %v2196
      %v2303 = vadd.f32 %v2091, %v2201
      %v2304 = vadd.f32 %v2092, %v2204
      %v2305 = vadd.f32 %v2093, %v2209
      %v2306 = vadd.f32 %v2094, %v2212
      %v2307 = vadd.f32 %v2095, %v2217
      %v2308 = vadd.f32 %v2096, %v2220
      %v2309 = vadd.f32 %v2097, %v2225
      %v2310 = vadd.f32 %v2098, %v2228
      %v2311 = vadd.f32 %v2099, %v2233
      %v2312 = vadd.f32 %v2100, %v2236
      %v2313 = vadd.f32 %v2101, %v2241
      %v2314 = vadd.f32 %v2102, %v2244
      %v2315 = vadd.f32 %v2103, %v2249
      %v2316 = vadd.f32 %v2104, %v2252
      %v2317 = vadd.f32 %v2105, %v2257
      %v2318 = vadd.f32 %v2106, %v2260
      %v2319 = vadd.f32 %v2107, %v2265
      %v2320 = vadd.f32 %v2108, %v2268
      %v2321 = vadd.f32 %v2109, %v2273
      %v2322 = vadd.f32 %v2110, %v2276
      %v2323 = vadd.f32 %v2111, %v2281
      %v2324 = vadd.f32 %v2112, %v2284
      %v2325 = vadd.f32 %v2113, %v2289
      %v2326 = vadd.f32 %v2114, %v2292
      %s2327 = scalar_lea.vmem %s1, 12
      %v2328 = vld [vmem:[%s2327] sm:$0x3]
      %v2331 = vunpack.c.l.b16 %v277
      %v2332 = vunpack.c.l.b16 %v278
      %v2333 = vpack.c.b16 %v2332, %v2331
      %v2335 = vsel %vm718, %v2333, 0
      %v2338 = vsel %vm767, %v2328, 0
      %2340 = vmatprep.subr.bf16.mxu0 0
      %2341 = vmatpush1.bf16.msra.mxu0 0
      %2342 = vmatprep.subr.bf16.mxu0 0
      %2343 = vmatpush1.bf16.msra.mxu0 0
      %2344 = vmatprep.subr.bf16.mxu0 0
      %2345 = vmatpush1.bf16.msra.mxu0 0
      %2346 = vmatprep.subr.bf16.mxu0 0
      %2347 = vmatpush1.bf16.msra.mxu0 0
      %2348 = vmatprep.subr.bf16.mxu0 0
      %2349 = vmatpush1.bf16.msra.mxu0 0
      %2350 = vmatprep.subr.bf16.mxu0 0
      %2351 = vmatpush1.bf16.msra.mxu0 0
      %2352 = vmatprep.subr.bf16.mxu0 0
      %2353 = vmatpush1.bf16.msra.mxu0 0
      %2354 = vmatprep.subr.bf16.mxu0 0
      %2355 = vmatpush1.bf16.msra.mxu0 %v2338
      %2356 = vmatprep.subr.bf16.mxu0 0
      %2357 = vmatpush2.bf16.msra.mxu0 0
      %2358 = vmatprep.subr.bf16.mxu0 0
      %2359 = vmatpush2.bf16.msra.mxu0 0
      %2360 = vmatprep.subr.bf16.mxu0 0
      %2361 = vmatpush2.bf16.msra.mxu0 0
      %2362 = vmatprep.subr.bf16.mxu0 0
      %2363 = vmatpush2.bf16.msra.mxu0 0
      %2364 = vmatprep.subr.bf16.mxu0 0
      %2365 = vmatpush2.bf16.msra.mxu0 0
      %2366 = vmatprep.subr.bf16.mxu0 0
      %2367 = vmatpush2.bf16.msra.mxu0 0
      %2368 = vmatprep.subr.bf16.mxu0 0
      %2369 = vmatpush2.bf16.msra.mxu0 0
      %2370 = vmatprep.subr.bf16.mxu0 0
      %2371 = vmatpush2.bf16.msra.mxu0 0
      %2372 = vmatprep.mubr.bf16.mxu0 0
      %2373 = vmatmul.mubr.bf16.gmra.mxu0 %v1019
      %v2374 = vpop.f32.mrf.mxu0
      %v2375 = vadd.f32 0.0, %v2374
      %v2376 = vpop.f32.mrf.mxu0
      %v2377 = vpop.f32.mrf.mxu0
      %v2378 = vadd.f32 0.0, %v2377
      %v2379 = vpop.f32.mrf.mxu0
      %2380 = vmatprep.mubr.bf16.mxu0 0
      %2381 = vmatmul.mubr.bf16.gmra.mxu0 %v1022
      %v2382 = vpop.f32.mrf.mxu0
      %v2383 = vadd.f32 0.0, %v2382
      %v2384 = vpop.f32.mrf.mxu0
      %v2385 = vpop.f32.mrf.mxu0
      %v2386 = vadd.f32 0.0, %v2385
      %v2387 = vpop.f32.mrf.mxu0
      %2388 = vmatprep.mubr.bf16.mxu0 0
      %2389 = vmatmul.mubr.bf16.gmra.mxu0 %v1025
      %v2390 = vpop.f32.mrf.mxu0
      %v2391 = vadd.f32 0.0, %v2390
      %v2392 = vpop.f32.mrf.mxu0
      %v2393 = vpop.f32.mrf.mxu0
      %v2394 = vadd.f32 0.0, %v2393
      %v2395 = vpop.f32.mrf.mxu0
      %2396 = vmatprep.mubr.bf16.mxu0 0
      %2397 = vmatmul.mubr.bf16.gmra.mxu0 %v1028
      %v2398 = vpop.f32.mrf.mxu0
      %v2399 = vadd.f32 0.0, %v2398
      %v2400 = vpop.f32.mrf.mxu0
      %v2401 = vpop.f32.mrf.mxu0
      %v2402 = vadd.f32 0.0, %v2401
      %v2403 = vpop.f32.mrf.mxu0
      %2404 = vmatprep.mubr.bf16.mxu0 0
      %2405 = vmatmul.mubr.bf16.gmra.mxu0 %v1031
      %v2406 = vpop.f32.mrf.mxu0
      %v2407 = vadd.f32 0.0, %v2406
      %v2408 = vpop.f32.mrf.mxu0
      %v2409 = vpop.f32.mrf.mxu0
      %v2410 = vadd.f32 0.0, %v2409
      %v2411 = vpop.f32.mrf.mxu0
      %2412 = vmatprep.mubr.bf16.mxu0 0
      %2413 = vmatmul.mubr.bf16.gmra.mxu0 %v1034
      %v2414 = vpop.f32.mrf.mxu0
      %v2415 = vadd.f32 0.0, %v2414
      %v2416 = vpop.f32.mrf.mxu0
      %v2417 = vpop.f32.mrf.mxu0
      %v2418 = vadd.f32 0.0, %v2417
      %v2419 = vpop.f32.mrf.mxu0
      %2420 = vmatprep.mubr.bf16.mxu0 0
      %2421 = vmatmul.mubr.bf16.gmra.mxu0 %v1037
      %v2422 = vpop.f32.mrf.mxu0
      %v2423 = vadd.f32 0.0, %v2422
      %v2424 = vpop.f32.mrf.mxu0
      %v2425 = vpop.f32.mrf.mxu0
      %v2426 = vadd.f32 0.0, %v2425
      %v2427 = vpop.f32.mrf.mxu0
      %2428 = vmatprep.mubr.bf16.mxu0 0
      %2429 = vmatmul.mubr.bf16.gmra.mxu0 %v1040
      %v2430 = vpop.f32.mrf.mxu0
      %v2431 = vadd.f32 0.0, %v2430
      %v2432 = vpop.f32.mrf.mxu0
      %v2433 = vpop.f32.mrf.mxu0
      %v2434 = vadd.f32 0.0, %v2433
      %v2435 = vpop.f32.mrf.mxu0
      %2436 = vmatprep.mubr.bf16.mxu0 0
      %2437 = vmatmul.mubr.bf16.gmra.mxu0 %v1043
      %v2438 = vpop.f32.mrf.mxu0
      %v2439 = vadd.f32 0.0, %v2438
      %v2440 = vpop.f32.mrf.mxu0
      %v2441 = vpop.f32.mrf.mxu0
      %v2442 = vadd.f32 0.0, %v2441
      %v2443 = vpop.f32.mrf.mxu0
      %2444 = vmatprep.mubr.bf16.mxu0 0
      %2445 = vmatmul.mubr.bf16.gmra.mxu0 %v1046
      %v2446 = vpop.f32.mrf.mxu0
      %v2447 = vadd.f32 0.0, %v2446
      %v2448 = vpop.f32.mrf.mxu0
      %v2449 = vpop.f32.mrf.mxu0
      %v2450 = vadd.f32 0.0, %v2449
      %v2451 = vpop.f32.mrf.mxu0
      %2452 = vmatprep.mubr.bf16.mxu0 0
      %2453 = vmatmul.mubr.bf16.gmra.mxu0 %v1049
      %v2454 = vpop.f32.mrf.mxu0
      %v2455 = vadd.f32 0.0, %v2454
      %v2456 = vpop.f32.mrf.mxu0
      %v2457 = vpop.f32.mrf.mxu0
      %v2458 = vadd.f32 0.0, %v2457
      %v2459 = vpop.f32.mrf.mxu0
      %2460 = vmatprep.mubr.bf16.mxu0 0
      %2461 = vmatmul.mubr.bf16.gmra.mxu0 %v1052
      %v2462 = vpop.f32.mrf.mxu0
      %v2463 = vadd.f32 0.0, %v2462
      %v2464 = vpop.f32.mrf.mxu0
      %v2465 = vpop.f32.mrf.mxu0
      %v2466 = vadd.f32 0.0, %v2465
      %v2467 = vpop.f32.mrf.mxu0
      %2468 = vmatprep.mubr.bf16.mxu0 0
      %2469 = vmatmul.mubr.bf16.gmra.mxu0 %v1055
      %v2470 = vpop.f32.mrf.mxu0
      %v2471 = vadd.f32 0.0, %v2470
      %v2472 = vpop.f32.mrf.mxu0
      %v2473 = vpop.f32.mrf.mxu0
      %v2474 = vadd.f32 0.0, %v2473
      %v2475 = vpop.f32.mrf.mxu0
      %2476 = vmatprep.mubr.bf16.mxu0 0
      %2477 = vmatmul.mubr.bf16.gmra.mxu0 %v1058
      %v2478 = vpop.f32.mrf.mxu0
      %v2479 = vadd.f32 0.0, %v2478
      %v2480 = vpop.f32.mrf.mxu0
      %v2481 = vpop.f32.mrf.mxu0
      %v2482 = vadd.f32 0.0, %v2481
      %v2483 = vpop.f32.mrf.mxu0
      %2484 = vmatprep.mubr.bf16.mxu0 0
      %2485 = vmatmul.mubr.bf16.gmra.mxu0 %v1657
      %v2486 = vpop.f32.mrf.mxu0
      %v2487 = vadd.f32 0.0, %v2486
      %v2488 = vpop.f32.mrf.mxu0
      %v2489 = vpop.f32.mrf.mxu0
      %v2490 = vadd.f32 0.0, %v2489
      %v2491 = vpop.f32.mrf.mxu0
      %2492 = vmatprep.mubr.bf16.mxu0 0
      %2493 = vmatmul.mubr.bf16.gmra.mxu0 %v2335
      %v2494 = vpop.f32.mrf.mxu0
      %v2495 = vadd.f32 0.0, %v2494
      %v2496 = vpop.f32.mrf.mxu0
      %v2497 = vpop.f32.mrf.mxu0
      %v2498 = vadd.f32 0.0, %v2497
      %v2499 = vpop.f32.mrf.mxu0
      %2500 = vdwg.mxu0
      %v2501 = vadd.f32 %v2295, %v2375
      %v2502 = vadd.f32 %v2296, %v2378
      %v2503 = vadd.f32 %v2297, %v2383
      %v2504 = vadd.f32 %v2298, %v2386
      %v2505 = vadd.f32 %v2299, %v2391
      %v2506 = vadd.f32 %v2300, %v2394
      %v2507 = vadd.f32 %v2301, %v2399
      %v2508 = vadd.f32 %v2302, %v2402
      %v2509 = vadd.f32 %v2303, %v2407
      %v2510 = vadd.f32 %v2304, %v2410
      %v2511 = vadd.f32 %v2305, %v2415
      %v2512 = vadd.f32 %v2306, %v2418
      %v2513 = vadd.f32 %v2307, %v2423
      %v2514 = vadd.f32 %v2308, %v2426
      %v2515 = vadd.f32 %v2309, %v2431
      %v2516 = vadd.f32 %v2310, %v2434
      %v2517 = vadd.f32 %v2311, %v2439
      %v2518 = vadd.f32 %v2312, %v2442
      %v2519 = vadd.f32 %v2313, %v2447
      %v2520 = vadd.f32 %v2314, %v2450
      %v2521 = vadd.f32 %v2315, %v2455
      %v2522 = vadd.f32 %v2316, %v2458
      %v2523 = vadd.f32 %v2317, %v2463
      %v2524 = vadd.f32 %v2318, %v2466
      %v2525 = vadd.f32 %v2319, %v2471
      %v2526 = vadd.f32 %v2320, %v2474
      %v2527 = vadd.f32 %v2321, %v2479
      %v2528 = vadd.f32 %v2322, %v2482
      %v2529 = vadd.f32 %v2323, %v2487
      %v2530 = vadd.f32 %v2324, %v2490
      %v2531 = vadd.f32 %v2325, %v2495
      %v2532 = vadd.f32 %v2326, %v2498
      %v2534 = vshrl.u32 %v277, 16
      %v2536 = vrot.slane %v2534, 4
      %v2537 = vshll.u32 %v277, 16
      %v2539 = vrot.slane %v2537, 5
      %v2540 = vor.u32 %v2536, %v2539
      %v2541 = vrot.slane %v2540, 4
      %v2543 = vshll.u32 %v278, 16
      %v2545 = vrot.slane %v2543, 5
      %v2546 = vsel %vm283, %v2541, %v2545
      %v2547 = vshrl.u32 %v278, 16
      %v2549 = vrot.slane %v2547, 4
      %v2550 = vor.u32 %v2549, %v2545
      %v2551 = vrot.slane %v2550, 4
      %v2553 = vshll.u32 %v279, 16
      %v2555 = vrot.slane %v2553, 5
      %v2556 = vsel %vm283, %v2551, %v2555
      %s2557 = scalar_lea.vmem %s1, 14
      %v2558 = vld [vmem:[%s2557] sm:$0x3]
      %v2559 = vunpack.c.l.b16 %v2546
      %v2560 = vunpack.c.l.b16 %v2556
      %v2561 = vpack.c.b16 %v2560, %v2559
      %v2563 = vsel %vm718, %v2561, 0
      %v2566 = vsel %vm767, %v2558, 0
      %2568 = vmatprep.subr.bf16.mxu0 0
      %2569 = vmatpush1.bf16.msra.mxu0 0
      %2570 = vmatprep.subr.bf16.mxu0 0
      %2571 = vmatpush1.bf16.msra.mxu0 0
      %2572 = vmatprep.subr.bf16.mxu0 0
      %2573 = vmatpush1.bf16.msra.mxu0 0
      %2574 = vmatprep.subr.bf16.mxu0 0
      %2575 = vmatpush1.bf16.msra.mxu0 0
      %2576 = vmatprep.subr.bf16.mxu0 0
      %2577 = vmatpush1.bf16.msra.mxu0 0
      %2578 = vmatprep.subr.bf16.mxu0 0
      %2579 = vmatpush1.bf16.msra.mxu0 0
      %2580 = vmatprep.subr.bf16.mxu0 0
      %2581 = vmatpush1.bf16.msra.mxu0 0
      %2582 = vmatprep.subr.bf16.mxu0 0
      %2583 = vmatpush1.bf16.msra.mxu0 %v2566
      %2584 = vmatprep.subr.bf16.mxu0 0
      %2585 = vmatpush2.bf16.msra.mxu0 0
      %2586 = vmatprep.subr.bf16.mxu0 0
      %2587 = vmatpush2.bf16.msra.mxu0 0
      %2588 = vmatprep.subr.bf16.mxu0 0
      %2589 = vmatpush2.bf16.msra.mxu0 0
      %2590 = vmatprep.subr.bf16.mxu0 0
      %2591 = vmatpush2.bf16.msra.mxu0 0
      %2592 = vmatprep.subr.bf16.mxu0 0
      %2593 = vmatpush2.bf16.msra.mxu0 0
      %2594 = vmatprep.subr.bf16.mxu0 0
      %2595 = vmatpush2.bf16.msra.mxu0 0
      %2596 = vmatprep.subr.bf16.mxu0 0
      %2597 = vmatpush2.bf16.msra.mxu0 0
      %2598 = vmatprep.subr.bf16.mxu0 0
      %2599 = vmatpush2.bf16.msra.mxu0 0
      %2600 = vmatprep.mubr.bf16.mxu0 0
      %2601 = vmatmul.mubr.bf16.gmra.mxu0 %v726
      %v2602 = vpop.f32.mrf.mxu0
      %v2603 = vadd.f32 0.0, %v2602
      %v2604 = vpop.f32.mrf.mxu0
      %v2605 = vpop.f32.mrf.mxu0
      %v2606 = vadd.f32 0.0, %v2605
      %v2607 = vpop.f32.mrf.mxu0
      %2608 = vmatprep.mubr.bf16.mxu0 0
      %2609 = vmatmul.mubr.bf16.gmra.mxu0 %v729
      %v2610 = vpop.f32.mrf.mxu0
      %v2611 = vadd.f32 0.0, %v2610
      %v2612 = vpop.f32.mrf.mxu0
      %v2613 = vpop.f32.mrf.mxu0
      %v2614 = vadd.f32 0.0, %v2613
      %v2615 = vpop.f32.mrf.mxu0
      %2616 = vmatprep.mubr.bf16.mxu0 0
      %2617 = vmatmul.mubr.bf16.gmra.mxu0 %v732
      %v2618 = vpop.f32.mrf.mxu0
      %v2619 = vadd.f32 0.0, %v2618
      %v2620 = vpop.f32.mrf.mxu0
      %v2621 = vpop.f32.mrf.mxu0
      %v2622 = vadd.f32 0.0, %v2621
      %v2623 = vpop.f32.mrf.mxu0
      %2624 = vmatprep.mubr.bf16.mxu0 0
      %2625 = vmatmul.mubr.bf16.gmra.mxu0 %v735
      %v2626 = vpop.f32.mrf.mxu0
      %v2627 = vadd.f32 0.0, %v2626
      %v2628 = vpop.f32.mrf.mxu0
      %v2629 = vpop.f32.mrf.mxu0
      %v2630 = vadd.f32 0.0, %v2629
      %v2631 = vpop.f32.mrf.mxu0
      %2632 = vmatprep.mubr.bf16.mxu0 0
      %2633 = vmatmul.mubr.bf16.gmra.mxu0 %v738
      %v2634 = vpop.f32.mrf.mxu0
      %v2635 = vadd.f32 0.0, %v2634
      %v2636 = vpop.f32.mrf.mxu0
      %v2637 = vpop.f32.mrf.mxu0
      %v2638 = vadd.f32 0.0, %v2637
      %v2639 = vpop.f32.mrf.mxu0
      %2640 = vmatprep.mubr.bf16.mxu0 0
      %2641 = vmatmul.mubr.bf16.gmra.mxu0 %v741
      %v2642 = vpop.f32.mrf.mxu0
      %v2643 = vadd.f32 0.0, %v2642
      %v2644 = vpop.f32.mrf.mxu0
      %v2645 = vpop.f32.mrf.mxu0
      %v2646 = vadd.f32 0.0, %v2645
      %v2647 = vpop.f32.mrf.mxu0
      %2648 = vmatprep.mubr.bf16.mxu0 0
      %2649 = vmatmul.mubr.bf16.gmra.mxu0 %v744
      %v2650 = vpop.f32.mrf.mxu0
      %v2651 = vadd.f32 0.0, %v2650
      %v2652 = vpop.f32.mrf.mxu0
      %v2653 = vpop.f32.mrf.mxu0
      %v2654 = vadd.f32 0.0, %v2653
      %v2655 = vpop.f32.mrf.mxu0
      %2656 = vmatprep.mubr.bf16.mxu0 0
      %2657 = vmatmul.mubr.bf16.gmra.mxu0 %v747
      %v2658 = vpop.f32.mrf.mxu0
      %v2659 = vadd.f32 0.0, %v2658
      %v2660 = vpop.f32.mrf.mxu0
      %v2661 = vpop.f32.mrf.mxu0
      %v2662 = vadd.f32 0.0, %v2661
      %v2663 = vpop.f32.mrf.mxu0
      %2664 = vmatprep.mubr.bf16.mxu0 0
      %2665 = vmatmul.mubr.bf16.gmra.mxu0 %v750
      %v2666 = vpop.f32.mrf.mxu0
      %v2667 = vadd.f32 0.0, %v2666
      %v2668 = vpop.f32.mrf.mxu0
      %v2669 = vpop.f32.mrf.mxu0
      %v2670 = vadd.f32 0.0, %v2669
      %v2671 = vpop.f32.mrf.mxu0
      %2672 = vmatprep.mubr.bf16.mxu0 0
      %2673 = vmatmul.mubr.bf16.gmra.mxu0 %v753
      %v2674 = vpop.f32.mrf.mxu0
      %v2675 = vadd.f32 0.0, %v2674
      %v2676 = vpop.f32.mrf.mxu0
      %v2677 = vpop.f32.mrf.mxu0
      %v2678 = vadd.f32 0.0, %v2677
      %v2679 = vpop.f32.mrf.mxu0
      %2680 = vmatprep.mubr.bf16.mxu0 0
      %2681 = vmatmul.mubr.bf16.gmra.mxu0 %v756
      %v2682 = vpop.f32.mrf.mxu0
      %v2683 = vadd.f32 0.0, %v2682
      %v2684 = vpop.f32.mrf.mxu0
      %v2685 = vpop.f32.mrf.mxu0
      %v2686 = vadd.f32 0.0, %v2685
      %v2687 = vpop.f32.mrf.mxu0
      %2688 = vmatprep.mubr.bf16.mxu0 0
      %2689 = vmatmul.mubr.bf16.gmra.mxu0 %v759
      %v2690 = vpop.f32.mrf.mxu0
      %v2691 = vadd.f32 0.0, %v2690
      %v2692 = vpop.f32.mrf.mxu0
      %v2693 = vpop.f32.mrf.mxu0
      %v2694 = vadd.f32 0.0, %v2693
      %v2695 = vpop.f32.mrf.mxu0
      %2696 = vmatprep.mubr.bf16.mxu0 0
      %2697 = vmatmul.mubr.bf16.gmra.mxu0 %v762
      %v2698 = vpop.f32.mrf.mxu0
      %v2699 = vadd.f32 0.0, %v2698
      %v2700 = vpop.f32.mrf.mxu0
      %v2701 = vpop.f32.mrf.mxu0
      %v2702 = vadd.f32 0.0, %v2701
      %v2703 = vpop.f32.mrf.mxu0
      %2704 = vmatprep.mubr.bf16.mxu0 0
      %2705 = vmatmul.mubr.bf16.gmra.mxu0 %v765
      %v2706 = vpop.f32.mrf.mxu0
      %v2707 = vadd.f32 0.0, %v2706
      %v2708 = vpop.f32.mrf.mxu0
      %v2709 = vpop.f32.mrf.mxu0
      %v2710 = vadd.f32 0.0, %v2709
      %v2711 = vpop.f32.mrf.mxu0
      %2712 = vmatprep.mubr.bf16.mxu0 0
      %2713 = vmatmul.mubr.bf16.gmra.mxu0 %v1917
      %v2714 = vpop.f32.mrf.mxu0
      %v2715 = vadd.f32 0.0, %v2714
      %v2716 = vpop.f32.mrf.mxu0
      %v2717 = vpop.f32.mrf.mxu0
      %v2718 = vadd.f32 0.0, %v2717
      %v2719 = vpop.f32.mrf.mxu0
      %2720 = vmatprep.mubr.bf16.mxu0 0
      %2721 = vmatmul.mubr.bf16.gmra.mxu0 %v2563
      %v2722 = vpop.f32.mrf.mxu0
      %v2723 = vadd.f32 0.0, %v2722
      %v2724 = vpop.f32.mrf.mxu0
      %v2725 = vpop.f32.mrf.mxu0
      %v2726 = vadd.f32 0.0, %v2725
      %v2727 = vpop.f32.mrf.mxu0
      %2728 = vdwg.mxu0
      %v2729 = vadd.f32 %v2501, %v2603
      %v2730 = vadd.f32 %v2502, %v2606
      %v2731 = vadd.f32 %v2503, %v2611
      %v2732 = vadd.f32 %v2504, %v2614
      %v2733 = vadd.f32 %v2505, %v2619
      %v2734 = vadd.f32 %v2506, %v2622
      %v2735 = vadd.f32 %v2507, %v2627
      %v2736 = vadd.f32 %v2508, %v2630
      %v2737 = vadd.f32 %v2509, %v2635
      %v2738 = vadd.f32 %v2510, %v2638
      %v2739 = vadd.f32 %v2511, %v2643
      %v2740 = vadd.f32 %v2512, %v2646
      %v2741 = vadd.f32 %v2513, %v2651
      %v2742 = vadd.f32 %v2514, %v2654
      %v2743 = vadd.f32 %v2515, %v2659
      %v2744 = vadd.f32 %v2516, %v2662
      %v2745 = vadd.f32 %v2517, %v2667
      %v2746 = vadd.f32 %v2518, %v2670
      %v2747 = vadd.f32 %v2519, %v2675
      %v2748 = vadd.f32 %v2520, %v2678
      %v2749 = vadd.f32 %v2521, %v2683
      %v2750 = vadd.f32 %v2522, %v2686
      %v2751 = vadd.f32 %v2523, %v2691
      %v2752 = vadd.f32 %v2524, %v2694
      %v2753 = vadd.f32 %v2525, %v2699
      %v2754 = vadd.f32 %v2526, %v2702
      %v2755 = vadd.f32 %v2527, %v2707
      %v2756 = vadd.f32 %v2528, %v2710
      %v2757 = vadd.f32 %v2529, %v2715
      %v2758 = vadd.f32 %v2530, %v2718
      %v2759 = vadd.f32 %v2531, %v2723
      %v2760 = vadd.f32 %v2532, %v2726
      %v2762 = vrot.slane %v277, 5
      %v2763 = vrot.slane %v2762, 4
      %v2764 = vrot.slane %v278, 5
      %v2765 = vsel %vm1242, %v2763, %v2764
      %v2766 = vrot.slane %v2764, 4
      %v2767 = vrot.slane %v279, 5
      %v2768 = vsel %vm1242, %v2766, %v2767
      %s2769 = scalar_lea.vmem %s1, 16
      %v2770 = vld [vmem:[%s2769] sm:$0x3]
      %v2771 = vunpack.c.l.b16 %v2765
      %v2772 = vunpack.c.l.b16 %v2768
      %v2773 = vpack.c.b16 %v2772, %v2771
      %v2775 = vsel %vm718, %v2773, 0
      %v2778 = vsel %vm767, %v2770, 0
      %2780 = vmatprep.subr.bf16.mxu0 0
      %2781 = vmatpush1.bf16.msra.mxu0 0
      %2782 = vmatprep.subr.bf16.mxu0 0
      %2783 = vmatpush1.bf16.msra.mxu0 0
      %2784 = vmatprep.subr.bf16.mxu0 0
      %2785 = vmatpush1.bf16.msra.mxu0 0
      %2786 = vmatprep.subr.bf16.mxu0 0
      %2787 = vmatpush1.bf16.msra.mxu0 0
      %2788 = vmatprep.subr.bf16.mxu0 0
      %2789 = vmatpush1.bf16.msra.mxu0 0
      %2790 = vmatprep.subr.bf16.mxu0 0
      %2791 = vmatpush1.bf16.msra.mxu0 0
      %2792 = vmatprep.subr.bf16.mxu0 0
      %2793 = vmatpush1.bf16.msra.mxu0 0
      %2794 = vmatprep.subr.bf16.mxu0 0
      %2795 = vmatpush1.bf16.msra.mxu0 %v2778
      %2796 = vmatprep.subr.bf16.mxu0 0
      %2797 = vmatpush2.bf16.msra.mxu0 0
      %2798 = vmatprep.subr.bf16.mxu0 0
      %2799 = vmatpush2.bf16.msra.mxu0 0
      %2800 = vmatprep.subr.bf16.mxu0 0
      %2801 = vmatpush2.bf16.msra.mxu0 0
      %2802 = vmatprep.subr.bf16.mxu0 0
      %2803 = vmatpush2.bf16.msra.mxu0 0
      %2804 = vmatprep.subr.bf16.mxu0 0
      %2805 = vmatpush2.bf16.msra.mxu0 0
      %2806 = vmatprep.subr.bf16.mxu0 0
      %2807 = vmatpush2.bf16.msra.mxu0 0
      %2808 = vmatprep.subr.bf16.mxu0 0
      %2809 = vmatpush2.bf16.msra.mxu0 0
      %2810 = vmatprep.subr.bf16.mxu0 0
      %2811 = vmatpush2.bf16.msra.mxu0 0
      %2812 = vmatprep.mubr.bf16.mxu0 0
      %2813 = vmatmul.mubr.bf16.gmra.mxu0 %v1412
      %v2814 = vpop.f32.mrf.mxu0
      %v2815 = vadd.f32 0.0, %v2814
      %v2816 = vpop.f32.mrf.mxu0
      %v2817 = vpop.f32.mrf.mxu0
      %v2818 = vadd.f32 0.0, %v2817
      %v2819 = vpop.f32.mrf.mxu0
      %2820 = vmatprep.mubr.bf16.mxu0 0
      %2821 = vmatmul.mubr.bf16.gmra.mxu0 %v1415
      %v2822 = vpop.f32.mrf.mxu0
      %v2823 = vadd.f32 0.0, %v2822
      %v2824 = vpop.f32.mrf.mxu0
      %v2825 = vpop.f32.mrf.mxu0
      %v2826 = vadd.f32 0.0, %v2825
      %v2827 = vpop.f32.mrf.mxu0
      %2828 = vmatprep.mubr.bf16.mxu0 0
      %2829 = vmatmul.mubr.bf16.gmra.mxu0 %v1418
      %v2830 = vpop.f32.mrf.mxu0
      %v2831 = vadd.f32 0.0, %v2830
      %v2832 = vpop.f32.mrf.mxu0
      %v2833 = vpop.f32.mrf.mxu0
      %v2834 = vadd.f32 0.0, %v2833
      %v2835 = vpop.f32.mrf.mxu0
      %2836 = vmatprep.mubr.bf16.mxu0 0
      %2837 = vmatmul.mubr.bf16.gmra.mxu0 %v1421
      %v2838 = vpop.f32.mrf.mxu0
      %v2839 = vadd.f32 0.0, %v2838
      %v2840 = vpop.f32.mrf.mxu0
      %v2841 = vpop.f32.mrf.mxu0
      %v2842 = vadd.f32 0.0, %v2841
      %v2843 = vpop.f32.mrf.mxu0
      %2844 = vmatprep.mubr.bf16.mxu0 0
      %2845 = vmatmul.mubr.bf16.gmra.mxu0 %v1424
      %v2846 = vpop.f32.mrf.mxu0
      %v2847 = vadd.f32 0.0, %v2846
      %v2848 = vpop.f32.mrf.mxu0
      %v2849 = vpop.f32.mrf.mxu0
      %v2850 = vadd.f32 0.0, %v2849
      %v2851 = vpop.f32.mrf.mxu0
      %2852 = vmatprep.mubr.bf16.mxu0 0
      %2853 = vmatmul.mubr.bf16.gmra.mxu0 %v1427
      %v2854 = vpop.f32.mrf.mxu0
      %v2855 = vadd.f32 0.0, %v2854
      %v2856 = vpop.f32.mrf.mxu0
      %v2857 = vpop.f32.mrf.mxu0
      %v2858 = vadd.f32 0.0, %v2857
      %v2859 = vpop.f32.mrf.mxu0
      %2860 = vmatprep.mubr.bf16.mxu0 0
      %2861 = vmatmul.mubr.bf16.gmra.mxu0 %v1430
      %v2862 = vpop.f32.mrf.mxu0
      %v2863 = vadd.f32 0.0, %v2862
      %v2864 = vpop.f32.mrf.mxu0
      %v2865 = vpop.f32.mrf.mxu0
      %v2866 = vadd.f32 0.0, %v2865
      %v2867 = vpop.f32.mrf.mxu0
      %2868 = vmatprep.mubr.bf16.mxu0 0
      %2869 = vmatmul.mubr.bf16.gmra.mxu0 %v1433
      %v2870 = vpop.f32.mrf.mxu0
      %v2871 = vadd.f32 0.0, %v2870
      %v2872 = vpop.f32.mrf.mxu0
      %v2873 = vpop.f32.mrf.mxu0
      %v2874 = vadd.f32 0.0, %v2873
      %v2875 = vpop.f32.mrf.mxu0
      %2876 = vmatprep.mubr.bf16.mxu0 0
      %2877 = vmatmul.mubr.bf16.gmra.mxu0 %v1436
      %v2878 = vpop.f32.mrf.mxu0
      %v2879 = vadd.f32 0.0, %v2878
      %v2880 = vpop.f32.mrf.mxu0
      %v2881 = vpop.f32.mrf.mxu0
      %v2882 = vadd.f32 0.0, %v2881
      %v2883 = vpop.f32.mrf.mxu0
      %2884 = vmatprep.mubr.bf16.mxu0 0
      %2885 = vmatmul.mubr.bf16.gmra.mxu0 %v1439
      %v2886 = vpop.f32.mrf.mxu0
      %v2887 = vadd.f32 0.0, %v2886
      %v2888 = vpop.f32.mrf.mxu0
      %v2889 = vpop.f32.mrf.mxu0
      %v2890 = vadd.f32 0.0, %v2889
      %v2891 = vpop.f32.mrf.mxu0
      %2892 = vmatprep.mubr.bf16.mxu0 0
      %2893 = vmatmul.mubr.bf16.gmra.mxu0 %v1442
      %v2894 = vpop.f32.mrf.mxu0
      %v2895 = vadd.f32 0.0, %v2894
      %v2896 = vpop.f32.mrf.mxu0
      %v2897 = vpop.f32.mrf.mxu0
      %v2898 = vadd.f32 0.0, %v2897
      %v2899 = vpop.f32.mrf.mxu0
      %2900 = vmatprep.mubr.bf16.mxu0 0
      %2901 = vmatmul.mubr.bf16.gmra.mxu0 %v1445
      %v2902 = vpop.f32.mrf.mxu0
      %v2903 = vadd.f32 0.0, %v2902
      %v2904 = vpop.f32.mrf.mxu0
      %v2905 = vpop.f32.mrf.mxu0
      %v2906 = vadd.f32 0.0, %v2905
      %v2907 = vpop.f32.mrf.mxu0
      %2908 = vmatprep.mubr.bf16.mxu0 0
      %2909 = vmatmul.mubr.bf16.gmra.mxu0 %v1448
      %v2910 = vpop.f32.mrf.mxu0
      %v2911 = vadd.f32 0.0, %v2910
      %v2912 = vpop.f32.mrf.mxu0
      %v2913 = vpop.f32.mrf.mxu0
      %v2914 = vadd.f32 0.0, %v2913
      %v2915 = vpop.f32.mrf.mxu0
      %2916 = vmatprep.mubr.bf16.mxu0 0
      %2917 = vmatmul.mubr.bf16.gmra.mxu0 %v1451
      %v2918 = vpop.f32.mrf.mxu0
      %v2919 = vadd.f32 0.0, %v2918
      %v2920 = vpop.f32.mrf.mxu0
      %v2921 = vpop.f32.mrf.mxu0
      %v2922 = vadd.f32 0.0, %v2921
      %v2923 = vpop.f32.mrf.mxu0
      %2924 = vmatprep.mubr.bf16.mxu0 0
      %2925 = vmatmul.mubr.bf16.gmra.mxu0 %v2129
      %v2926 = vpop.f32.mrf.mxu0
      %v2927 = vadd.f32 0.0, %v2926
      %v2928 = vpop.f32.mrf.mxu0
      %v2929 = vpop.f32.mrf.mxu0
      %v2930 = vadd.f32 0.0, %v2929
      %v2931 = vpop.f32.mrf.mxu0
      %2932 = vmatprep.mubr.bf16.mxu0 0
      %2933 = vmatmul.mubr.bf16.gmra.mxu0 %v2775
      %v2934 = vpop.f32.mrf.mxu0
      %v2935 = vadd.f32 0.0, %v2934
      %v2936 = vpop.f32.mrf.mxu0
      %v2937 = vpop.f32.mrf.mxu0
      %v2938 = vadd.f32 0.0, %v2937
      %v2939 = vpop.f32.mrf.mxu0
      %2940 = vdwg.mxu0
      %v2941 = vadd.f32 %v2729, %v2815
      %v2942 = vadd.f32 %v2730, %v2818
      %v2943 = vadd.f32 %v2731, %v2823
      %v2944 = vadd.f32 %v2732, %v2826
      %v2945 = vadd.f32 %v2733, %v2831
      %v2946 = vadd.f32 %v2734, %v2834
      %v2947 = vadd.f32 %v2735, %v2839
      %v2948 = vadd.f32 %v2736, %v2842
      %v2949 = vadd.f32 %v2737, %v2847
      %v2950 = vadd.f32 %v2738, %v2850
      %v2951 = vadd.f32 %v2739, %v2855
      %v2952 = vadd.f32 %v2740, %v2858
      %v2953 = vadd.f32 %v2741, %v2863
      %v2954 = vadd.f32 %v2742, %v2866
      %v2955 = vadd.f32 %v2743, %v2871
      %v2956 = vadd.f32 %v2744, %v2874
      %v2957 = vadd.f32 %v2745, %v2879
      %v2958 = vadd.f32 %v2746, %v2882
      %v2959 = vadd.f32 %v2747, %v2887
      %v2960 = vadd.f32 %v2748, %v2890
      %v2961 = vadd.f32 %v2749, %v2895
      %v2962 = vadd.f32 %v2750, %v2898
      %v2963 = vadd.f32 %v2751, %v2903
      %v2964 = vadd.f32 %v2752, %v2906
      %v2965 = vadd.f32 %v2753, %v2911
      %v2966 = vadd.f32 %v2754, %v2914
      %v2967 = vadd.f32 %v2755, %v2919
      %v2968 = vadd.f32 %v2756, %v2922
      %v2969 = vadd.f32 %v2757, %v2927
      %v2970 = vadd.f32 %v2758, %v2930
      %v2971 = vadd.f32 %v2759, %v2935
      %v2972 = vadd.f32 %v2760, %v2938
      %v2973 = vld [vmem:[%s2] sm:$0x1]
      %v2975 = vlaneseq
      %v2976 = vshrl.u32 %v2975, 7
      %v2977 = vsub.s32 0, %v2976
      %v2978 = vrot.slane %v2973, %v2977
      %v2980 = vadd.f32 %v2941, %v2978
      %v2981 = vadd.f32 %v2942, %v2978
      %v2982 = vadd.f32 %v2943, %v2978
      %v2983 = vadd.f32 %v2944, %v2978
      %v2984 = vadd.f32 %v2945, %v2978
      %v2985 = vadd.f32 %v2946, %v2978
      %v2986 = vadd.f32 %v2947, %v2978
      %v2987 = vadd.f32 %v2948, %v2978
      %v2988 = vadd.f32 %v2949, %v2978
      %v2989 = vadd.f32 %v2950, %v2978
      %v2990 = vadd.f32 %v2951, %v2978
      %v2991 = vadd.f32 %v2952, %v2978
      %v2992 = vadd.f32 %v2953, %v2978
      %v2993 = vadd.f32 %v2954, %v2978
      %v2994 = vadd.f32 %v2955, %v2978
      %v2995 = vadd.f32 %v2956, %v2978
      %v2996 = vadd.f32 %v2957, %v2978
      %v2997 = vadd.f32 %v2958, %v2978
      %v2998 = vadd.f32 %v2959, %v2978
      %v2999 = vadd.f32 %v2960, %v2978
      %v3000 = vadd.f32 %v2961, %v2978
      %v3001 = vadd.f32 %v2962, %v2978
      %v3002 = vadd.f32 %v2963, %v2978
      %v3003 = vadd.f32 %v2964, %v2978
      %v3004 = vadd.f32 %v2965, %v2978
      %v3005 = vadd.f32 %v2966, %v2978
      %v3006 = vadd.f32 %v2967, %v2978
      %v3007 = vadd.f32 %v2968, %v2978
      %v3008 = vadd.f32 %v2969, %v2978
      %v3009 = vadd.f32 %v2970, %v2978
      %v3010 = vadd.f32 %v2971, %v2978
      %v3011 = vadd.f32 %v2972, %v2978
      %v3012 = vsel %vm718, %v2980, 0.0
      %v3013 = vsel %vm718, %v2981, 0.0
      %v3014 = vadd.f32 %v3012, %v3013
      %v3015 = vsel %vm718, %v2982, 0.0
      %v3016 = vadd.f32 %v3014, %v3015
      %v3017 = vsel %vm718, %v2983, 0.0
      %v3018 = vadd.f32 %v3016, %v3017
      %v3019 = vsel %vm718, %v2984, 0.0
      %v3020 = vadd.f32 %v3018, %v3019
      %v3021 = vsel %vm718, %v2985, 0.0
      %v3022 = vadd.f32 %v3020, %v3021
      %v3023 = vsel %vm718, %v2986, 0.0
      %v3024 = vadd.f32 %v3022, %v3023
      %v3025 = vsel %vm718, %v2987, 0.0
      %v3026 = vadd.f32 %v3024, %v3025
      %v3027 = vsel %vm718, %v2988, 0.0
      %v3028 = vadd.f32 %v3026, %v3027
      %v3029 = vsel %vm718, %v2989, 0.0
      %v3030 = vadd.f32 %v3028, %v3029
      %v3031 = vsel %vm718, %v2990, 0.0
      %v3032 = vadd.f32 %v3030, %v3031
      %v3033 = vsel %vm718, %v2991, 0.0
      %v3034 = vadd.f32 %v3032, %v3033
      %v3035 = vsel %vm718, %v2992, 0.0
      %v3036 = vadd.f32 %v3034, %v3035
      %v3037 = vsel %vm718, %v2993, 0.0
      %v3038 = vadd.f32 %v3036, %v3037
      %v3039 = vsel %vm718, %v2994, 0.0
      %v3040 = vadd.f32 %v3038, %v3039
      %v3041 = vsel %vm718, %v2995, 0.0
      %v3042 = vadd.f32 %v3040, %v3041
      %v3043 = vsel %vm718, %v2996, 0.0
      %v3044 = vadd.f32 %v3042, %v3043
      %v3045 = vsel %vm718, %v2997, 0.0
      %v3046 = vadd.f32 %v3044, %v3045
      %v3047 = vsel %vm718, %v2998, 0.0
      %v3048 = vadd.f32 %v3046, %v3047
      %v3049 = vsel %vm718, %v2999, 0.0
      %v3050 = vadd.f32 %v3048, %v3049
      %v3051 = vsel %vm718, %v3000, 0.0
      %v3052 = vadd.f32 %v3050, %v3051
      %v3053 = vsel %vm718, %v3001, 0.0
      %v3054 = vadd.f32 %v3052, %v3053
      %v3055 = vsel %vm718, %v3002, 0.0
      %v3056 = vadd.f32 %v3054, %v3055
      %v3057 = vsel %vm718, %v3003, 0.0
      %v3058 = vadd.f32 %v3056, %v3057
      %v3059 = vsel %vm718, %v3004, 0.0
      %v3060 = vadd.f32 %v3058, %v3059
      %v3061 = vsel %vm718, %v3005, 0.0
      %v3062 = vadd.f32 %v3060, %v3061
      %v3063 = vsel %vm718, %v3006, 0.0
      %v3064 = vadd.f32 %v3062, %v3063
      %v3065 = vsel %vm718, %v3007, 0.0
      %v3066 = vadd.f32 %v3064, %v3065
      %v3067 = vsel %vm718, %v3008, 0.0
      %v3068 = vadd.f32 %v3066, %v3067
      %v3069 = vsel %vm718, %v3009, 0.0
      %v3070 = vadd.f32 %v3068, %v3069
      %v3071 = vsel %vm718, %v3010, 0.0
      %v3072 = vadd.f32 %v3070, %v3071
      %v3073 = vsel %vm718, %v3011, 0.0
      %v3074 = vadd.f32 %v3072, %v3073
      %v3075 = vrot.slane %v3074, 4
      %v3076 = vadd.f32 %v3074, %v3075
      %v3077 = vrot.slane %v3076, 2
      %v3078 = vadd.f32 %v3076, %v3077
      %v3079 = vrot.slane %v3078, 1
      %v3080 = vadd.f32 %v3078, %v3079
      %v3081 = vmul.f32 %v2980, %v2980
      %v3082 = vmul.f32 %v2981, %v2981
      %v3083 = vmul.f32 %v2982, %v2982
      %v3084 = vmul.f32 %v2983, %v2983
      %v3085 = vmul.f32 %v2984, %v2984
      %v3086 = vmul.f32 %v2985, %v2985
      %v3087 = vmul.f32 %v2986, %v2986
      %v3088 = vmul.f32 %v2987, %v2987
      %v3089 = vmul.f32 %v2988, %v2988
      %v3090 = vmul.f32 %v2989, %v2989
      %v3091 = vmul.f32 %v2990, %v2990
      %v3092 = vmul.f32 %v2991, %v2991
      %v3093 = vmul.f32 %v2992, %v2992
      %v3094 = vmul.f32 %v2993, %v2993
      %v3095 = vmul.f32 %v2994, %v2994
      %v3096 = vmul.f32 %v2995, %v2995
      %v3097 = vmul.f32 %v2996, %v2996
      %v3098 = vmul.f32 %v2997, %v2997
      %v3099 = vmul.f32 %v2998, %v2998
      %v3100 = vmul.f32 %v2999, %v2999
      %v3101 = vmul.f32 %v3000, %v3000
      %v3102 = vmul.f32 %v3001, %v3001
      %v3103 = vmul.f32 %v3002, %v3002
      %v3104 = vmul.f32 %v3003, %v3003
      %v3105 = vmul.f32 %v3004, %v3004
      %v3106 = vmul.f32 %v3005, %v3005
      %v3107 = vmul.f32 %v3006, %v3006
      %v3108 = vmul.f32 %v3007, %v3007
      %v3109 = vmul.f32 %v3008, %v3008
      %v3110 = vmul.f32 %v3009, %v3009
      %v3111 = vmul.f32 %v3010, %v3010
      %v3112 = vmul.f32 %v3011, %v3011
      %v3113 = vsel %vm718, %v3081, 0.0
      %v3114 = vsel %vm718, %v3082, 0.0
      %v3115 = vadd.f32 %v3113, %v3114
      %v3116 = vsel %vm718, %v3083, 0.0
      %v3117 = vadd.f32 %v3115, %v3116
      %v3118 = vsel %vm718, %v3084, 0.0
      %v3119 = vadd.f32 %v3117, %v3118
      %v3120 = vsel %vm718, %v3085, 0.0
      %v3121 = vadd.f32 %v3119, %v3120
      %v3122 = vsel %vm718, %v3086, 0.0
      %v3123 = vadd.f32 %v3121, %v3122
      %v3124 = vsel %vm718, %v3087, 0.0
      %v3125 = vadd.f32 %v3123, %v3124
      %v3126 = vsel %vm718, %v3088, 0.0
      %v3127 = vadd.f32 %v3125, %v3126
      %v3128 = vsel %vm718, %v3089, 0.0
      %v3129 = vadd.f32 %v3127, %v3128
      %v3130 = vsel %vm718, %v3090, 0.0
      %v3131 = vadd.f32 %v3129, %v3130
      %v3132 = vsel %vm718, %v3091, 0.0
      %v3133 = vadd.f32 %v3131, %v3132
      %v3134 = vsel %vm718, %v3092, 0.0
      %v3135 = vadd.f32 %v3133, %v3134
      %v3136 = vsel %vm718, %v3093, 0.0
      %v3137 = vadd.f32 %v3135, %v3136
      %v3138 = vsel %vm718, %v3094, 0.0
      %v3139 = vadd.f32 %v3137, %v3138
      %v3140 = vsel %vm718, %v3095, 0.0
      %v3141 = vadd.f32 %v3139, %v3140
      %v3142 = vsel %vm718, %v3096, 0.0
      %v3143 = vadd.f32 %v3141, %v3142
      %v3144 = vsel %vm718, %v3097, 0.0
      %v3145 = vadd.f32 %v3143, %v3144
      %v3146 = vsel %vm718, %v3098, 0.0
      %v3147 = vadd.f32 %v3145, %v3146
      %v3148 = vsel %vm718, %v3099, 0.0
      %v3149 = vadd.f32 %v3147, %v3148
      %v3150 = vsel %vm718, %v3100, 0.0
      %v3151 = vadd.f32 %v3149, %v3150
      %v3152 = vsel %vm718, %v3101, 0.0
      %v3153 = vadd.f32 %v3151, %v3152
      %v3154 = vsel %vm718, %v3102, 0.0
      %v3155 = vadd.f32 %v3153, %v3154
      %v3156 = vsel %vm718, %v3103, 0.0
      %v3157 = vadd.f32 %v3155, %v3156
      %v3158 = vsel %vm718, %v3104, 0.0
      %v3159 = vadd.f32 %v3157, %v3158
      %v3160 = vsel %vm718, %v3105, 0.0
      %v3161 = vadd.f32 %v3159, %v3160
      %v3162 = vsel %vm718, %v3106, 0.0
      %v3163 = vadd.f32 %v3161, %v3162
      %v3164 = vsel %vm718, %v3107, 0.0
      %v3165 = vadd.f32 %v3163, %v3164
      %v3166 = vsel %vm718, %v3108, 0.0
      %v3167 = vadd.f32 %v3165, %v3166
      %v3168 = vsel %vm718, %v3109, 0.0
      %v3169 = vadd.f32 %v3167, %v3168
      %v3170 = vsel %vm718, %v3110, 0.0
      %v3171 = vadd.f32 %v3169, %v3170
      %v3172 = vsel %vm718, %v3111, 0.0
      %v3173 = vadd.f32 %v3171, %v3172
      %v3174 = vsel %vm718, %v3112, 0.0
      %v3175 = vadd.f32 %v3173, %v3174
      %v3176 = vrot.slane %v3175, 4
      %v3177 = vadd.f32 %v3175, %v3176
      %v3178 = vrot.slane %v3177, 2
      %v3179 = vadd.f32 %v3177, %v3178
      %v3180 = vrot.slane %v3179, 1
      %v3181 = vadd.f32 %v3179, %v3180
      %v3182 = vmul.f32 %v3080, 0.00390625
      %v3183 = vmul.f32 %v3181, 0.00390625
      %v3184 = vmul.f32 %v3182, %v3182
      %v3185 = vsub.f32 %v3183, %v3184
      %v3186 = vsub.f32 %v2980, %v3182
      %v3187 = vsub.f32 %v2981, %v3182
      %v3188 = vsub.f32 %v2982, %v3182
      %v3189 = vsub.f32 %v2983, %v3182
      %v3190 = vsub.f32 %v2984, %v3182
      %v3191 = vsub.f32 %v2985, %v3182
      %v3192 = vsub.f32 %v2986, %v3182
      %v3193 = vsub.f32 %v2987, %v3182
      %v3194 = vsub.f32 %v2988, %v3182
      %v3195 = vsub.f32 %v2989, %v3182
      %v3196 = vsub.f32 %v2990, %v3182
      %v3197 = vsub.f32 %v2991, %v3182
      %v3198 = vsub.f32 %v2992, %v3182
      %v3199 = vsub.f32 %v2993, %v3182
      %v3200 = vsub.f32 %v2994, %v3182
      %v3201 = vsub.f32 %v2995, %v3182
      %v3202 = vsub.f32 %v2996, %v3182
      %v3203 = vsub.f32 %v2997, %v3182
      %v3204 = vsub.f32 %v2998, %v3182
      %v3205 = vsub.f32 %v2999, %v3182
      %v3206 = vsub.f32 %v3000, %v3182
      %v3207 = vsub.f32 %v3001, %v3182
      %v3208 = vsub.f32 %v3002, %v3182
      %v3209 = vsub.f32 %v3003, %v3182
      %v3210 = vsub.f32 %v3004, %v3182
      %v3211 = vsub.f32 %v3005, %v3182
      %v3212 = vsub.f32 %v3006, %v3182
      %v3213 = vsub.f32 %v3007, %v3182
      %v3214 = vsub.f32 %v3008, %v3182
      %v3215 = vsub.f32 %v3009, %v3182
      %v3216 = vsub.f32 %v3010, %v3182
      %v3217 = vsub.f32 %v3011, %v3182
      %v3218 = vadd.f32 %v3185, 1e-05
      %v3219 = vrsqrt.pop %v3218
      %v3220 = vmul.f32 %v3186, %v3219
      %v3221 = vmul.f32 %v3187, %v3219
      %v3222 = vmul.f32 %v3188, %v3219
      %v3223 = vmul.f32 %v3189, %v3219
      %v3224 = vmul.f32 %v3190, %v3219
      %v3225 = vmul.f32 %v3191, %v3219
      %v3226 = vmul.f32 %v3192, %v3219
      %v3227 = vmul.f32 %v3193, %v3219
      %v3228 = vmul.f32 %v3194, %v3219
      %v3229 = vmul.f32 %v3195, %v3219
      %v3230 = vmul.f32 %v3196, %v3219
      %v3231 = vmul.f32 %v3197, %v3219
      %v3232 = vmul.f32 %v3198, %v3219
      %v3233 = vmul.f32 %v3199, %v3219
      %v3234 = vmul.f32 %v3200, %v3219
      %v3235 = vmul.f32 %v3201, %v3219
      %v3236 = vmul.f32 %v3202, %v3219
      %v3237 = vmul.f32 %v3203, %v3219
      %v3238 = vmul.f32 %v3204, %v3219
      %v3239 = vmul.f32 %v3205, %v3219
      %v3240 = vmul.f32 %v3206, %v3219
      %v3241 = vmul.f32 %v3207, %v3219
      %v3242 = vmul.f32 %v3208, %v3219
      %v3243 = vmul.f32 %v3209, %v3219
      %v3244 = vmul.f32 %v3210, %v3219
      %v3245 = vmul.f32 %v3211, %v3219
      %v3246 = vmul.f32 %v3212, %v3219
      %v3247 = vmul.f32 %v3213, %v3219
      %v3248 = vmul.f32 %v3214, %v3219
      %v3249 = vmul.f32 %v3215, %v3219
      %v3250 = vmul.f32 %v3216, %v3219
      %v3251 = vmul.f32 %v3217, %v3219
      %v3252 = vmax.f32 %v3220, 0.0
      %v3253 = vmax.f32 %v3221, 0.0
      %v3254 = vmax.f32 %v3222, 0.0
      %v3255 = vmax.f32 %v3223, 0.0
      %v3256 = vmax.f32 %v3224, 0.0
      %v3257 = vmax.f32 %v3225, 0.0
      %v3258 = vmax.f32 %v3226, 0.0
      %v3259 = vmax.f32 %v3227, 0.0
      %v3260 = vmax.f32 %v3228, 0.0
      %v3261 = vmax.f32 %v3229, 0.0
      %v3262 = vmax.f32 %v3230, 0.0
      %v3263 = vmax.f32 %v3231, 0.0
      %v3264 = vmax.f32 %v3232, 0.0
      %v3265 = vmax.f32 %v3233, 0.0
      %v3266 = vmax.f32 %v3234, 0.0
      %v3267 = vmax.f32 %v3235, 0.0
      %v3268 = vmax.f32 %v3236, 0.0
      %v3269 = vmax.f32 %v3237, 0.0
      %v3270 = vmax.f32 %v3238, 0.0
      %v3271 = vmax.f32 %v3239, 0.0
      %v3272 = vmax.f32 %v3240, 0.0
      %v3273 = vmax.f32 %v3241, 0.0
      %v3274 = vmax.f32 %v3242, 0.0
      %v3275 = vmax.f32 %v3243, 0.0
      %v3276 = vmax.f32 %v3244, 0.0
      %v3277 = vmax.f32 %v3245, 0.0
      %v3278 = vmax.f32 %v3246, 0.0
      %v3279 = vmax.f32 %v3247, 0.0
      %v3280 = vmax.f32 %v3248, 0.0
      %v3281 = vmax.f32 %v3249, 0.0
      %v3282 = vmax.f32 %v3250, 0.0
      %v3283 = vmax.f32 %v3251, 0.0
      %v3284 = vpack.c.bf16 %v3253, %v3252
      %v3285 = vpack.c.bf16 %v3255, %v3254
      %v3286 = vpack.c.bf16 %v3257, %v3256
      %v3287 = vpack.c.bf16 %v3259, %v3258
      %v3288 = vpack.c.bf16 %v3261, %v3260
      %v3289 = vpack.c.bf16 %v3263, %v3262
      %v3290 = vpack.c.bf16 %v3265, %v3264
      %v3291 = vpack.c.bf16 %v3267, %v3266
      %v3292 = vpack.c.bf16 %v3269, %v3268
      %v3293 = vpack.c.bf16 %v3271, %v3270
      %v3294 = vpack.c.bf16 %v3273, %v3272
      %v3295 = vpack.c.bf16 %v3275, %v3274
      %v3296 = vpack.c.bf16 %v3277, %v3276
      %v3297 = vpack.c.bf16 %v3279, %v3278
      %v3298 = vpack.c.bf16 %v3281, %v3280
      %v3299 = vpack.c.bf16 %v3283, %v3282
      %v3301 = vshrl.u32 %v3285, 16
      %v3304 = vshrl.u32 %v3284, 16
      %v3307 = vshrl.u32 %v3286, 16
      %v3310 = vshrl.u32 %v3287, 16
      %v3313 = vshrl.u32 %v3288, 16
      %v3316 = vshrl.u32 %v3289, 16
      %v3319 = vshrl.u32 %v3290, 16
      %v3322 = vshrl.u32 %v3291, 16
      %v3325 = vshrl.u32 %v3292, 16
      %v3328 = vshrl.u32 %v3293, 16
      %v3331 = vshrl.u32 %v3294, 16
      %v3334 = vshrl.u32 %v3295, 16
      %v3337 = vshrl.u32 %v3296, 16
      %v3340 = vshrl.u32 %v3297, 16
      %v3343 = vshrl.u32 %v3298, 16
      %v3346 = vshrl.u32 %v3299, 16
      %v3364 = vrot.slane %v3301, 7
      %v3365 = vshll.u32 %v3285, 16
      %v3367 = vor.u32 %v3364, %v3365
      %v3368 = vrot.slane %v3304, 7
      %v3369 = vshll.u32 %v3284, 16
      %v3371 = vor.u32 %v3368, %v3369
      %v3372 = vrot.slane %v3307, 7
      %v3373 = vshll.u32 %v3286, 16
      %v3375 = vor.u32 %v3372, %v3373
      %v3376 = vrot.slane %v3310, 7
      %v3377 = vshll.u32 %v3287, 16
      %v3379 = vor.u32 %v3376, %v3377
      %v3380 = vrot.slane %v3313, 7
      %v3381 = vshll.u32 %v3288, 16
      %v3383 = vor.u32 %v3380, %v3381
      %v3384 = vrot.slane %v3316, 7
      %v3385 = vshll.u32 %v3289, 16
      %v3387 = vor.u32 %v3384, %v3385
      %v3388 = vrot.slane %v3319, 7
      %v3389 = vshll.u32 %v3290, 16
      %v3391 = vor.u32 %v3388, %v3389
      %v3392 = vrot.slane %v3322, 7
      %v3393 = vshll.u32 %v3291, 16
      %v3395 = vor.u32 %v3392, %v3393
      %v3396 = vrot.slane %v3325, 7
      %v3397 = vshll.u32 %v3292, 16
      %v3399 = vor.u32 %v3396, %v3397
      %v3400 = vrot.slane %v3328, 7
      %v3401 = vshll.u32 %v3293, 16
      %v3403 = vor.u32 %v3400, %v3401
      %v3404 = vrot.slane %v3331, 7
      %v3405 = vshll.u32 %v3294, 16
      %v3407 = vor.u32 %v3404, %v3405
      %v3408 = vrot.slane %v3334, 7
      %v3409 = vshll.u32 %v3295, 16
      %v3411 = vor.u32 %v3408, %v3409
      %v3412 = vrot.slane %v3337, 7
      %v3413 = vshll.u32 %v3296, 16
      %v3415 = vor.u32 %v3412, %v3413
      %v3416 = vrot.slane %v3340, 7
      %v3417 = vshll.u32 %v3297, 16
      %v3419 = vor.u32 %v3416, %v3417
      %v3420 = vrot.slane %v3343, 7
      %v3421 = vshll.u32 %v3298, 16
      %v3423 = vor.u32 %v3420, %v3421
      %v3424 = vrot.slane %v3346, 7
      %v3425 = vshll.u32 %v3299, 16
      %v3427 = vor.u32 %v3424, %v3425
      %v3460 = vrot.slane %v3365, 7
      %v3461 = vrot.slane %v3369, 7
      %v3462 = vrot.slane %v3373, 7
      %v3463 = vrot.slane %v3377, 7
      %v3464 = vrot.slane %v3381, 7
      %v3465 = vrot.slane %v3385, 7
      %v3466 = vrot.slane %v3389, 7
      %v3467 = vrot.slane %v3393, 7
      %v3468 = vrot.slane %v3397, 7
      %v3469 = vrot.slane %v3401, 7
      %v3470 = vrot.slane %v3405, 7
      %v3471 = vrot.slane %v3409, 7
      %v3472 = vrot.slane %v3413, 7
      %v3473 = vrot.slane %v3417, 7
      %v3474 = vrot.slane %v3421, 7
      %v3475 = vrot.slane %v3425, 7
      %vm3492 = vcmask 1040384
      %vm3493 = vsmask.f32 256
      %vm3494 = vmand %vm3492, %vm3493
      %v3495 = vsel %vm3494, %v3301, %v3367
      %v3496 = vsel %vm3494, %v3304, %v3371
      %v3497 = vsel %vm3494, %v3307, %v3375
      %v3498 = vsel %vm3494, %v3310, %v3379
      %v3499 = vsel %vm3494, %v3313, %v3383
      %v3500 = vsel %vm3494, %v3316, %v3387
      %v3501 = vsel %vm3494, %v3319, %v3391
      %v3502 = vsel %vm3494, %v3322, %v3395
      %v3503 = vsel %vm3494, %v3325, %v3399
      %v3504 = vsel %vm3494, %v3328, %v3403
      %v3505 = vsel %vm3494, %v3331, %v3407
      %v3506 = vsel %vm3494, %v3334, %v3411
      %v3507 = vsel %vm3494, %v3337, %v3415
      %v3508 = vsel %vm3494, %v3340, %v3419
      %v3509 = vsel %vm3494, %v3343, %v3423
      %v3510 = vsel %vm3494, %v3346, %v3427
      %v3511 = vsel %vm3494, %v3364, %v3460
      %v3512 = vsel %vm3494, %v3368, %v3461
      %v3513 = vsel %vm3494, %v3372, %v3462
      %v3514 = vsel %vm3494, %v3376, %v3463
      %v3515 = vsel %vm3494, %v3380, %v3464
      %v3516 = vsel %vm3494, %v3384, %v3465
      %v3517 = vsel %vm3494, %v3388, %v3466
      %v3518 = vsel %vm3494, %v3392, %v3467
      %v3519 = vsel %vm3494, %v3396, %v3468
      %v3520 = vsel %vm3494, %v3400, %v3469
      %v3521 = vsel %vm3494, %v3404, %v3470
      %v3522 = vsel %vm3494, %v3408, %v3471
      %v3523 = vsel %vm3494, %v3412, %v3472
      %v3524 = vsel %vm3494, %v3416, %v3473
      %v3525 = vsel %vm3494, %v3420, %v3474
      %v3526 = vsel %vm3494, %v3424, %v3475
      %v3527 = vld [vmem:[%s3] sm:$0x3]
      %vm3528 = vsmask.f32 7424
      %v3530 = vshrl.u32 %v3495, 16
      %v3532 = vshll.u32 %v3495, 16
      %v3534 = vrot.slane %v3532, 1
      %v3535 = vor.u32 %v3530, %v3534
      %v3537 = vshll.u32 %v3511, 16
      %v3539 = vrot.slane %v3537, 1
      %v3540 = vsel %vm3528, %v3535, %v3539
      %v3542 = vshrl.u32 %v3496, 16
      %v3544 = vshll.u32 %v3496, 16
      %v3546 = vrot.slane %v3544, 1
      %v3547 = vor.u32 %v3542, %v3546
      %v3549 = vshll.u32 %v3512, 16
      %v3551 = vrot.slane %v3549, 1
      %v3552 = vsel %vm3528, %v3547, %v3551
      %v3554 = vshrl.u32 %v3497, 16
      %v3556 = vshll.u32 %v3497, 16
      %v3558 = vrot.slane %v3556, 1
      %v3559 = vor.u32 %v3554, %v3558
      %v3561 = vshll.u32 %v3513, 16
      %v3563 = vrot.slane %v3561, 1
      %v3564 = vsel %vm3528, %v3559, %v3563
      %v3566 = vshrl.u32 %v3498, 16
      %v3568 = vshll.u32 %v3498, 16
      %v3570 = vrot.slane %v3568, 1
      %v3571 = vor.u32 %v3566, %v3570
      %v3573 = vshll.u32 %v3514, 16
      %v3575 = vrot.slane %v3573, 1
      %v3576 = vsel %vm3528, %v3571, %v3575
      %v3578 = vshrl.u32 %v3499, 16
      %v3580 = vshll.u32 %v3499, 16
      %v3582 = vrot.slane %v3580, 1
      %v3583 = vor.u32 %v3578, %v3582
      %v3585 = vshll.u32 %v3515, 16
      %v3587 = vrot.slane %v3585, 1
      %v3588 = vsel %vm3528, %v3583, %v3587
      %v3590 = vshrl.u32 %v3500, 16
      %v3592 = vshll.u32 %v3500, 16
      %v3594 = vrot.slane %v3592, 1
      %v3595 = vor.u32 %v3590, %v3594
      %v3597 = vshll.u32 %v3516, 16
      %v3599 = vrot.slane %v3597, 1
      %v3600 = vsel %vm3528, %v3595, %v3599
      %v3602 = vshrl.u32 %v3501, 16
      %v3604 = vshll.u32 %v3501, 16
      %v3606 = vrot.slane %v3604, 1
      %v3607 = vor.u32 %v3602, %v3606
      %v3609 = vshll.u32 %v3517, 16
      %v3611 = vrot.slane %v3609, 1
      %v3612 = vsel %vm3528, %v3607, %v3611
      %v3614 = vshrl.u32 %v3502, 16
      %v3616 = vshll.u32 %v3502, 16
      %v3618 = vrot.slane %v3616, 1
      %v3619 = vor.u32 %v3614, %v3618
      %v3621 = vshll.u32 %v3518, 16
      %v3623 = vrot.slane %v3621, 1
      %v3624 = vsel %vm3528, %v3619, %v3623
      %v3626 = vshrl.u32 %v3503, 16
      %v3628 = vshll.u32 %v3503, 16
      %v3630 = vrot.slane %v3628, 1
      %v3631 = vor.u32 %v3626, %v3630
      %v3633 = vshll.u32 %v3519, 16
      %v3635 = vrot.slane %v3633, 1
      %v3636 = vsel %vm3528, %v3631, %v3635
      %v3638 = vshrl.u32 %v3504, 16
      %v3640 = vshll.u32 %v3504, 16
      %v3642 = vrot.slane %v3640, 1
      %v3643 = vor.u32 %v3638, %v3642
      %v3645 = vshll.u32 %v3520, 16
      %v3647 = vrot.slane %v3645, 1
      %v3648 = vsel %vm3528, %v3643, %v3647
      %v3650 = vshrl.u32 %v3505, 16
      %v3652 = vshll.u32 %v3505, 16
      %v3654 = vrot.slane %v3652, 1
      %v3655 = vor.u32 %v3650, %v3654
      %v3657 = vshll.u32 %v3521, 16
      %v3659 = vrot.slane %v3657, 1
      %v3660 = vsel %vm3528, %v3655, %v3659
      %v3662 = vshrl.u32 %v3506, 16
      %v3664 = vshll.u32 %v3506, 16
      %v3666 = vrot.slane %v3664, 1
      %v3667 = vor.u32 %v3662, %v3666
      %v3669 = vshll.u32 %v3522, 16
      %v3671 = vrot.slane %v3669, 1
      %v3672 = vsel %vm3528, %v3667, %v3671
      %v3674 = vshrl.u32 %v3507, 16
      %v3676 = vshll.u32 %v3507, 16
      %v3678 = vrot.slane %v3676, 1
      %v3679 = vor.u32 %v3674, %v3678
      %v3681 = vshll.u32 %v3523, 16
      %v3683 = vrot.slane %v3681, 1
      %v3684 = vsel %vm3528, %v3679, %v3683
      %v3686 = vshrl.u32 %v3508, 16
      %v3688 = vshll.u32 %v3508, 16
      %v3690 = vrot.slane %v3688, 1
      %v3691 = vor.u32 %v3686, %v3690
      %v3693 = vshll.u32 %v3524, 16
      %v3695 = vrot.slane %v3693, 1
      %v3696 = vsel %vm3528, %v3691, %v3695
      %v3698 = vshrl.u32 %v3509, 16
      %v3700 = vshll.u32 %v3509, 16
      %v3702 = vrot.slane %v3700, 1
      %v3703 = vor.u32 %v3698, %v3702
      %v3705 = vshll.u32 %v3525, 16
      %v3707 = vrot.slane %v3705, 1
      %v3708 = vsel %vm3528, %v3703, %v3707
      %s3709 = scalar_lea.vmem %s3, 2
      %v3710 = vld [vmem:[%s3709] sm:$0x3]
      %v3712 = vsel %vm718, %v3540, 0
      %v3715 = vsel %vm718, %v3552, 0
      %v3718 = vsel %vm718, %v3564, 0
      %v3721 = vsel %vm718, %v3576, 0
      %v3724 = vsel %vm718, %v3588, 0
      %v3727 = vsel %vm718, %v3600, 0
      %v3730 = vsel %vm718, %v3612, 0
      %v3733 = vsel %vm718, %v3624, 0
      %v3736 = vsel %vm718, %v3636, 0
      %v3739 = vsel %vm718, %v3648, 0
      %v3742 = vsel %vm718, %v3660, 0
      %v3745 = vsel %vm718, %v3672, 0
      %v3748 = vsel %vm718, %v3684, 0
      %v3751 = vsel %vm718, %v3696, 0
      %v3754 = vsel %vm718, %v3708, 0
      %v3757 = vsel %vm767, %v3710, 0
      %3759 = vmatprep.subr.bf16.mxu0 0
      %3760 = vmatpush1.bf16.msra.mxu0 0
      %3761 = vmatprep.subr.bf16.mxu0 0
      %3762 = vmatpush1.bf16.msra.mxu0 0
      %3763 = vmatprep.subr.bf16.mxu0 0
      %3764 = vmatpush1.bf16.msra.mxu0 0
      %3765 = vmatprep.subr.bf16.mxu0 0
      %3766 = vmatpush1.bf16.msra.mxu0 0
      %3767 = vmatprep.subr.bf16.mxu0 0
      %3768 = vmatpush1.bf16.msra.mxu0 0
      %3769 = vmatprep.subr.bf16.mxu0 0
      %3770 = vmatpush1.bf16.msra.mxu0 0
      %3771 = vmatprep.subr.bf16.mxu0 0
      %3772 = vmatpush1.bf16.msra.mxu0 0
      %3773 = vmatprep.subr.bf16.mxu0 0
      %3774 = vmatpush1.bf16.msra.mxu0 %v3757
      %3775 = vmatprep.subr.bf16.mxu0 0
      %3776 = vmatpush2.bf16.msra.mxu0 0
      %3777 = vmatprep.subr.bf16.mxu0 0
      %3778 = vmatpush2.bf16.msra.mxu0 0
      %3779 = vmatprep.subr.bf16.mxu0 0
      %3780 = vmatpush2.bf16.msra.mxu0 0
      %3781 = vmatprep.subr.bf16.mxu0 0
      %3782 = vmatpush2.bf16.msra.mxu0 0
      %3783 = vmatprep.subr.bf16.mxu0 0
      %3784 = vmatpush2.bf16.msra.mxu0 0
      %3785 = vmatprep.subr.bf16.mxu0 0
      %3786 = vmatpush2.bf16.msra.mxu0 0
      %3787 = vmatprep.subr.bf16.mxu0 0
      %3788 = vmatpush2.bf16.msra.mxu0 0
      %3789 = vmatprep.subr.bf16.mxu0 0
      %3790 = vmatpush2.bf16.msra.mxu0 0
      %3791 = vmatprep.mubr.bf16.mxu0 0
      %3792 = vmatmul.mubr.bf16.gmra.mxu0 %v3712
      %v3793 = vpop.f32.mrf.mxu0
      %v3794 = vadd.f32 0.0, %v3793
      %v3795 = vpop.f32.mrf.mxu0
      %v3796 = vpop.f32.mrf.mxu0
      %v3797 = vadd.f32 0.0, %v3796
      %v3798 = vpop.f32.mrf.mxu0
      %3799 = vmatprep.mubr.bf16.mxu0 0
      %3800 = vmatmul.mubr.bf16.gmra.mxu0 %v3715
      %v3801 = vpop.f32.mrf.mxu0
      %v3802 = vadd.f32 0.0, %v3801
      %v3803 = vpop.f32.mrf.mxu0
      %v3804 = vpop.f32.mrf.mxu0
      %v3805 = vadd.f32 0.0, %v3804
      %v3806 = vpop.f32.mrf.mxu0
      %3807 = vmatprep.mubr.bf16.mxu0 0
      %3808 = vmatmul.mubr.bf16.gmra.mxu0 %v3712
      %v3809 = vpop.f32.mrf.mxu0
      %v3810 = vadd.f32 0.0, %v3809
      %v3811 = vpop.f32.mrf.mxu0
      %v3812 = vpop.f32.mrf.mxu0
      %v3813 = vadd.f32 0.0, %v3812
      %v3814 = vpop.f32.mrf.mxu0
      %3815 = vmatprep.mubr.bf16.mxu0 0
      %3816 = vmatmul.mubr.bf16.gmra.mxu0 %v3718
      %v3817 = vpop.f32.mrf.mxu0
      %v3818 = vadd.f32 0.0, %v3817
      %v3819 = vpop.f32.mrf.mxu0
      %v3820 = vpop.f32.mrf.mxu0
      %v3821 = vadd.f32 0.0, %v3820
      %v3822 = vpop.f32.mrf.mxu0
      %3823 = vmatprep.mubr.bf16.mxu0 0
      %3824 = vmatmul.mubr.bf16.gmra.mxu0 %v3721
      %v3825 = vpop.f32.mrf.mxu0
      %v3826 = vadd.f32 0.0, %v3825
      %v3827 = vpop.f32.mrf.mxu0
      %v3828 = vpop.f32.mrf.mxu0
      %v3829 = vadd.f32 0.0, %v3828
      %v3830 = vpop.f32.mrf.mxu0
      %3831 = vmatprep.mubr.bf16.mxu0 0
      %3832 = vmatmul.mubr.bf16.gmra.mxu0 %v3724
      %v3833 = vpop.f32.mrf.mxu0
      %v3834 = vadd.f32 0.0, %v3833
      %v3835 = vpop.f32.mrf.mxu0
      %v3836 = vpop.f32.mrf.mxu0
      %v3837 = vadd.f32 0.0, %v3836
      %v3838 = vpop.f32.mrf.mxu0
      %3839 = vmatprep.mubr.bf16.mxu0 0
      %3840 = vmatmul.mubr.bf16.gmra.mxu0 %v3727
      %v3841 = vpop.f32.mrf.mxu0
      %v3842 = vadd.f32 0.0, %v3841
      %v3843 = vpop.f32.mrf.mxu0
      %v3844 = vpop.f32.mrf.mxu0
      %v3845 = vadd.f32 0.0, %v3844
      %v3846 = vpop.f32.mrf.mxu0
      %3847 = vmatprep.mubr.bf16.mxu0 0
      %3848 = vmatmul.mubr.bf16.gmra.mxu0 %v3730
      %v3849 = vpop.f32.mrf.mxu0
      %v3850 = vadd.f32 0.0, %v3849
      %v3851 = vpop.f32.mrf.mxu0
      %v3852 = vpop.f32.mrf.mxu0
      %v3853 = vadd.f32 0.0, %v3852
      %v3854 = vpop.f32.mrf.mxu0
      %3855 = vmatprep.mubr.bf16.mxu0 0
      %3856 = vmatmul.mubr.bf16.gmra.mxu0 %v3733
      %v3857 = vpop.f32.mrf.mxu0
      %v3858 = vadd.f32 0.0, %v3857
      %v3859 = vpop.f32.mrf.mxu0
      %v3860 = vpop.f32.mrf.mxu0
      %v3861 = vadd.f32 0.0, %v3860
      %v3862 = vpop.f32.mrf.mxu0
      %3863 = vmatprep.mubr.bf16.mxu0 0
      %3864 = vmatmul.mubr.bf16.gmra.mxu0 %v3736
      %v3865 = vpop.f32.mrf.mxu0
      %v3866 = vadd.f32 0.0, %v3865
      %v3867 = vpop.f32.mrf.mxu0
      %v3868 = vpop.f32.mrf.mxu0
      %v3869 = vadd.f32 0.0, %v3868
      %v3870 = vpop.f32.mrf.mxu0
      %3871 = vmatprep.mubr.bf16.mxu0 0
      %3872 = vmatmul.mubr.bf16.gmra.mxu0 %v3739
      %v3873 = vpop.f32.mrf.mxu0
      %v3874 = vadd.f32 0.0, %v3873
      %v3875 = vpop.f32.mrf.mxu0
      %v3876 = vpop.f32.mrf.mxu0
      %v3877 = vadd.f32 0.0, %v3876
      %v3878 = vpop.f32.mrf.mxu0
      %3879 = vmatprep.mubr.bf16.mxu0 0
      %3880 = vmatmul.mubr.bf16.gmra.mxu0 %v3742
      %v3881 = vpop.f32.mrf.mxu0
      %v3882 = vadd.f32 0.0, %v3881
      %v3883 = vpop.f32.mrf.mxu0
      %v3884 = vpop.f32.mrf.mxu0
      %v3885 = vadd.f32 0.0, %v3884
      %v3886 = vpop.f32.mrf.mxu0
      %3887 = vmatprep.mubr.bf16.mxu0 0
      %3888 = vmatmul.mubr.bf16.gmra.mxu0 %v3745
      %v3889 = vpop.f32.mrf.mxu0
      %v3890 = vadd.f32 0.0, %v3889
      %v3891 = vpop.f32.mrf.mxu0
      %v3892 = vpop.f32.mrf.mxu0
      %v3893 = vadd.f32 0.0, %v3892
      %v3894 = vpop.f32.mrf.mxu0
      %3895 = vmatprep.mubr.bf16.mxu0 0
      %3896 = vmatmul.mubr.bf16.gmra.mxu0 %v3748
      %v3897 = vpop.f32.mrf.mxu0
      %v3898 = vadd.f32 0.0, %v3897
      %v3899 = vpop.f32.mrf.mxu0
      %v3900 = vpop.f32.mrf.mxu0
      %v3901 = vadd.f32 0.0, %v3900
      %v3902 = vpop.f32.mrf.mxu0
      %3903 = vmatprep.mubr.bf16.mxu0 0
      %3904 = vmatmul.mubr.bf16.gmra.mxu0 %v3751
      %v3905 = vpop.f32.mrf.mxu0
      %v3906 = vadd.f32 0.0, %v3905
      %v3907 = vpop.f32.mrf.mxu0
      %v3908 = vpop.f32.mrf.mxu0
      %v3909 = vadd.f32 0.0, %v3908
      %v3910 = vpop.f32.mrf.mxu0
      %3911 = vmatprep.mubr.bf16.mxu0 0
      %3912 = vmatmul.mubr.bf16.gmra.mxu0 %v3754
      %v3913 = vpop.f32.mrf.mxu0
      %v3914 = vadd.f32 0.0, %v3913
      %v3915 = vpop.f32.mrf.mxu0
      %v3916 = vpop.f32.mrf.mxu0
      %v3917 = vadd.f32 0.0, %v3916
      %v3918 = vpop.f32.mrf.mxu0
      %3919 = vdwg.mxu0
      %v3920 = vsel %vm718, %v3495, 0
      %v3922 = vsel %vm718, %v3496, 0
      %v3924 = vsel %vm718, %v3497, 0
      %v3926 = vsel %vm718, %v3498, 0
      %v3928 = vsel %vm718, %v3499, 0
      %v3930 = vsel %vm718, %v3500, 0
      %v3932 = vsel %vm718, %v3501, 0
      %v3934 = vsel %vm718, %v3502, 0
      %v3936 = vsel %vm718, %v3503, 0
      %v3938 = vsel %vm718, %v3504, 0
      %v3940 = vsel %vm718, %v3505, 0
      %v3942 = vsel %vm718, %v3506, 0
      %v3944 = vsel %vm718, %v3507, 0
      %v3946 = vsel %vm718, %v3508, 0
      %v3948 = vsel %vm718, %v3509, 0
      %v3951 = vsel %vm767, %v3527, 0
      %3953 = vmatprep.subr.bf16.mxu0 0
      %3954 = vmatpush1.bf16.msra.mxu0 0
      %3955 = vmatprep.subr.bf16.mxu0 0
      %3956 = vmatpush1.bf16.msra.mxu0 0
      %3957 = vmatprep.subr.bf16.mxu0 0
      %3958 = vmatpush1.bf16.msra.mxu0 0
      %3959 = vmatprep.subr.bf16.mxu0 0
      %3960 = vmatpush1.bf16.msra.mxu0 0
      %3961 = vmatprep.subr.bf16.mxu0 0
      %3962 = vmatpush1.bf16.msra.mxu0 0
      %3963 = vmatprep.subr.bf16.mxu0 0
      %3964 = vmatpush1.bf16.msra.mxu0 0
      %3965 = vmatprep.subr.bf16.mxu0 0
      %3966 = vmatpush1.bf16.msra.mxu0 0
      %3967 = vmatprep.subr.bf16.mxu0 0
      %3968 = vmatpush1.bf16.msra.mxu0 %v3951
      %3969 = vmatprep.subr.bf16.mxu0 0
      %3970 = vmatpush2.bf16.msra.mxu0 0
      %3971 = vmatprep.subr.bf16.mxu0 0
      %3972 = vmatpush2.bf16.msra.mxu0 0
      %3973 = vmatprep.subr.bf16.mxu0 0
      %3974 = vmatpush2.bf16.msra.mxu0 0
      %3975 = vmatprep.subr.bf16.mxu0 0
      %3976 = vmatpush2.bf16.msra.mxu0 0
      %3977 = vmatprep.subr.bf16.mxu0 0
      %3978 = vmatpush2.bf16.msra.mxu0 0
      %3979 = vmatprep.subr.bf16.mxu0 0
      %3980 = vmatpush2.bf16.msra.mxu0 0
      %3981 = vmatprep.subr.bf16.mxu0 0
      %3982 = vmatpush2.bf16.msra.mxu0 0
      %3983 = vmatprep.subr.bf16.mxu0 0
      %3984 = vmatpush2.bf16.msra.mxu0 0
      %3985 = vmatprep.mubr.bf16.mxu0 0
      %3986 = vmatmul.mubr.bf16.gmra.mxu0 %v3920
      %v3987 = vpop.f32.mrf.mxu0
      %v3988 = vadd.f32 %v3794, %v3987
      %v3989 = vpop.f32.mrf.mxu0
      %v3990 = vpop.f32.mrf.mxu0
      %v3991 = vadd.f32 %v3797, %v3990
      %v3992 = vpop.f32.mrf.mxu0
      %3993 = vmatprep.mubr.bf16.mxu0 0
      %3994 = vmatmul.mubr.bf16.gmra.mxu0 %v3922
      %v3995 = vpop.f32.mrf.mxu0
      %v3996 = vadd.f32 %v3802, %v3995
      %v3997 = vpop.f32.mrf.mxu0
      %v3998 = vpop.f32.mrf.mxu0
      %v3999 = vadd.f32 %v3805, %v3998
      %v4000 = vpop.f32.mrf.mxu0
      %4001 = vmatprep.mubr.bf16.mxu0 0
      %4002 = vmatmul.mubr.bf16.gmra.mxu0 %v3920
      %v4003 = vpop.f32.mrf.mxu0
      %v4004 = vadd.f32 %v3810, %v4003
      %v4005 = vpop.f32.mrf.mxu0
      %v4006 = vpop.f32.mrf.mxu0
      %v4007 = vadd.f32 %v3813, %v4006
      %v4008 = vpop.f32.mrf.mxu0
      %4009 = vmatprep.mubr.bf16.mxu0 0
      %4010 = vmatmul.mubr.bf16.gmra.mxu0 %v3924
      %v4011 = vpop.f32.mrf.mxu0
      %v4012 = vadd.f32 %v3818, %v4011
      %v4013 = vpop.f32.mrf.mxu0
      %v4014 = vpop.f32.mrf.mxu0
      %v4015 = vadd.f32 %v3821, %v4014
      %v4016 = vpop.f32.mrf.mxu0
      %4017 = vmatprep.mubr.bf16.mxu0 0
      %4018 = vmatmul.mubr.bf16.gmra.mxu0 %v3926
      %v4019 = vpop.f32.mrf.mxu0
      %v4020 = vadd.f32 %v3826, %v4019
      %v4021 = vpop.f32.mrf.mxu0
      %v4022 = vpop.f32.mrf.mxu0
      %v4023 = vadd.f32 %v3829, %v4022
      %v4024 = vpop.f32.mrf.mxu0
      %4025 = vmatprep.mubr.bf16.mxu0 0
      %4026 = vmatmul.mubr.bf16.gmra.mxu0 %v3928
      %v4027 = vpop.f32.mrf.mxu0
      %v4028 = vadd.f32 %v3834, %v4027
      %v4029 = vpop.f32.mrf.mxu0
      %v4030 = vpop.f32.mrf.mxu0
      %v4031 = vadd.f32 %v3837, %v4030
      %v4032 = vpop.f32.mrf.mxu0
      %4033 = vmatprep.mubr.bf16.mxu0 0
      %4034 = vmatmul.mubr.bf16.gmra.mxu0 %v3930
      %v4035 = vpop.f32.mrf.mxu0
      %v4036 = vadd.f32 %v3842, %v4035
      %v4037 = vpop.f32.mrf.mxu0
      %v4038 = vpop.f32.mrf.mxu0
      %v4039 = vadd.f32 %v3845, %v4038
      %v4040 = vpop.f32.mrf.mxu0
      %4041 = vmatprep.mubr.bf16.mxu0 0
      %4042 = vmatmul.mubr.bf16.gmra.mxu0 %v3932
      %v4043 = vpop.f32.mrf.mxu0
      %v4044 = vadd.f32 %v3850, %v4043
      %v4045 = vpop.f32.mrf.mxu0
      %v4046 = vpop.f32.mrf.mxu0
      %v4047 = vadd.f32 %v3853, %v4046
      %v4048 = vpop.f32.mrf.mxu0
      %4049 = vmatprep.mubr.bf16.mxu0 0
      %4050 = vmatmul.mubr.bf16.gmra.mxu0 %v3934
      %v4051 = vpop.f32.mrf.mxu0
      %v4052 = vadd.f32 %v3858, %v4051
      %v4053 = vpop.f32.mrf.mxu0
      %v4054 = vpop.f32.mrf.mxu0
      %v4055 = vadd.f32 %v3861, %v4054
      %v4056 = vpop.f32.mrf.mxu0
      %4057 = vmatprep.mubr.bf16.mxu0 0
      %4058 = vmatmul.mubr.bf16.gmra.mxu0 %v3936
      %v4059 = vpop.f32.mrf.mxu0
      %v4060 = vadd.f32 %v3866, %v4059
      %v4061 = vpop.f32.mrf.mxu0
      %v4062 = vpop.f32.mrf.mxu0
      %v4063 = vadd.f32 %v3869, %v4062
      %v4064 = vpop.f32.mrf.mxu0
      %4065 = vmatprep.mubr.bf16.mxu0 0
      %4066 = vmatmul.mubr.bf16.gmra.mxu0 %v3938
      %v4067 = vpop.f32.mrf.mxu0
      %v4068 = vadd.f32 %v3874, %v4067
      %v4069 = vpop.f32.mrf.mxu0
      %v4070 = vpop.f32.mrf.mxu0
      %v4071 = vadd.f32 %v3877, %v4070
      %v4072 = vpop.f32.mrf.mxu0
      %4073 = vmatprep.mubr.bf16.mxu0 0
      %4074 = vmatmul.mubr.bf16.gmra.mxu0 %v3940
      %v4075 = vpop.f32.mrf.mxu0
      %v4076 = vadd.f32 %v3882, %v4075
      %v4077 = vpop.f32.mrf.mxu0
      %v4078 = vpop.f32.mrf.mxu0
      %v4079 = vadd.f32 %v3885, %v4078
      %v4080 = vpop.f32.mrf.mxu0
      %4081 = vmatprep.mubr.bf16.mxu0 0
      %4082 = vmatmul.mubr.bf16.gmra.mxu0 %v3942
      %v4083 = vpop.f32.mrf.mxu0
      %v4084 = vadd.f32 %v3890, %v4083
      %v4085 = vpop.f32.mrf.mxu0
      %v4086 = vpop.f32.mrf.mxu0
      %v4087 = vadd.f32 %v3893, %v4086
      %v4088 = vpop.f32.mrf.mxu0
      %4089 = vmatprep.mubr.bf16.mxu0 0
      %4090 = vmatmul.mubr.bf16.gmra.mxu0 %v3944
      %v4091 = vpop.f32.mrf.mxu0
      %v4092 = vadd.f32 %v3898, %v4091
      %v4093 = vpop.f32.mrf.mxu0
      %v4094 = vpop.f32.mrf.mxu0
      %v4095 = vadd.f32 %v3901, %v4094
      %v4096 = vpop.f32.mrf.mxu0
      %4097 = vmatprep.mubr.bf16.mxu0 0
      %4098 = vmatmul.mubr.bf16.gmra.mxu0 %v3946
      %v4099 = vpop.f32.mrf.mxu0
      %v4100 = vadd.f32 %v3906, %v4099
      %v4101 = vpop.f32.mrf.mxu0
      %v4102 = vpop.f32.mrf.mxu0
      %v4103 = vadd.f32 %v3909, %v4102
      %v4104 = vpop.f32.mrf.mxu0
      %4105 = vmatprep.mubr.bf16.mxu0 0
      %4106 = vmatmul.mubr.bf16.gmra.mxu0 %v3948
      %v4107 = vpop.f32.mrf.mxu0
      %v4108 = vadd.f32 %v3914, %v4107
      %v4109 = vpop.f32.mrf.mxu0
      %v4110 = vpop.f32.mrf.mxu0
      %v4111 = vadd.f32 %v3917, %v4110
      %v4112 = vpop.f32.mrf.mxu0
      %4113 = vdwg.mxu0
      %vm4144 = vcmask 1046528
      %v4145 = vrot.slane %v3495, 1
      %v4146 = vrot.slane %v3511, 1
      %v4147 = vsel %vm4144, %v4145, %v4146
      %v4148 = vrot.slane %v3496, 1
      %v4149 = vrot.slane %v3512, 1
      %v4150 = vsel %vm4144, %v4148, %v4149
      %v4151 = vrot.slane %v3497, 1
      %v4152 = vrot.slane %v3513, 1
      %v4153 = vsel %vm4144, %v4151, %v4152
      %v4154 = vrot.slane %v3498, 1
      %v4155 = vrot.slane %v3514, 1
      %v4156 = vsel %vm4144, %v4154, %v4155
      %v4157 = vrot.slane %v3499, 1
      %v4158 = vrot.slane %v3515, 1
      %v4159 = vsel %vm4144, %v4157, %v4158
      %v4160 = vrot.slane %v3500, 1
      %v4161 = vrot.slane %v3516, 1
      %v4162 = vsel %vm4144, %v4160, %v4161
      %v4163 = vrot.slane %v3501, 1
      %v4164 = vrot.slane %v3517, 1
      %v4165 = vsel %vm4144, %v4163, %v4164
      %v4166 = vrot.slane %v3502, 1
      %v4167 = vrot.slane %v3518, 1
      %v4168 = vsel %vm4144, %v4166, %v4167
      %v4169 = vrot.slane %v3503, 1
      %v4170 = vrot.slane %v3519, 1
      %v4171 = vsel %vm4144, %v4169, %v4170
      %v4172 = vrot.slane %v3504, 1
      %v4173 = vrot.slane %v3520, 1
      %v4174 = vsel %vm4144, %v4172, %v4173
      %v4175 = vrot.slane %v3505, 1
      %v4176 = vrot.slane %v3521, 1
      %v4177 = vsel %vm4144, %v4175, %v4176
      %v4178 = vrot.slane %v3506, 1
      %v4179 = vrot.slane %v3522, 1
      %v4180 = vsel %vm4144, %v4178, %v4179
      %v4181 = vrot.slane %v3507, 1
      %v4182 = vrot.slane %v3523, 1
      %v4183 = vsel %vm4144, %v4181, %v4182
      %v4184 = vrot.slane %v3508, 1
      %v4185 = vrot.slane %v3524, 1
      %v4186 = vsel %vm4144, %v4184, %v4185
      %v4187 = vrot.slane %v3509, 1
      %v4188 = vrot.slane %v3525, 1
      %v4189 = vsel %vm4144, %v4187, %v4188
      %s4190 = scalar_lea.vmem %s3, 4
      %v4191 = vld [vmem:[%s4190] sm:$0x3]
      %v4193 = vsel %vm718, %v4147, 0
      %v4196 = vsel %vm718, %v4150, 0
      %v4199 = vsel %vm718, %v4153, 0
      %v4202 = vsel %vm718, %v4156, 0
      %v4205 = vsel %vm718, %v4159, 0
      %v4208 = vsel %vm718, %v4162, 0
      %v4211 = vsel %vm718, %v4165, 0
      %v4214 = vsel %vm718, %v4168, 0
      %v4217 = vsel %vm718, %v4171, 0
      %v4220 = vsel %vm718, %v4174, 0
      %v4223 = vsel %vm718, %v4177, 0
      %v4226 = vsel %vm718, %v4180, 0
      %v4229 = vsel %vm718, %v4183, 0
      %v4232 = vsel %vm718, %v4186, 0
      %v4235 = vsel %vm718, %v4189, 0
      %v4238 = vsel %vm767, %v4191, 0
      %4240 = vmatprep.subr.bf16.mxu0 0
      %4241 = vmatpush1.bf16.msra.mxu0 0
      %4242 = vmatprep.subr.bf16.mxu0 0
      %4243 = vmatpush1.bf16.msra.mxu0 0
      %4244 = vmatprep.subr.bf16.mxu0 0
      %4245 = vmatpush1.bf16.msra.mxu0 0
      %4246 = vmatprep.subr.bf16.mxu0 0
      %4247 = vmatpush1.bf16.msra.mxu0 0
      %4248 = vmatprep.subr.bf16.mxu0 0
      %4249 = vmatpush1.bf16.msra.mxu0 0
      %4250 = vmatprep.subr.bf16.mxu0 0
      %4251 = vmatpush1.bf16.msra.mxu0 0
      %4252 = vmatprep.subr.bf16.mxu0 0
      %4253 = vmatpush1.bf16.msra.mxu0 0
      %4254 = vmatprep.subr.bf16.mxu0 0
      %4255 = vmatpush1.bf16.msra.mxu0 %v4238
      %4256 = vmatprep.subr.bf16.mxu0 0
      %4257 = vmatpush2.bf16.msra.mxu0 0
      %4258 = vmatprep.subr.bf16.mxu0 0
      %4259 = vmatpush2.bf16.msra.mxu0 0
      %4260 = vmatprep.subr.bf16.mxu0 0
      %4261 = vmatpush2.bf16.msra.mxu0 0
      %4262 = vmatprep.subr.bf16.mxu0 0
      %4263 = vmatpush2.bf16.msra.mxu0 0
      %4264 = vmatprep.subr.bf16.mxu0 0
      %4265 = vmatpush2.bf16.msra.mxu0 0
      %4266 = vmatprep.subr.bf16.mxu0 0
      %4267 = vmatpush2.bf16.msra.mxu0 0
      %4268 = vmatprep.subr.bf16.mxu0 0
      %4269 = vmatpush2.bf16.msra.mxu0 0
      %4270 = vmatprep.subr.bf16.mxu0 0
      %4271 = vmatpush2.bf16.msra.mxu0 0
      %4272 = vmatprep.mubr.bf16.mxu0 0
      %4273 = vmatmul.mubr.bf16.gmra.mxu0 %v4193
      %v4274 = vpop.f32.mrf.mxu0
      %v4275 = vadd.f32 0.0, %v4274
      %v4276 = vpop.f32.mrf.mxu0
      %v4277 = vpop.f32.mrf.mxu0
      %v4278 = vadd.f32 0.0, %v4277
      %v4279 = vpop.f32.mrf.mxu0
      %4280 = vmatprep.mubr.bf16.mxu0 0
      %4281 = vmatmul.mubr.bf16.gmra.mxu0 %v4196
      %v4282 = vpop.f32.mrf.mxu0
      %v4283 = vadd.f32 0.0, %v4282
      %v4284 = vpop.f32.mrf.mxu0
      %v4285 = vpop.f32.mrf.mxu0
      %v4286 = vadd.f32 0.0, %v4285
      %v4287 = vpop.f32.mrf.mxu0
      %4288 = vmatprep.mubr.bf16.mxu0 0
      %4289 = vmatmul.mubr.bf16.gmra.mxu0 %v4193
      %v4290 = vpop.f32.mrf.mxu0
      %v4291 = vadd.f32 0.0, %v4290
      %v4292 = vpop.f32.mrf.mxu0
      %v4293 = vpop.f32.mrf.mxu0
      %v4294 = vadd.f32 0.0, %v4293
      %v4295 = vpop.f32.mrf.mxu0
      %4296 = vmatprep.mubr.bf16.mxu0 0
      %4297 = vmatmul.mubr.bf16.gmra.mxu0 %v4199
      %v4298 = vpop.f32.mrf.mxu0
      %v4299 = vadd.f32 0.0, %v4298
      %v4300 = vpop.f32.mrf.mxu0
      %v4301 = vpop.f32.mrf.mxu0
      %v4302 = vadd.f32 0.0, %v4301
      %v4303 = vpop.f32.mrf.mxu0
      %4304 = vmatprep.mubr.bf16.mxu0 0
      %4305 = vmatmul.mubr.bf16.gmra.mxu0 %v4202
      %v4306 = vpop.f32.mrf.mxu0
      %v4307 = vadd.f32 0.0, %v4306
      %v4308 = vpop.f32.mrf.mxu0
      %v4309 = vpop.f32.mrf.mxu0
      %v4310 = vadd.f32 0.0, %v4309
      %v4311 = vpop.f32.mrf.mxu0
      %4312 = vmatprep.mubr.bf16.mxu0 0
      %4313 = vmatmul.mubr.bf16.gmra.mxu0 %v4205
      %v4314 = vpop.f32.mrf.mxu0
      %v4315 = vadd.f32 0.0, %v4314
      %v4316 = vpop.f32.mrf.mxu0
      %v4317 = vpop.f32.mrf.mxu0
      %v4318 = vadd.f32 0.0, %v4317
      %v4319 = vpop.f32.mrf.mxu0
      %4320 = vmatprep.mubr.bf16.mxu0 0
      %4321 = vmatmul.mubr.bf16.gmra.mxu0 %v4208
      %v4322 = vpop.f32.mrf.mxu0
      %v4323 = vadd.f32 0.0, %v4322
      %v4324 = vpop.f32.mrf.mxu0
      %v4325 = vpop.f32.mrf.mxu0
      %v4326 = vadd.f32 0.0, %v4325
      %v4327 = vpop.f32.mrf.mxu0
      %4328 = vmatprep.mubr.bf16.mxu0 0
      %4329 = vmatmul.mubr.bf16.gmra.mxu0 %v4211
      %v4330 = vpop.f32.mrf.mxu0
      %v4331 = vadd.f32 0.0, %v4330
      %v4332 = vpop.f32.mrf.mxu0
      %v4333 = vpop.f32.mrf.mxu0
      %v4334 = vadd.f32 0.0, %v4333
      %v4335 = vpop.f32.mrf.mxu0
      %4336 = vmatprep.mubr.bf16.mxu0 0
      %4337 = vmatmul.mubr.bf16.gmra.mxu0 %v4214
      %v4338 = vpop.f32.mrf.mxu0
      %v4339 = vadd.f32 0.0, %v4338
      %v4340 = vpop.f32.mrf.mxu0
      %v4341 = vpop.f32.mrf.mxu0
      %v4342 = vadd.f32 0.0, %v4341
      %v4343 = vpop.f32.mrf.mxu0
      %4344 = vmatprep.mubr.bf16.mxu0 0
      %4345 = vmatmul.mubr.bf16.gmra.mxu0 %v4217
      %v4346 = vpop.f32.mrf.mxu0
      %v4347 = vadd.f32 0.0, %v4346
      %v4348 = vpop.f32.mrf.mxu0
      %v4349 = vpop.f32.mrf.mxu0
      %v4350 = vadd.f32 0.0, %v4349
      %v4351 = vpop.f32.mrf.mxu0
      %4352 = vmatprep.mubr.bf16.mxu0 0
      %4353 = vmatmul.mubr.bf16.gmra.mxu0 %v4220
      %v4354 = vpop.f32.mrf.mxu0
      %v4355 = vadd.f32 0.0, %v4354
      %v4356 = vpop.f32.mrf.mxu0
      %v4357 = vpop.f32.mrf.mxu0
      %v4358 = vadd.f32 0.0, %v4357
      %v4359 = vpop.f32.mrf.mxu0
      %4360 = vmatprep.mubr.bf16.mxu0 0
      %4361 = vmatmul.mubr.bf16.gmra.mxu0 %v4223
      %v4362 = vpop.f32.mrf.mxu0
      %v4363 = vadd.f32 0.0, %v4362
      %v4364 = vpop.f32.mrf.mxu0
      %v4365 = vpop.f32.mrf.mxu0
      %v4366 = vadd.f32 0.0, %v4365
      %v4367 = vpop.f32.mrf.mxu0
      %4368 = vmatprep.mubr.bf16.mxu0 0
      %4369 = vmatmul.mubr.bf16.gmra.mxu0 %v4226
      %v4370 = vpop.f32.mrf.mxu0
      %v4371 = vadd.f32 0.0, %v4370
      %v4372 = vpop.f32.mrf.mxu0
      %v4373 = vpop.f32.mrf.mxu0
      %v4374 = vadd.f32 0.0, %v4373
      %v4375 = vpop.f32.mrf.mxu0
      %4376 = vmatprep.mubr.bf16.mxu0 0
      %4377 = vmatmul.mubr.bf16.gmra.mxu0 %v4229
      %v4378 = vpop.f32.mrf.mxu0
      %v4379 = vadd.f32 0.0, %v4378
      %v4380 = vpop.f32.mrf.mxu0
      %v4381 = vpop.f32.mrf.mxu0
      %v4382 = vadd.f32 0.0, %v4381
      %v4383 = vpop.f32.mrf.mxu0
      %4384 = vmatprep.mubr.bf16.mxu0 0
      %4385 = vmatmul.mubr.bf16.gmra.mxu0 %v4232
      %v4386 = vpop.f32.mrf.mxu0
      %v4387 = vadd.f32 0.0, %v4386
      %v4388 = vpop.f32.mrf.mxu0
      %v4389 = vpop.f32.mrf.mxu0
      %v4390 = vadd.f32 0.0, %v4389
      %v4391 = vpop.f32.mrf.mxu0
      %4392 = vmatprep.mubr.bf16.mxu0 0
      %4393 = vmatmul.mubr.bf16.gmra.mxu0 %v4235
      %v4394 = vpop.f32.mrf.mxu0
      %v4395 = vadd.f32 0.0, %v4394
      %v4396 = vpop.f32.mrf.mxu0
      %v4397 = vpop.f32.mrf.mxu0
      %v4398 = vadd.f32 0.0, %v4397
      %v4399 = vpop.f32.mrf.mxu0
      %4400 = vdwg.mxu0
      %v4401 = vadd.f32 %v3988, %v4275
      %v4402 = vadd.f32 %v3991, %v4278
      %v4403 = vadd.f32 %v3996, %v4283
      %v4404 = vadd.f32 %v3999, %v4286
      %v4405 = vadd.f32 %v4004, %v4291
      %v4406 = vadd.f32 %v4007, %v4294
      %v4407 = vadd.f32 %v4012, %v4299
      %v4408 = vadd.f32 %v4015, %v4302
      %v4409 = vadd.f32 %v4020, %v4307
      %v4410 = vadd.f32 %v4023, %v4310
      %v4411 = vadd.f32 %v4028, %v4315
      %v4412 = vadd.f32 %v4031, %v4318
      %v4413 = vadd.f32 %v4036, %v4323
      %v4414 = vadd.f32 %v4039, %v4326
      %v4415 = vadd.f32 %v4044, %v4331
      %v4416 = vadd.f32 %v4047, %v4334
      %v4417 = vadd.f32 %v4052, %v4339
      %v4418 = vadd.f32 %v4055, %v4342
      %v4419 = vadd.f32 %v4060, %v4347
      %v4420 = vadd.f32 %v4063, %v4350
      %v4421 = vadd.f32 %v4068, %v4355
      %v4422 = vadd.f32 %v4071, %v4358
      %v4423 = vadd.f32 %v4076, %v4363
      %v4424 = vadd.f32 %v4079, %v4366
      %v4425 = vadd.f32 %v4084, %v4371
      %v4426 = vadd.f32 %v4087, %v4374
      %v4427 = vadd.f32 %v4092, %v4379
      %v4428 = vadd.f32 %v4095, %v4382
      %v4429 = vadd.f32 %v4100, %v4387
      %v4430 = vadd.f32 %v4103, %v4390
      %v4431 = vadd.f32 %v4108, %v4395
      %v4432 = vadd.f32 %v4111, %v4398
      %s4433 = scalar_lea.vmem %s3, 6
      %v4434 = vld [vmem:[%s4433] sm:$0x3]
      %v4436 = vsel %vm718, %v3510, 0
      %v4439 = vsel %vm767, %v4434, 0
      %4441 = vmatprep.subr.bf16.mxu0 0
      %4442 = vmatpush1.bf16.msra.mxu0 0
      %4443 = vmatprep.subr.bf16.mxu0 0
      %4444 = vmatpush1.bf16.msra.mxu0 0
      %4445 = vmatprep.subr.bf16.mxu0 0
      %4446 = vmatpush1.bf16.msra.mxu0 0
      %4447 = vmatprep.subr.bf16.mxu0 0
      %4448 = vmatpush1.bf16.msra.mxu0 0
      %4449 = vmatprep.subr.bf16.mxu0 0
      %4450 = vmatpush1.bf16.msra.mxu0 0
      %4451 = vmatprep.subr.bf16.mxu0 0
      %4452 = vmatpush1.bf16.msra.mxu0 0
      %4453 = vmatprep.subr.bf16.mxu0 0
      %4454 = vmatpush1.bf16.msra.mxu0 0
      %4455 = vmatprep.subr.bf16.mxu0 0
      %4456 = vmatpush1.bf16.msra.mxu0 %v4439
      %4457 = vmatprep.subr.bf16.mxu0 0
      %4458 = vmatpush2.bf16.msra.mxu0 0
      %4459 = vmatprep.subr.bf16.mxu0 0
      %4460 = vmatpush2.bf16.msra.mxu0 0
      %4461 = vmatprep.subr.bf16.mxu0 0
      %4462 = vmatpush2.bf16.msra.mxu0 0
      %4463 = vmatprep.subr.bf16.mxu0 0
      %4464 = vmatpush2.bf16.msra.mxu0 0
      %4465 = vmatprep.subr.bf16.mxu0 0
      %4466 = vmatpush2.bf16.msra.mxu0 0
      %4467 = vmatprep.subr.bf16.mxu0 0
      %4468 = vmatpush2.bf16.msra.mxu0 0
      %4469 = vmatprep.subr.bf16.mxu0 0
      %4470 = vmatpush2.bf16.msra.mxu0 0
      %4471 = vmatprep.subr.bf16.mxu0 0
      %4472 = vmatpush2.bf16.msra.mxu0 0
      %4473 = vmatprep.mubr.bf16.mxu0 0
      %4474 = vmatmul.mubr.bf16.gmra.mxu0 %v3922
      %v4475 = vpop.f32.mrf.mxu0
      %v4476 = vadd.f32 0.0, %v4475
      %v4477 = vpop.f32.mrf.mxu0
      %v4478 = vpop.f32.mrf.mxu0
      %v4479 = vadd.f32 0.0, %v4478
      %v4480 = vpop.f32.mrf.mxu0
      %4481 = vmatprep.mubr.bf16.mxu0 0
      %4482 = vmatmul.mubr.bf16.gmra.mxu0 %v3920
      %v4483 = vpop.f32.mrf.mxu0
      %v4484 = vadd.f32 0.0, %v4483
      %v4485 = vpop.f32.mrf.mxu0
      %v4486 = vpop.f32.mrf.mxu0
      %v4487 = vadd.f32 0.0, %v4486
      %v4488 = vpop.f32.mrf.mxu0
      %4489 = vmatprep.mubr.bf16.mxu0 0
      %4490 = vmatmul.mubr.bf16.gmra.mxu0 %v3924
      %v4491 = vpop.f32.mrf.mxu0
      %v4492 = vadd.f32 0.0, %v4491
      %v4493 = vpop.f32.mrf.mxu0
      %v4494 = vpop.f32.mrf.mxu0
      %v4495 = vadd.f32 0.0, %v4494
      %v4496 = vpop.f32.mrf.mxu0
      %4497 = vmatprep.mubr.bf16.mxu0 0
      %4498 = vmatmul.mubr.bf16.gmra.mxu0 %v3926
      %v4499 = vpop.f32.mrf.mxu0
      %v4500 = vadd.f32 0.0, %v4499
      %v4501 = vpop.f32.mrf.mxu0
      %v4502 = vpop.f32.mrf.mxu0
      %v4503 = vadd.f32 0.0, %v4502
      %v4504 = vpop.f32.mrf.mxu0
      %4505 = vmatprep.mubr.bf16.mxu0 0
      %4506 = vmatmul.mubr.bf16.gmra.mxu0 %v3928
      %v4507 = vpop.f32.mrf.mxu0
      %v4508 = vadd.f32 0.0, %v4507
      %v4509 = vpop.f32.mrf.mxu0
      %v4510 = vpop.f32.mrf.mxu0
      %v4511 = vadd.f32 0.0, %v4510
      %v4512 = vpop.f32.mrf.mxu0
      %4513 = vmatprep.mubr.bf16.mxu0 0
      %4514 = vmatmul.mubr.bf16.gmra.mxu0 %v3930
      %v4515 = vpop.f32.mrf.mxu0
      %v4516 = vadd.f32 0.0, %v4515
      %v4517 = vpop.f32.mrf.mxu0
      %v4518 = vpop.f32.mrf.mxu0
      %v4519 = vadd.f32 0.0, %v4518
      %v4520 = vpop.f32.mrf.mxu0
      %4521 = vmatprep.mubr.bf16.mxu0 0
      %4522 = vmatmul.mubr.bf16.gmra.mxu0 %v3932
      %v4523 = vpop.f32.mrf.mxu0
      %v4524 = vadd.f32 0.0, %v4523
      %v4525 = vpop.f32.mrf.mxu0
      %v4526 = vpop.f32.mrf.mxu0
      %v4527 = vadd.f32 0.0, %v4526
      %v4528 = vpop.f32.mrf.mxu0
      %4529 = vmatprep.mubr.bf16.mxu0 0
      %4530 = vmatmul.mubr.bf16.gmra.mxu0 %v3934
      %v4531 = vpop.f32.mrf.mxu0
      %v4532 = vadd.f32 0.0, %v4531
      %v4533 = vpop.f32.mrf.mxu0
      %v4534 = vpop.f32.mrf.mxu0
      %v4535 = vadd.f32 0.0, %v4534
      %v4536 = vpop.f32.mrf.mxu0
      %4537 = vmatprep.mubr.bf16.mxu0 0
      %4538 = vmatmul.mubr.bf16.gmra.mxu0 %v3936
      %v4539 = vpop.f32.mrf.mxu0
      %v4540 = vadd.f32 0.0, %v4539
      %v4541 = vpop.f32.mrf.mxu0
      %v4542 = vpop.f32.mrf.mxu0
      %v4543 = vadd.f32 0.0, %v4542
      %v4544 = vpop.f32.mrf.mxu0
      %4545 = vmatprep.mubr.bf16.mxu0 0
      %4546 = vmatmul.mubr.bf16.gmra.mxu0 %v3938
      %v4547 = vpop.f32.mrf.mxu0
      %v4548 = vadd.f32 0.0, %v4547
      %v4549 = vpop.f32.mrf.mxu0
      %v4550 = vpop.f32.mrf.mxu0
      %v4551 = vadd.f32 0.0, %v4550
      %v4552 = vpop.f32.mrf.mxu0
      %4553 = vmatprep.mubr.bf16.mxu0 0
      %4554 = vmatmul.mubr.bf16.gmra.mxu0 %v3940
      %v4555 = vpop.f32.mrf.mxu0
      %v4556 = vadd.f32 0.0, %v4555
      %v4557 = vpop.f32.mrf.mxu0
      %v4558 = vpop.f32.mrf.mxu0
      %v4559 = vadd.f32 0.0, %v4558
      %v4560 = vpop.f32.mrf.mxu0
      %4561 = vmatprep.mubr.bf16.mxu0 0
      %4562 = vmatmul.mubr.bf16.gmra.mxu0 %v3942
      %v4563 = vpop.f32.mrf.mxu0
      %v4564 = vadd.f32 0.0, %v4563
      %v4565 = vpop.f32.mrf.mxu0
      %v4566 = vpop.f32.mrf.mxu0
      %v4567 = vadd.f32 0.0, %v4566
      %v4568 = vpop.f32.mrf.mxu0
      %4569 = vmatprep.mubr.bf16.mxu0 0
      %4570 = vmatmul.mubr.bf16.gmra.mxu0 %v3944
      %v4571 = vpop.f32.mrf.mxu0
      %v4572 = vadd.f32 0.0, %v4571
      %v4573 = vpop.f32.mrf.mxu0
      %v4574 = vpop.f32.mrf.mxu0
      %v4575 = vadd.f32 0.0, %v4574
      %v4576 = vpop.f32.mrf.mxu0
      %4577 = vmatprep.mubr.bf16.mxu0 0
      %4578 = vmatmul.mubr.bf16.gmra.mxu0 %v3946
      %v4579 = vpop.f32.mrf.mxu0
      %v4580 = vadd.f32 0.0, %v4579
      %v4581 = vpop.f32.mrf.mxu0
      %v4582 = vpop.f32.mrf.mxu0
      %v4583 = vadd.f32 0.0, %v4582
      %v4584 = vpop.f32.mrf.mxu0
      %4585 = vmatprep.mubr.bf16.mxu0 0
      %4586 = vmatmul.mubr.bf16.gmra.mxu0 %v3948
      %v4587 = vpop.f32.mrf.mxu0
      %v4588 = vadd.f32 0.0, %v4587
      %v4589 = vpop.f32.mrf.mxu0
      %v4590 = vpop.f32.mrf.mxu0
      %v4591 = vadd.f32 0.0, %v4590
      %v4592 = vpop.f32.mrf.mxu0
      %4593 = vmatprep.mubr.bf16.mxu0 0
      %4594 = vmatmul.mubr.bf16.gmra.mxu0 %v4436
      %v4595 = vpop.f32.mrf.mxu0
      %v4596 = vadd.f32 0.0, %v4595
      %v4597 = vpop.f32.mrf.mxu0
      %v4598 = vpop.f32.mrf.mxu0
      %v4599 = vadd.f32 0.0, %v4598
      %v4600 = vpop.f32.mrf.mxu0
      %4601 = vdwg.mxu0
      %v4602 = vadd.f32 %v4401, %v4476
      %v4603 = vadd.f32 %v4402, %v4479
      %v4604 = vadd.f32 %v4403, %v4484
      %v4605 = vadd.f32 %v4404, %v4487
      %v4606 = vadd.f32 %v4405, %v4492
      %v4607 = vadd.f32 %v4406, %v4495
      %v4608 = vadd.f32 %v4407, %v4500
      %v4609 = vadd.f32 %v4408, %v4503
      %v4610 = vadd.f32 %v4409, %v4508
      %v4611 = vadd.f32 %v4410, %v4511
      %v4612 = vadd.f32 %v4411, %v4516
      %v4613 = vadd.f32 %v4412, %v4519
      %v4614 = vadd.f32 %v4413, %v4524
      %v4615 = vadd.f32 %v4414, %v4527
      %v4616 = vadd.f32 %v4415, %v4532
      %v4617 = vadd.f32 %v4416, %v4535
      %v4618 = vadd.f32 %v4417, %v4540
      %v4619 = vadd.f32 %v4418, %v4543
      %v4620 = vadd.f32 %v4419, %v4548
      %v4621 = vadd.f32 %v4420, %v4551
      %v4622 = vadd.f32 %v4421, %v4556
      %v4623 = vadd.f32 %v4422, %v4559
      %v4624 = vadd.f32 %v4423, %v4564
      %v4625 = vadd.f32 %v4424, %v4567
      %v4626 = vadd.f32 %v4425, %v4572
      %v4627 = vadd.f32 %v4426, %v4575
      %v4628 = vadd.f32 %v4427, %v4580
      %v4629 = vadd.f32 %v4428, %v4583
      %v4630 = vadd.f32 %v4429, %v4588
      %v4631 = vadd.f32 %v4430, %v4591
      %v4632 = vadd.f32 %v4431, %v4596
      %v4633 = vadd.f32 %v4432, %v4599
      %v4634 = vshrl.u32 %v3510, 16
      %v4636 = vshll.u32 %v3510, 16
      %v4638 = vrot.slane %v4636, 1
      %v4639 = vor.u32 %v4634, %v4638
      %v4641 = vshll.u32 %v3526, 16
      %v4643 = vrot.slane %v4641, 1
      %v4644 = vsel %vm3528, %v4639, %v4643
      %s4645 = scalar_lea.vmem %s3, 8
      %v4646 = vld [vmem:[%s4645] sm:$0x3]
      %v4648 = vsel %vm718, %v4644, 0
      %v4651 = vsel %vm767, %v4646, 0
      %4653 = vmatprep.subr.bf16.mxu0 0
      %4654 = vmatpush1.bf16.msra.mxu0 0
      %4655 = vmatprep.subr.bf16.mxu0 0
      %4656 = vmatpush1.bf16.msra.mxu0 0
      %4657 = vmatprep.subr.bf16.mxu0 0
      %4658 = vmatpush1.bf16.msra.mxu0 0
      %4659 = vmatprep.subr.bf16.mxu0 0
      %4660 = vmatpush1.bf16.msra.mxu0 0
      %4661 = vmatprep.subr.bf16.mxu0 0
      %4662 = vmatpush1.bf16.msra.mxu0 0
      %4663 = vmatprep.subr.bf16.mxu0 0
      %4664 = vmatpush1.bf16.msra.mxu0 0
      %4665 = vmatprep.subr.bf16.mxu0 0
      %4666 = vmatpush1.bf16.msra.mxu0 0
      %4667 = vmatprep.subr.bf16.mxu0 0
      %4668 = vmatpush1.bf16.msra.mxu0 %v4651
      %4669 = vmatprep.subr.bf16.mxu0 0
      %4670 = vmatpush2.bf16.msra.mxu0 0
      %4671 = vmatprep.subr.bf16.mxu0 0
      %4672 = vmatpush2.bf16.msra.mxu0 0
      %4673 = vmatprep.subr.bf16.mxu0 0
      %4674 = vmatpush2.bf16.msra.mxu0 0
      %4675 = vmatprep.subr.bf16.mxu0 0
      %4676 = vmatpush2.bf16.msra.mxu0 0
      %4677 = vmatprep.subr.bf16.mxu0 0
      %4678 = vmatpush2.bf16.msra.mxu0 0
      %4679 = vmatprep.subr.bf16.mxu0 0
      %4680 = vmatpush2.bf16.msra.mxu0 0
      %4681 = vmatprep.subr.bf16.mxu0 0
      %4682 = vmatpush2.bf16.msra.mxu0 0
      %4683 = vmatprep.subr.bf16.mxu0 0
      %4684 = vmatpush2.bf16.msra.mxu0 0
      %4685 = vmatprep.mubr.bf16.mxu0 0
      %4686 = vmatmul.mubr.bf16.gmra.mxu0 %v3715
      %v4687 = vpop.f32.mrf.mxu0
      %v4688 = vadd.f32 0.0, %v4687
      %v4689 = vpop.f32.mrf.mxu0
      %v4690 = vpop.f32.mrf.mxu0
      %v4691 = vadd.f32 0.0, %v4690
      %v4692 = vpop.f32.mrf.mxu0
      %4693 = vmatprep.mubr.bf16.mxu0 0
      %4694 = vmatmul.mubr.bf16.gmra.mxu0 %v3712
      %v4695 = vpop.f32.mrf.mxu0
      %v4696 = vadd.f32 0.0, %v4695
      %v4697 = vpop.f32.mrf.mxu0
      %v4698 = vpop.f32.mrf.mxu0
      %v4699 = vadd.f32 0.0, %v4698
      %v4700 = vpop.f32.mrf.mxu0
      %4701 = vmatprep.mubr.bf16.mxu0 0
      %4702 = vmatmul.mubr.bf16.gmra.mxu0 %v3718
      %v4703 = vpop.f32.mrf.mxu0
      %v4704 = vadd.f32 0.0, %v4703
      %v4705 = vpop.f32.mrf.mxu0
      %v4706 = vpop.f32.mrf.mxu0
      %v4707 = vadd.f32 0.0, %v4706
      %v4708 = vpop.f32.mrf.mxu0
      %4709 = vmatprep.mubr.bf16.mxu0 0
      %4710 = vmatmul.mubr.bf16.gmra.mxu0 %v3721
      %v4711 = vpop.f32.mrf.mxu0
      %v4712 = vadd.f32 0.0, %v4711
      %v4713 = vpop.f32.mrf.mxu0
      %v4714 = vpop.f32.mrf.mxu0
      %v4715 = vadd.f32 0.0, %v4714
      %v4716 = vpop.f32.mrf.mxu0
      %4717 = vmatprep.mubr.bf16.mxu0 0
      %4718 = vmatmul.mubr.bf16.gmra.mxu0 %v3724
      %v4719 = vpop.f32.mrf.mxu0
      %v4720 = vadd.f32 0.0, %v4719
      %v4721 = vpop.f32.mrf.mxu0
      %v4722 = vpop.f32.mrf.mxu0
      %v4723 = vadd.f32 0.0, %v4722
      %v4724 = vpop.f32.mrf.mxu0
      %4725 = vmatprep.mubr.bf16.mxu0 0
      %4726 = vmatmul.mubr.bf16.gmra.mxu0 %v3727
      %v4727 = vpop.f32.mrf.mxu0
      %v4728 = vadd.f32 0.0, %v4727
      %v4729 = vpop.f32.mrf.mxu0
      %v4730 = vpop.f32.mrf.mxu0
      %v4731 = vadd.f32 0.0, %v4730
      %v4732 = vpop.f32.mrf.mxu0
      %4733 = vmatprep.mubr.bf16.mxu0 0
      %4734 = vmatmul.mubr.bf16.gmra.mxu0 %v3730
      %v4735 = vpop.f32.mrf.mxu0
      %v4736 = vadd.f32 0.0, %v4735
      %v4737 = vpop.f32.mrf.mxu0
      %v4738 = vpop.f32.mrf.mxu0
      %v4739 = vadd.f32 0.0, %v4738
      %v4740 = vpop.f32.mrf.mxu0
      %4741 = vmatprep.mubr.bf16.mxu0 0
      %4742 = vmatmul.mubr.bf16.gmra.mxu0 %v3733
      %v4743 = vpop.f32.mrf.mxu0
      %v4744 = vadd.f32 0.0, %v4743
      %v4745 = vpop.f32.mrf.mxu0
      %v4746 = vpop.f32.mrf.mxu0
      %v4747 = vadd.f32 0.0, %v4746
      %v4748 = vpop.f32.mrf.mxu0
      %4749 = vmatprep.mubr.bf16.mxu0 0
      %4750 = vmatmul.mubr.bf16.gmra.mxu0 %v3736
      %v4751 = vpop.f32.mrf.mxu0
      %v4752 = vadd.f32 0.0, %v4751
      %v4753 = vpop.f32.mrf.mxu0
      %v4754 = vpop.f32.mrf.mxu0
      %v4755 = vadd.f32 0.0, %v4754
      %v4756 = vpop.f32.mrf.mxu0
      %4757 = vmatprep.mubr.bf16.mxu0 0
      %4758 = vmatmul.mubr.bf16.gmra.mxu0 %v3739
      %v4759 = vpop.f32.mrf.mxu0
      %v4760 = vadd.f32 0.0, %v4759
      %v4761 = vpop.f32.mrf.mxu0
      %v4762 = vpop.f32.mrf.mxu0
      %v4763 = vadd.f32 0.0, %v4762
      %v4764 = vpop.f32.mrf.mxu0
      %4765 = vmatprep.mubr.bf16.mxu0 0
      %4766 = vmatmul.mubr.bf16.gmra.mxu0 %v3742
      %v4767 = vpop.f32.mrf.mxu0
      %v4768 = vadd.f32 0.0, %v4767
      %v4769 = vpop.f32.mrf.mxu0
      %v4770 = vpop.f32.mrf.mxu0
      %v4771 = vadd.f32 0.0, %v4770
      %v4772 = vpop.f32.mrf.mxu0
      %4773 = vmatprep.mubr.bf16.mxu0 0
      %4774 = vmatmul.mubr.bf16.gmra.mxu0 %v3745
      %v4775 = vpop.f32.mrf.mxu0
      %v4776 = vadd.f32 0.0, %v4775
      %v4777 = vpop.f32.mrf.mxu0
      %v4778 = vpop.f32.mrf.mxu0
      %v4779 = vadd.f32 0.0, %v4778
      %v4780 = vpop.f32.mrf.mxu0
      %4781 = vmatprep.mubr.bf16.mxu0 0
      %4782 = vmatmul.mubr.bf16.gmra.mxu0 %v3748
      %v4783 = vpop.f32.mrf.mxu0
      %v4784 = vadd.f32 0.0, %v4783
      %v4785 = vpop.f32.mrf.mxu0
      %v4786 = vpop.f32.mrf.mxu0
      %v4787 = vadd.f32 0.0, %v4786
      %v4788 = vpop.f32.mrf.mxu0
      %4789 = vmatprep.mubr.bf16.mxu0 0
      %4790 = vmatmul.mubr.bf16.gmra.mxu0 %v3751
      %v4791 = vpop.f32.mrf.mxu0
      %v4792 = vadd.f32 0.0, %v4791
      %v4793 = vpop.f32.mrf.mxu0
      %v4794 = vpop.f32.mrf.mxu0
      %v4795 = vadd.f32 0.0, %v4794
      %v4796 = vpop.f32.mrf.mxu0
      %4797 = vmatprep.mubr.bf16.mxu0 0
      %4798 = vmatmul.mubr.bf16.gmra.mxu0 %v3754
      %v4799 = vpop.f32.mrf.mxu0
      %v4800 = vadd.f32 0.0, %v4799
      %v4801 = vpop.f32.mrf.mxu0
      %v4802 = vpop.f32.mrf.mxu0
      %v4803 = vadd.f32 0.0, %v4802
      %v4804 = vpop.f32.mrf.mxu0
      %4805 = vmatprep.mubr.bf16.mxu0 0
      %4806 = vmatmul.mubr.bf16.gmra.mxu0 %v4648
      %v4807 = vpop.f32.mrf.mxu0
      %v4808 = vadd.f32 0.0, %v4807
      %v4809 = vpop.f32.mrf.mxu0
      %v4810 = vpop.f32.mrf.mxu0
      %v4811 = vadd.f32 0.0, %v4810
      %v4812 = vpop.f32.mrf.mxu0
      %4813 = vdwg.mxu0
      %v4814 = vadd.f32 %v4602, %v4688
      %v4815 = vadd.f32 %v4603, %v4691
      %v4816 = vadd.f32 %v4604, %v4696
      %v4817 = vadd.f32 %v4605, %v4699
      %v4818 = vadd.f32 %v4606, %v4704
      %v4819 = vadd.f32 %v4607, %v4707
      %v4820 = vadd.f32 %v4608, %v4712
      %v4821 = vadd.f32 %v4609, %v4715
      %v4822 = vadd.f32 %v4610, %v4720
      %v4823 = vadd.f32 %v4611, %v4723
      %v4824 = vadd.f32 %v4612, %v4728
      %v4825 = vadd.f32 %v4613, %v4731
      %v4826 = vadd.f32 %v4614, %v4736
      %v4827 = vadd.f32 %v4615, %v4739
      %v4828 = vadd.f32 %v4616, %v4744
      %v4829 = vadd.f32 %v4617, %v4747
      %v4830 = vadd.f32 %v4618, %v4752
      %v4831 = vadd.f32 %v4619, %v4755
      %v4832 = vadd.f32 %v4620, %v4760
      %v4833 = vadd.f32 %v4621, %v4763
      %v4834 = vadd.f32 %v4622, %v4768
      %v4835 = vadd.f32 %v4623, %v4771
      %v4836 = vadd.f32 %v4624, %v4776
      %v4837 = vadd.f32 %v4625, %v4779
      %v4838 = vadd.f32 %v4626, %v4784
      %v4839 = vadd.f32 %v4627, %v4787
      %v4840 = vadd.f32 %v4628, %v4792
      %v4841 = vadd.f32 %v4629, %v4795
      %v4842 = vadd.f32 %v4630, %v4800
      %v4843 = vadd.f32 %v4631, %v4803
      %v4844 = vadd.f32 %v4632, %v4808
      %v4845 = vadd.f32 %v4633, %v4811
      %v4848 = vrot.slane %v3510, 1
      %v4849 = vrot.slane %v3526, 1
      %v4850 = vsel %vm4144, %v4848, %v4849
      %s4851 = scalar_lea.vmem %s3, 10
      %v4852 = vld [vmem:[%s4851] sm:$0x3]
      %v4854 = vsel %vm718, %v4850, 0
      %v4857 = vsel %vm767, %v4852, 0
      %4859 = vmatprep.subr.bf16.mxu0 0
      %4860 = vmatpush1.bf16.msra.mxu0 0
      %4861 = vmatprep.subr.bf16.mxu0 0
      %4862 = vmatpush1.bf16.msra.mxu0 0
      %4863 = vmatprep.subr.bf16.mxu0 0
      %4864 = vmatpush1.bf16.msra.mxu0 0
      %4865 = vmatprep.subr.bf16.mxu0 0
      %4866 = vmatpush1.bf16.msra.mxu0 0
      %4867 = vmatprep.subr.bf16.mxu0 0
      %4868 = vmatpush1.bf16.msra.mxu0 0
      %4869 = vmatprep.subr.bf16.mxu0 0
      %4870 = vmatpush1.bf16.msra.mxu0 0
      %4871 = vmatprep.subr.bf16.mxu0 0
      %4872 = vmatpush1.bf16.msra.mxu0 0
      %4873 = vmatprep.subr.bf16.mxu0 0
      %4874 = vmatpush1.bf16.msra.mxu0 %v4857
      %4875 = vmatprep.subr.bf16.mxu0 0
      %4876 = vmatpush2.bf16.msra.mxu0 0
      %4877 = vmatprep.subr.bf16.mxu0 0
      %4878 = vmatpush2.bf16.msra.mxu0 0
      %4879 = vmatprep.subr.bf16.mxu0 0
      %4880 = vmatpush2.bf16.msra.mxu0 0
      %4881 = vmatprep.subr.bf16.mxu0 0
      %4882 = vmatpush2.bf16.msra.mxu0 0
      %4883 = vmatprep.subr.bf16.mxu0 0
      %4884 = vmatpush2.bf16.msra.mxu0 0
      %4885 = vmatprep.subr.bf16.mxu0 0
      %4886 = vmatpush2.bf16.msra.mxu0 0
      %4887 = vmatprep.subr.bf16.mxu0 0
      %4888 = vmatpush2.bf16.msra.mxu0 0
      %4889 = vmatprep.subr.bf16.mxu0 0
      %4890 = vmatpush2.bf16.msra.mxu0 0
      %4891 = vmatprep.mubr.bf16.mxu0 0
      %4892 = vmatmul.mubr.bf16.gmra.mxu0 %v4196
      %v4893 = vpop.f32.mrf.mxu0
      %v4894 = vadd.f32 0.0, %v4893
      %v4895 = vpop.f32.mrf.mxu0
      %v4896 = vpop.f32.mrf.mxu0
      %v4897 = vadd.f32 0.0, %v4896
      %v4898 = vpop.f32.mrf.mxu0
      %4899 = vmatprep.mubr.bf16.mxu0 0
      %4900 = vmatmul.mubr.bf16.gmra.mxu0 %v4193
      %v4901 = vpop.f32.mrf.mxu0
      %v4902 = vadd.f32 0.0, %v4901
      %v4903 = vpop.f32.mrf.mxu0
      %v4904 = vpop.f32.mrf.mxu0
      %v4905 = vadd.f32 0.0, %v4904
      %v4906 = vpop.f32.mrf.mxu0
      %4907 = vmatprep.mubr.bf16.mxu0 0
      %4908 = vmatmul.mubr.bf16.gmra.mxu0 %v4199
      %v4909 = vpop.f32.mrf.mxu0
      %v4910 = vadd.f32 0.0, %v4909
      %v4911 = vpop.f32.mrf.mxu0
      %v4912 = vpop.f32.mrf.mxu0
      %v4913 = vadd.f32 0.0, %v4912
      %v4914 = vpop.f32.mrf.mxu0
      %4915 = vmatprep.mubr.bf16.mxu0 0
      %4916 = vmatmul.mubr.bf16.gmra.mxu0 %v4202
      %v4917 = vpop.f32.mrf.mxu0
      %v4918 = vadd.f32 0.0, %v4917
      %v4919 = vpop.f32.mrf.mxu0
      %v4920 = vpop.f32.mrf.mxu0
      %v4921 = vadd.f32 0.0, %v4920
      %v4922 = vpop.f32.mrf.mxu0
      %4923 = vmatprep.mubr.bf16.mxu0 0
      %4924 = vmatmul.mubr.bf16.gmra.mxu0 %v4205
      %v4925 = vpop.f32.mrf.mxu0
      %v4926 = vadd.f32 0.0, %v4925
      %v4927 = vpop.f32.mrf.mxu0
      %v4928 = vpop.f32.mrf.mxu0
      %v4929 = vadd.f32 0.0, %v4928
      %v4930 = vpop.f32.mrf.mxu0
      %4931 = vmatprep.mubr.bf16.mxu0 0
      %4932 = vmatmul.mubr.bf16.gmra.mxu0 %v4208
      %v4933 = vpop.f32.mrf.mxu0
      %v4934 = vadd.f32 0.0, %v4933
      %v4935 = vpop.f32.mrf.mxu0
      %v4936 = vpop.f32.mrf.mxu0
      %v4937 = vadd.f32 0.0, %v4936
      %v4938 = vpop.f32.mrf.mxu0
      %4939 = vmatprep.mubr.bf16.mxu0 0
      %4940 = vmatmul.mubr.bf16.gmra.mxu0 %v4211
      %v4941 = vpop.f32.mrf.mxu0
      %v4942 = vadd.f32 0.0, %v4941
      %v4943 = vpop.f32.mrf.mxu0
      %v4944 = vpop.f32.mrf.mxu0
      %v4945 = vadd.f32 0.0, %v4944
      %v4946 = vpop.f32.mrf.mxu0
      %4947 = vmatprep.mubr.bf16.mxu0 0
      %4948 = vmatmul.mubr.bf16.gmra.mxu0 %v4214
      %v4949 = vpop.f32.mrf.mxu0
      %v4950 = vadd.f32 0.0, %v4949
      %v4951 = vpop.f32.mrf.mxu0
      %v4952 = vpop.f32.mrf.mxu0
      %v4953 = vadd.f32 0.0, %v4952
      %v4954 = vpop.f32.mrf.mxu0
      %4955 = vmatprep.mubr.bf16.mxu0 0
      %4956 = vmatmul.mubr.bf16.gmra.mxu0 %v4217
      %v4957 = vpop.f32.mrf.mxu0
      %v4958 = vadd.f32 0.0, %v4957
      %v4959 = vpop.f32.mrf.mxu0
      %v4960 = vpop.f32.mrf.mxu0
      %v4961 = vadd.f32 0.0, %v4960
      %v4962 = vpop.f32.mrf.mxu0
      %4963 = vmatprep.mubr.bf16.mxu0 0
      %4964 = vmatmul.mubr.bf16.gmra.mxu0 %v4220
      %v4965 = vpop.f32.mrf.mxu0
      %v4966 = vadd.f32 0.0, %v4965
      %v4967 = vpop.f32.mrf.mxu0
      %v4968 = vpop.f32.mrf.mxu0
      %v4969 = vadd.f32 0.0, %v4968
      %v4970 = vpop.f32.mrf.mxu0
      %4971 = vmatprep.mubr.bf16.mxu0 0
      %4972 = vmatmul.mubr.bf16.gmra.mxu0 %v4223
      %v4973 = vpop.f32.mrf.mxu0
      %v4974 = vadd.f32 0.0, %v4973
      %v4975 = vpop.f32.mrf.mxu0
      %v4976 = vpop.f32.mrf.mxu0
      %v4977 = vadd.f32 0.0, %v4976
      %v4978 = vpop.f32.mrf.mxu0
      %4979 = vmatprep.mubr.bf16.mxu0 0
      %4980 = vmatmul.mubr.bf16.gmra.mxu0 %v4226
      %v4981 = vpop.f32.mrf.mxu0
      %v4982 = vadd.f32 0.0, %v4981
      %v4983 = vpop.f32.mrf.mxu0
      %v4984 = vpop.f32.mrf.mxu0
      %v4985 = vadd.f32 0.0, %v4984
      %v4986 = vpop.f32.mrf.mxu0
      %4987 = vmatprep.mubr.bf16.mxu0 0
      %4988 = vmatmul.mubr.bf16.gmra.mxu0 %v4229
      %v4989 = vpop.f32.mrf.mxu0
      %v4990 = vadd.f32 0.0, %v4989
      %v4991 = vpop.f32.mrf.mxu0
      %v4992 = vpop.f32.mrf.mxu0
      %v4993 = vadd.f32 0.0, %v4992
      %v4994 = vpop.f32.mrf.mxu0
      %4995 = vmatprep.mubr.bf16.mxu0 0
      %4996 = vmatmul.mubr.bf16.gmra.mxu0 %v4232
      %v4997 = vpop.f32.mrf.mxu0
      %v4998 = vadd.f32 0.0, %v4997
      %v4999 = vpop.f32.mrf.mxu0
      %v5000 = vpop.f32.mrf.mxu0
      %v5001 = vadd.f32 0.0, %v5000
      %v5002 = vpop.f32.mrf.mxu0
      %5003 = vmatprep.mubr.bf16.mxu0 0
      %5004 = vmatmul.mubr.bf16.gmra.mxu0 %v4235
      %v5005 = vpop.f32.mrf.mxu0
      %v5006 = vadd.f32 0.0, %v5005
      %v5007 = vpop.f32.mrf.mxu0
      %v5008 = vpop.f32.mrf.mxu0
      %v5009 = vadd.f32 0.0, %v5008
      %v5010 = vpop.f32.mrf.mxu0
      %5011 = vmatprep.mubr.bf16.mxu0 0
      %5012 = vmatmul.mubr.bf16.gmra.mxu0 %v4854
      %v5013 = vpop.f32.mrf.mxu0
      %v5014 = vadd.f32 0.0, %v5013
      %v5015 = vpop.f32.mrf.mxu0
      %v5016 = vpop.f32.mrf.mxu0
      %v5017 = vadd.f32 0.0, %v5016
      %v5018 = vpop.f32.mrf.mxu0
      %5019 = vdwg.mxu0
      %v5020 = vadd.f32 %v4814, %v4894
      %v5021 = vadd.f32 %v4815, %v4897
      %v5022 = vadd.f32 %v4816, %v4902
      %v5023 = vadd.f32 %v4817, %v4905
      %v5024 = vadd.f32 %v4818, %v4910
      %v5025 = vadd.f32 %v4819, %v4913
      %v5026 = vadd.f32 %v4820, %v4918
      %v5027 = vadd.f32 %v4821, %v4921
      %v5028 = vadd.f32 %v4822, %v4926
      %v5029 = vadd.f32 %v4823, %v4929
      %v5030 = vadd.f32 %v4824, %v4934
      %v5031 = vadd.f32 %v4825, %v4937
      %v5032 = vadd.f32 %v4826, %v4942
      %v5033 = vadd.f32 %v4827, %v4945
      %v5034 = vadd.f32 %v4828, %v4950
      %v5035 = vadd.f32 %v4829, %v4953
      %v5036 = vadd.f32 %v4830, %v4958
      %v5037 = vadd.f32 %v4831, %v4961
      %v5038 = vadd.f32 %v4832, %v4966
      %v5039 = vadd.f32 %v4833, %v4969
      %v5040 = vadd.f32 %v4834, %v4974
      %v5041 = vadd.f32 %v4835, %v4977
      %v5042 = vadd.f32 %v4836, %v4982
      %v5043 = vadd.f32 %v4837, %v4985
      %v5044 = vadd.f32 %v4838, %v4990
      %v5045 = vadd.f32 %v4839, %v4993
      %v5046 = vadd.f32 %v4840, %v4998
      %v5047 = vadd.f32 %v4841, %v5001
      %v5048 = vadd.f32 %v4842, %v5006
      %v5049 = vadd.f32 %v4843, %v5009
      %v5050 = vadd.f32 %v4844, %v5014
      %v5051 = vadd.f32 %v4845, %v5017
      %s5052 = scalar_lea.vmem %s3, 12
      %v5053 = vld [vmem:[%s5052] sm:$0x3]
      %v5055 = vsel %vm767, %v5053, 0
      %5057 = vmatprep.subr.bf16.mxu0 0
      %5058 = vmatpush1.bf16.msra.mxu0 0
      %5059 = vmatprep.subr.bf16.mxu0 0
      %5060 = vmatpush1.bf16.msra.mxu0 0
      %5061 = vmatprep.subr.bf16.mxu0 0
      %5062 = vmatpush1.bf16.msra.mxu0 0
      %5063 = vmatprep.subr.bf16.mxu0 0
      %5064 = vmatpush1.bf16.msra.mxu0 0
      %5065 = vmatprep.subr.bf16.mxu0 0
      %5066 = vmatpush1.bf16.msra.mxu0 0
      %5067 = vmatprep.subr.bf16.mxu0 0
      %5068 = vmatpush1.bf16.msra.mxu0 0
      %5069 = vmatprep.subr.bf16.mxu0 0
      %5070 = vmatpush1.bf16.msra.mxu0 0
      %5071 = vmatprep.subr.bf16.mxu0 0
      %5072 = vmatpush1.bf16.msra.mxu0 %v5055
      %5073 = vmatprep.subr.bf16.mxu0 0
      %5074 = vmatpush2.bf16.msra.mxu0 0
      %5075 = vmatprep.subr.bf16.mxu0 0
      %5076 = vmatpush2.bf16.msra.mxu0 0
      %5077 = vmatprep.subr.bf16.mxu0 0
      %5078 = vmatpush2.bf16.msra.mxu0 0
      %5079 = vmatprep.subr.bf16.mxu0 0
      %5080 = vmatpush2.bf16.msra.mxu0 0
      %5081 = vmatprep.subr.bf16.mxu0 0
      %5082 = vmatpush2.bf16.msra.mxu0 0
      %5083 = vmatprep.subr.bf16.mxu0 0
      %5084 = vmatpush2.bf16.msra.mxu0 0
      %5085 = vmatprep.subr.bf16.mxu0 0
      %5086 = vmatpush2.bf16.msra.mxu0 0
      %5087 = vmatprep.subr.bf16.mxu0 0
      %5088 = vmatpush2.bf16.msra.mxu0 0
      %5089 = vmatprep.mubr.bf16.mxu0 0
      %5090 = vmatmul.mubr.bf16.gmra.mxu0 %v3920
      %v5091 = vpop.f32.mrf.mxu0
      %v5092 = vadd.f32 0.0, %v5091
      %v5093 = vpop.f32.mrf.mxu0
      %v5094 = vpop.f32.mrf.mxu0
      %v5095 = vadd.f32 0.0, %v5094
      %v5096 = vpop.f32.mrf.mxu0
      %5097 = vmatprep.mubr.bf16.mxu0 0
      %5098 = vmatmul.mubr.bf16.gmra.mxu0 %v3924
      %v5099 = vpop.f32.mrf.mxu0
      %v5100 = vadd.f32 0.0, %v5099
      %v5101 = vpop.f32.mrf.mxu0
      %v5102 = vpop.f32.mrf.mxu0
      %v5103 = vadd.f32 0.0, %v5102
      %v5104 = vpop.f32.mrf.mxu0
      %5105 = vmatprep.mubr.bf16.mxu0 0
      %5106 = vmatmul.mubr.bf16.gmra.mxu0 %v3926
      %v5107 = vpop.f32.mrf.mxu0
      %v5108 = vadd.f32 0.0, %v5107
      %v5109 = vpop.f32.mrf.mxu0
      %v5110 = vpop.f32.mrf.mxu0
      %v5111 = vadd.f32 0.0, %v5110
      %v5112 = vpop.f32.mrf.mxu0
      %5113 = vmatprep.mubr.bf16.mxu0 0
      %5114 = vmatmul.mubr.bf16.gmra.mxu0 %v3928
      %v5115 = vpop.f32.mrf.mxu0
      %v5116 = vadd.f32 0.0, %v5115
      %v5117 = vpop.f32.mrf.mxu0
      %v5118 = vpop.f32.mrf.mxu0
      %v5119 = vadd.f32 0.0, %v5118
      %v5120 = vpop.f32.mrf.mxu0
      %5121 = vmatprep.mubr.bf16.mxu0 0
      %5122 = vmatmul.mubr.bf16.gmra.mxu0 %v3930
      %v5123 = vpop.f32.mrf.mxu0
      %v5124 = vadd.f32 0.0, %v5123
      %v5125 = vpop.f32.mrf.mxu0
      %v5126 = vpop.f32.mrf.mxu0
      %v5127 = vadd.f32 0.0, %v5126
      %v5128 = vpop.f32.mrf.mxu0
      %5129 = vmatprep.mubr.bf16.mxu0 0
      %5130 = vmatmul.mubr.bf16.gmra.mxu0 %v3932
      %v5131 = vpop.f32.mrf.mxu0
      %v5132 = vadd.f32 0.0, %v5131
      %v5133 = vpop.f32.mrf.mxu0
      %v5134 = vpop.f32.mrf.mxu0
      %v5135 = vadd.f32 0.0, %v5134
      %v5136 = vpop.f32.mrf.mxu0
      %5137 = vmatprep.mubr.bf16.mxu0 0
      %5138 = vmatmul.mubr.bf16.gmra.mxu0 %v3934
      %v5139 = vpop.f32.mrf.mxu0
      %v5140 = vadd.f32 0.0, %v5139
      %v5141 = vpop.f32.mrf.mxu0
      %v5142 = vpop.f32.mrf.mxu0
      %v5143 = vadd.f32 0.0, %v5142
      %v5144 = vpop.f32.mrf.mxu0
      %5145 = vmatprep.mubr.bf16.mxu0 0
      %5146 = vmatmul.mubr.bf16.gmra.mxu0 %v3936
      %v5147 = vpop.f32.mrf.mxu0
      %v5148 = vadd.f32 0.0, %v5147
      %v5149 = vpop.f32.mrf.mxu0
      %v5150 = vpop.f32.mrf.mxu0
      %v5151 = vadd.f32 0.0, %v5150
      %v5152 = vpop.f32.mrf.mxu0
      %5153 = vmatprep.mubr.bf16.mxu0 0
      %5154 = vmatmul.mubr.bf16.gmra.mxu0 %v3938
      %v5155 = vpop.f32.mrf.mxu0
      %v5156 = vadd.f32 0.0, %v5155
      %v5157 = vpop.f32.mrf.mxu0
      %v5158 = vpop.f32.mrf.mxu0
      %v5159 = vadd.f32 0.0, %v5158
      %v5160 = vpop.f32.mrf.mxu0
      %5161 = vmatprep.mubr.bf16.mxu0 0
      %5162 = vmatmul.mubr.bf16.gmra.mxu0 %v3940
      %v5163 = vpop.f32.mrf.mxu0
      %v5164 = vadd.f32 0.0, %v5163
      %v5165 = vpop.f32.mrf.mxu0
      %v5166 = vpop.f32.mrf.mxu0
      %v5167 = vadd.f32 0.0, %v5166
      %v5168 = vpop.f32.mrf.mxu0
      %5169 = vmatprep.mubr.bf16.mxu0 0
      %5170 = vmatmul.mubr.bf16.gmra.mxu0 %v3942
      %v5171 = vpop.f32.mrf.mxu0
      %v5172 = vadd.f32 0.0, %v5171
      %v5173 = vpop.f32.mrf.mxu0
      %v5174 = vpop.f32.mrf.mxu0
      %v5175 = vadd.f32 0.0, %v5174
      %v5176 = vpop.f32.mrf.mxu0
      %5177 = vmatprep.mubr.bf16.mxu0 0
      %5178 = vmatmul.mubr.bf16.gmra.mxu0 %v3944
      %v5179 = vpop.f32.mrf.mxu0
      %v5180 = vadd.f32 0.0, %v5179
      %v5181 = vpop.f32.mrf.mxu0
      %v5182 = vpop.f32.mrf.mxu0
      %v5183 = vadd.f32 0.0, %v5182
      %v5184 = vpop.f32.mrf.mxu0
      %5185 = vmatprep.mubr.bf16.mxu0 0
      %5186 = vmatmul.mubr.bf16.gmra.mxu0 %v3946
      %v5187 = vpop.f32.mrf.mxu0
      %v5188 = vadd.f32 0.0, %v5187
      %v5189 = vpop.f32.mrf.mxu0
      %v5190 = vpop.f32.mrf.mxu0
      %v5191 = vadd.f32 0.0, %v5190
      %v5192 = vpop.f32.mrf.mxu0
      %5193 = vmatprep.mubr.bf16.mxu0 0
      %5194 = vmatmul.mubr.bf16.gmra.mxu0 %v3948
      %v5195 = vpop.f32.mrf.mxu0
      %v5196 = vadd.f32 0.0, %v5195
      %v5197 = vpop.f32.mrf.mxu0
      %v5198 = vpop.f32.mrf.mxu0
      %v5199 = vadd.f32 0.0, %v5198
      %v5200 = vpop.f32.mrf.mxu0
      %5201 = vmatprep.mubr.bf16.mxu0 0
      %5202 = vmatmul.mubr.bf16.gmra.mxu0 %v4436
      %v5203 = vpop.f32.mrf.mxu0
      %v5204 = vadd.f32 0.0, %v5203
      %v5205 = vpop.f32.mrf.mxu0
      %v5206 = vpop.f32.mrf.mxu0
      %v5207 = vadd.f32 0.0, %v5206
      %v5208 = vpop.f32.mrf.mxu0
      %5209 = vmatprep.mubr.bf16.mxu0 0
      %5210 = vmatmul.mubr.bf16.gmra.mxu0 %v3948
      %v5211 = vpop.f32.mrf.mxu0
      %v5212 = vadd.f32 0.0, %v5211
      %v5213 = vpop.f32.mrf.mxu0
      %v5214 = vpop.f32.mrf.mxu0
      %v5215 = vadd.f32 0.0, %v5214
      %v5216 = vpop.f32.mrf.mxu0
      %5217 = vdwg.mxu0
      %v5218 = vadd.f32 %v5020, %v5092
      %v5219 = vadd.f32 %v5021, %v5095
      %v5220 = vadd.f32 %v5022, %v5100
      %v5221 = vadd.f32 %v5023, %v5103
      %v5222 = vadd.f32 %v5024, %v5108
      %v5223 = vadd.f32 %v5025, %v5111
      %v5224 = vadd.f32 %v5026, %v5116
      %v5225 = vadd.f32 %v5027, %v5119
      %v5226 = vadd.f32 %v5028, %v5124
      %v5227 = vadd.f32 %v5029, %v5127
      %v5228 = vadd.f32 %v5030, %v5132
      %v5229 = vadd.f32 %v5031, %v5135
      %v5230 = vadd.f32 %v5032, %v5140
      %v5231 = vadd.f32 %v5033, %v5143
      %v5232 = vadd.f32 %v5034, %v5148
      %v5233 = vadd.f32 %v5035, %v5151
      %v5234 = vadd.f32 %v5036, %v5156
      %v5235 = vadd.f32 %v5037, %v5159
      %v5236 = vadd.f32 %v5038, %v5164
      %v5237 = vadd.f32 %v5039, %v5167
      %v5238 = vadd.f32 %v5040, %v5172
      %v5239 = vadd.f32 %v5041, %v5175
      %v5240 = vadd.f32 %v5042, %v5180
      %v5241 = vadd.f32 %v5043, %v5183
      %v5242 = vadd.f32 %v5044, %v5188
      %v5243 = vadd.f32 %v5045, %v5191
      %v5244 = vadd.f32 %v5046, %v5196
      %v5245 = vadd.f32 %v5047, %v5199
      %v5246 = vadd.f32 %v5048, %v5204
      %v5247 = vadd.f32 %v5049, %v5207
      %v5248 = vadd.f32 %v5050, %v5212
      %v5249 = vadd.f32 %v5051, %v5215
      %s5250 = scalar_lea.vmem %s3, 14
      %v5251 = vld [vmem:[%s5250] sm:$0x3]
      %v5253 = vsel %vm767, %v5251, 0
      %5255 = vmatprep.subr.bf16.mxu0 0
      %5256 = vmatpush1.bf16.msra.mxu0 0
      %5257 = vmatprep.subr.bf16.mxu0 0
      %5258 = vmatpush1.bf16.msra.mxu0 0
      %5259 = vmatprep.subr.bf16.mxu0 0
      %5260 = vmatpush1.bf16.msra.mxu0 0
      %5261 = vmatprep.subr.bf16.mxu0 0
      %5262 = vmatpush1.bf16.msra.mxu0 0
      %5263 = vmatprep.subr.bf16.mxu0 0
      %5264 = vmatpush1.bf16.msra.mxu0 0
      %5265 = vmatprep.subr.bf16.mxu0 0
      %5266 = vmatpush1.bf16.msra.mxu0 0
      %5267 = vmatprep.subr.bf16.mxu0 0
      %5268 = vmatpush1.bf16.msra.mxu0 0
      %5269 = vmatprep.subr.bf16.mxu0 0
      %5270 = vmatpush1.bf16.msra.mxu0 %v5253
      %5271 = vmatprep.subr.bf16.mxu0 0
      %5272 = vmatpush2.bf16.msra.mxu0 0
      %5273 = vmatprep.subr.bf16.mxu0 0
      %5274 = vmatpush2.bf16.msra.mxu0 0
      %5275 = vmatprep.subr.bf16.mxu0 0
      %5276 = vmatpush2.bf16.msra.mxu0 0
      %5277 = vmatprep.subr.bf16.mxu0 0
      %5278 = vmatpush2.bf16.msra.mxu0 0
      %5279 = vmatprep.subr.bf16.mxu0 0
      %5280 = vmatpush2.bf16.msra.mxu0 0
      %5281 = vmatprep.subr.bf16.mxu0 0
      %5282 = vmatpush2.bf16.msra.mxu0 0
      %5283 = vmatprep.subr.bf16.mxu0 0
      %5284 = vmatpush2.bf16.msra.mxu0 0
      %5285 = vmatprep.subr.bf16.mxu0 0
      %5286 = vmatpush2.bf16.msra.mxu0 0
      %5287 = vmatprep.mubr.bf16.mxu0 0
      %5288 = vmatmul.mubr.bf16.gmra.mxu0 %v3712
      %v5289 = vpop.f32.mrf.mxu0
      %v5290 = vadd.f32 0.0, %v5289
      %v5291 = vpop.f32.mrf.mxu0
      %v5292 = vpop.f32.mrf.mxu0
      %v5293 = vadd.f32 0.0, %v5292
      %v5294 = vpop.f32.mrf.mxu0
      %5295 = vmatprep.mubr.bf16.mxu0 0
      %5296 = vmatmul.mubr.bf16.gmra.mxu0 %v3718
      %v5297 = vpop.f32.mrf.mxu0
      %v5298 = vadd.f32 0.0, %v5297
      %v5299 = vpop.f32.mrf.mxu0
      %v5300 = vpop.f32.mrf.mxu0
      %v5301 = vadd.f32 0.0, %v5300
      %v5302 = vpop.f32.mrf.mxu0
      %5303 = vmatprep.mubr.bf16.mxu0 0
      %5304 = vmatmul.mubr.bf16.gmra.mxu0 %v3721
      %v5305 = vpop.f32.mrf.mxu0
      %v5306 = vadd.f32 0.0, %v5305
      %v5307 = vpop.f32.mrf.mxu0
      %v5308 = vpop.f32.mrf.mxu0
      %v5309 = vadd.f32 0.0, %v5308
      %v5310 = vpop.f32.mrf.mxu0
      %5311 = vmatprep.mubr.bf16.mxu0 0
      %5312 = vmatmul.mubr.bf16.gmra.mxu0 %v3724
      %v5313 = vpop.f32.mrf.mxu0
      %v5314 = vadd.f32 0.0, %v5313
      %v5315 = vpop.f32.mrf.mxu0
      %v5316 = vpop.f32.mrf.mxu0
      %v5317 = vadd.f32 0.0, %v5316
      %v5318 = vpop.f32.mrf.mxu0
      %5319 = vmatprep.mubr.bf16.mxu0 0
      %5320 = vmatmul.mubr.bf16.gmra.mxu0 %v3727
      %v5321 = vpop.f32.mrf.mxu0
      %v5322 = vadd.f32 0.0, %v5321
      %v5323 = vpop.f32.mrf.mxu0
      %v5324 = vpop.f32.mrf.mxu0
      %v5325 = vadd.f32 0.0, %v5324
      %v5326 = vpop.f32.mrf.mxu0
      %5327 = vmatprep.mubr.bf16.mxu0 0
      %5328 = vmatmul.mubr.bf16.gmra.mxu0 %v3730
      %v5329 = vpop.f32.mrf.mxu0
      %v5330 = vadd.f32 0.0, %v5329
      %v5331 = vpop.f32.mrf.mxu0
      %v5332 = vpop.f32.mrf.mxu0
      %v5333 = vadd.f32 0.0, %v5332
      %v5334 = vpop.f32.mrf.mxu0
      %5335 = vmatprep.mubr.bf16.mxu0 0
      %5336 = vmatmul.mubr.bf16.gmra.mxu0 %v3733
      %v5337 = vpop.f32.mrf.mxu0
      %v5338 = vadd.f32 0.0, %v5337
      %v5339 = vpop.f32.mrf.mxu0
      %v5340 = vpop.f32.mrf.mxu0
      %v5341 = vadd.f32 0.0, %v5340
      %v5342 = vpop.f32.mrf.mxu0
      %5343 = vmatprep.mubr.bf16.mxu0 0
      %5344 = vmatmul.mubr.bf16.gmra.mxu0 %v3736
      %v5345 = vpop.f32.mrf.mxu0
      %v5346 = vadd.f32 0.0, %v5345
      %v5347 = vpop.f32.mrf.mxu0
      %v5348 = vpop.f32.mrf.mxu0
      %v5349 = vadd.f32 0.0, %v5348
      %v5350 = vpop.f32.mrf.mxu0
      %5351 = vmatprep.mubr.bf16.mxu0 0
      %5352 = vmatmul.mubr.bf16.gmra.mxu0 %v3739
      %v5353 = vpop.f32.mrf.mxu0
      %v5354 = vadd.f32 0.0, %v5353
      %v5355 = vpop.f32.mrf.mxu0
      %v5356 = vpop.f32.mrf.mxu0
      %v5357 = vadd.f32 0.0, %v5356
      %v5358 = vpop.f32.mrf.mxu0
      %5359 = vmatprep.mubr.bf16.mxu0 0
      %5360 = vmatmul.mubr.bf16.gmra.mxu0 %v3742
      %v5361 = vpop.f32.mrf.mxu0
      %v5362 = vadd.f32 0.0, %v5361
      %v5363 = vpop.f32.mrf.mxu0
      %v5364 = vpop.f32.mrf.mxu0
      %v5365 = vadd.f32 0.0, %v5364
      %v5366 = vpop.f32.mrf.mxu0
      %5367 = vmatprep.mubr.bf16.mxu0 0
      %5368 = vmatmul.mubr.bf16.gmra.mxu0 %v3745
      %v5369 = vpop.f32.mrf.mxu0
      %v5370 = vadd.f32 0.0, %v5369
      %v5371 = vpop.f32.mrf.mxu0
      %v5372 = vpop.f32.mrf.mxu0
      %v5373 = vadd.f32 0.0, %v5372
      %v5374 = vpop.f32.mrf.mxu0
      %5375 = vmatprep.mubr.bf16.mxu0 0
      %5376 = vmatmul.mubr.bf16.gmra.mxu0 %v3748
      %v5377 = vpop.f32.mrf.mxu0
      %v5378 = vadd.f32 0.0, %v5377
      %v5379 = vpop.f32.mrf.mxu0
      %v5380 = vpop.f32.mrf.mxu0
      %v5381 = vadd.f32 0.0, %v5380
      %v5382 = vpop.f32.mrf.mxu0
      %5383 = vmatprep.mubr.bf16.mxu0 0
      %5384 = vmatmul.mubr.bf16.gmra.mxu0 %v3751
      %v5385 = vpop.f32.mrf.mxu0
      %v5386 = vadd.f32 0.0, %v5385
      %v5387 = vpop.f32.mrf.mxu0
      %v5388 = vpop.f32.mrf.mxu0
      %v5389 = vadd.f32 0.0, %v5388
      %v5390 = vpop.f32.mrf.mxu0
      %5391 = vmatprep.mubr.bf16.mxu0 0
      %5392 = vmatmul.mubr.bf16.gmra.mxu0 %v3754
      %v5393 = vpop.f32.mrf.mxu0
      %v5394 = vadd.f32 0.0, %v5393
      %v5395 = vpop.f32.mrf.mxu0
      %v5396 = vpop.f32.mrf.mxu0
      %v5397 = vadd.f32 0.0, %v5396
      %v5398 = vpop.f32.mrf.mxu0
      %5399 = vmatprep.mubr.bf16.mxu0 0
      %5400 = vmatmul.mubr.bf16.gmra.mxu0 %v4648
      %v5401 = vpop.f32.mrf.mxu0
      %v5402 = vadd.f32 0.0, %v5401
      %v5403 = vpop.f32.mrf.mxu0
      %v5404 = vpop.f32.mrf.mxu0
      %v5405 = vadd.f32 0.0, %v5404
      %v5406 = vpop.f32.mrf.mxu0
      %5407 = vmatprep.mubr.bf16.mxu0 0
      %5408 = vmatmul.mubr.bf16.gmra.mxu0 %v3754
      %v5409 = vpop.f32.mrf.mxu0
      %v5410 = vadd.f32 0.0, %v5409
      %v5411 = vpop.f32.mrf.mxu0
      %v5412 = vpop.f32.mrf.mxu0
      %v5413 = vadd.f32 0.0, %v5412
      %v5414 = vpop.f32.mrf.mxu0
      %5415 = vdwg.mxu0
      %v5416 = vadd.f32 %v5218, %v5290
      %v5417 = vadd.f32 %v5219, %v5293
      %v5418 = vadd.f32 %v5220, %v5298
      %v5419 = vadd.f32 %v5221, %v5301
      %v5420 = vadd.f32 %v5222, %v5306
      %v5421 = vadd.f32 %v5223, %v5309
      %v5422 = vadd.f32 %v5224, %v5314
      %v5423 = vadd.f32 %v5225, %v5317
      %v5424 = vadd.f32 %v5226, %v5322
      %v5425 = vadd.f32 %v5227, %v5325
      %v5426 = vadd.f32 %v5228, %v5330
      %v5427 = vadd.f32 %v5229, %v5333
      %v5428 = vadd.f32 %v5230, %v5338
      %v5429 = vadd.f32 %v5231, %v5341
      %v5430 = vadd.f32 %v5232, %v5346
      %v5431 = vadd.f32 %v5233, %v5349
      %v5432 = vadd.f32 %v5234, %v5354
      %v5433 = vadd.f32 %v5235, %v5357
      %v5434 = vadd.f32 %v5236, %v5362
      %v5435 = vadd.f32 %v5237, %v5365
      %v5436 = vadd.f32 %v5238, %v5370
      %v5437 = vadd.f32 %v5239, %v5373
      %v5438 = vadd.f32 %v5240, %v5378
      %v5439 = vadd.f32 %v5241, %v5381
      %v5440 = vadd.f32 %v5242, %v5386
      %v5441 = vadd.f32 %v5243, %v5389
      %v5442 = vadd.f32 %v5244, %v5394
      %v5443 = vadd.f32 %v5245, %v5397
      %v5444 = vadd.f32 %v5246, %v5402
      %v5445 = vadd.f32 %v5247, %v5405
      %v5446 = vadd.f32 %v5248, %v5410
      %v5447 = vadd.f32 %v5249, %v5413
      %s5448 = scalar_lea.vmem %s3, 16
      %v5449 = vld [vmem:[%s5448] sm:$0x3]
      %v5451 = vsel %vm767, %v5449, 0
      %5453 = vmatprep.subr.bf16.mxu0 0
      %5454 = vmatpush1.bf16.msra.mxu0 0
      %5455 = vmatprep.subr.bf16.mxu0 0
      %5456 = vmatpush1.bf16.msra.mxu0 0
      %5457 = vmatprep.subr.bf16.mxu0 0
      %5458 = vmatpush1.bf16.msra.mxu0 0
      %5459 = vmatprep.subr.bf16.mxu0 0
      %5460 = vmatpush1.bf16.msra.mxu0 0
      %5461 = vmatprep.subr.bf16.mxu0 0
      %5462 = vmatpush1.bf16.msra.mxu0 0
      %5463 = vmatprep.subr.bf16.mxu0 0
      %5464 = vmatpush1.bf16.msra.mxu0 0
      %5465 = vmatprep.subr.bf16.mxu0 0
      %5466 = vmatpush1.bf16.msra.mxu0 0
      %5467 = vmatprep.subr.bf16.mxu0 0
      %5468 = vmatpush1.bf16.msra.mxu0 %v5451
      %5469 = vmatprep.subr.bf16.mxu0 0
      %5470 = vmatpush2.bf16.msra.mxu0 0
      %5471 = vmatprep.subr.bf16.mxu0 0
      %5472 = vmatpush2.bf16.msra.mxu0 0
      %5473 = vmatprep.subr.bf16.mxu0 0
      %5474 = vmatpush2.bf16.msra.mxu0 0
      %5475 = vmatprep.subr.bf16.mxu0 0
      %5476 = vmatpush2.bf16.msra.mxu0 0
      %5477 = vmatprep.subr.bf16.mxu0 0
      %5478 = vmatpush2.bf16.msra.mxu0 0
      %5479 = vmatprep.subr.bf16.mxu0 0
      %5480 = vmatpush2.bf16.msra.mxu0 0
      %5481 = vmatprep.subr.bf16.mxu0 0
      %5482 = vmatpush2.bf16.msra.mxu0 0
      %5483 = vmatprep.subr.bf16.mxu0 0
      %5484 = vmatpush2.bf16.msra.mxu0 0
      %5485 = vmatprep.mubr.bf16.mxu0 0
      %5486 = vmatmul.mubr.bf16.gmra.mxu0 %v4193
      %v5487 = vpop.f32.mrf.mxu0
      %v5488 = vadd.f32 0.0, %v5487
      %v5489 = vpop.f32.mrf.mxu0
      %v5490 = vpop.f32.mrf.mxu0
      %v5491 = vadd.f32 0.0, %v5490
      %v5492 = vpop.f32.mrf.mxu0
      %5493 = vmatprep.mubr.bf16.mxu0 0
      %5494 = vmatmul.mubr.bf16.gmra.mxu0 %v4199
      %v5495 = vpop.f32.mrf.mxu0
      %v5496 = vadd.f32 0.0, %v5495
      %v5497 = vpop.f32.mrf.mxu0
      %v5498 = vpop.f32.mrf.mxu0
      %v5499 = vadd.f32 0.0, %v5498
      %v5500 = vpop.f32.mrf.mxu0
      %5501 = vmatprep.mubr.bf16.mxu0 0
      %5502 = vmatmul.mubr.bf16.gmra.mxu0 %v4202
      %v5503 = vpop.f32.mrf.mxu0
      %v5504 = vadd.f32 0.0, %v5503
      %v5505 = vpop.f32.mrf.mxu0
      %v5506 = vpop.f32.mrf.mxu0
      %v5507 = vadd.f32 0.0, %v5506
      %v5508 = vpop.f32.mrf.mxu0
      %5509 = vmatprep.mubr.bf16.mxu0 0
      %5510 = vmatmul.mubr.bf16.gmra.mxu0 %v4205
      %v5511 = vpop.f32.mrf.mxu0
      %v5512 = vadd.f32 0.0, %v5511
      %v5513 = vpop.f32.mrf.mxu0
      %v5514 = vpop.f32.mrf.mxu0
      %v5515 = vadd.f32 0.0, %v5514
      %v5516 = vpop.f32.mrf.mxu0
      %5517 = vmatprep.mubr.bf16.mxu0 0
      %5518 = vmatmul.mubr.bf16.gmra.mxu0 %v4208
      %v5519 = vpop.f32.mrf.mxu0
      %v5520 = vadd.f32 0.0, %v5519
      %v5521 = vpop.f32.mrf.mxu0
      %v5522 = vpop.f32.mrf.mxu0
      %v5523 = vadd.f32 0.0, %v5522
      %v5524 = vpop.f32.mrf.mxu0
      %5525 = vmatprep.mubr.bf16.mxu0 0
      %5526 = vmatmul.mubr.bf16.gmra.mxu0 %v4211
      %v5527 = vpop.f32.mrf.mxu0
      %v5528 = vadd.f32 0.0, %v5527
      %v5529 = vpop.f32.mrf.mxu0
      %v5530 = vpop.f32.mrf.mxu0
      %v5531 = vadd.f32 0.0, %v5530
      %v5532 = vpop.f32.mrf.mxu0
      %5533 = vmatprep.mubr.bf16.mxu0 0
      %5534 = vmatmul.mubr.bf16.gmra.mxu0 %v4214
      %v5535 = vpop.f32.mrf.mxu0
      %v5536 = vadd.f32 0.0, %v5535
      %v5537 = vpop.f32.mrf.mxu0
      %v5538 = vpop.f32.mrf.mxu0
      %v5539 = vadd.f32 0.0, %v5538
      %v5540 = vpop.f32.mrf.mxu0
      %5541 = vmatprep.mubr.bf16.mxu0 0
      %5542 = vmatmul.mubr.bf16.gmra.mxu0 %v4217
      %v5543 = vpop.f32.mrf.mxu0
      %v5544 = vadd.f32 0.0, %v5543
      %v5545 = vpop.f32.mrf.mxu0
      %v5546 = vpop.f32.mrf.mxu0
      %v5547 = vadd.f32 0.0, %v5546
      %v5548 = vpop.f32.mrf.mxu0
      %5549 = vmatprep.mubr.bf16.mxu0 0
      %5550 = vmatmul.mubr.bf16.gmra.mxu0 %v4220
      %v5551 = vpop.f32.mrf.mxu0
      %v5552 = vadd.f32 0.0, %v5551
      %v5553 = vpop.f32.mrf.mxu0
      %v5554 = vpop.f32.mrf.mxu0
      %v5555 = vadd.f32 0.0, %v5554
      %v5556 = vpop.f32.mrf.mxu0
      %5557 = vmatprep.mubr.bf16.mxu0 0
      %5558 = vmatmul.mubr.bf16.gmra.mxu0 %v4223
      %v5559 = vpop.f32.mrf.mxu0
      %v5560 = vadd.f32 0.0, %v5559
      %v5561 = vpop.f32.mrf.mxu0
      %v5562 = vpop.f32.mrf.mxu0
      %v5563 = vadd.f32 0.0, %v5562
      %v5564 = vpop.f32.mrf.mxu0
      %5565 = vmatprep.mubr.bf16.mxu0 0
      %5566 = vmatmul.mubr.bf16.gmra.mxu0 %v4226
      %v5567 = vpop.f32.mrf.mxu0
      %v5568 = vadd.f32 0.0, %v5567
      %v5569 = vpop.f32.mrf.mxu0
      %v5570 = vpop.f32.mrf.mxu0
      %v5571 = vadd.f32 0.0, %v5570
      %v5572 = vpop.f32.mrf.mxu0
      %5573 = vmatprep.mubr.bf16.mxu0 0
      %5574 = vmatmul.mubr.bf16.gmra.mxu0 %v4229
      %v5575 = vpop.f32.mrf.mxu0
      %v5576 = vadd.f32 0.0, %v5575
      %v5577 = vpop.f32.mrf.mxu0
      %v5578 = vpop.f32.mrf.mxu0
      %v5579 = vadd.f32 0.0, %v5578
      %v5580 = vpop.f32.mrf.mxu0
      %5581 = vmatprep.mubr.bf16.mxu0 0
      %5582 = vmatmul.mubr.bf16.gmra.mxu0 %v4232
      %v5583 = vpop.f32.mrf.mxu0
      %v5584 = vadd.f32 0.0, %v5583
      %v5585 = vpop.f32.mrf.mxu0
      %v5586 = vpop.f32.mrf.mxu0
      %v5587 = vadd.f32 0.0, %v5586
      %v5588 = vpop.f32.mrf.mxu0
      %5589 = vmatprep.mubr.bf16.mxu0 0
      %5590 = vmatmul.mubr.bf16.gmra.mxu0 %v4235
      %v5591 = vpop.f32.mrf.mxu0
      %v5592 = vadd.f32 0.0, %v5591
      %v5593 = vpop.f32.mrf.mxu0
      %v5594 = vpop.f32.mrf.mxu0
      %v5595 = vadd.f32 0.0, %v5594
      %v5596 = vpop.f32.mrf.mxu0
      %5597 = vmatprep.mubr.bf16.mxu0 0
      %5598 = vmatmul.mubr.bf16.gmra.mxu0 %v4854
      %v5599 = vpop.f32.mrf.mxu0
      %v5600 = vadd.f32 0.0, %v5599
      %v5601 = vpop.f32.mrf.mxu0
      %v5602 = vpop.f32.mrf.mxu0
      %v5603 = vadd.f32 0.0, %v5602
      %v5604 = vpop.f32.mrf.mxu0
      %5605 = vmatprep.mubr.bf16.mxu0 0
      %5606 = vmatmul.mubr.bf16.gmra.mxu0 %v4235
      %v5607 = vpop.f32.mrf.mxu0
      %v5608 = vadd.f32 0.0, %v5607
      %v5609 = vpop.f32.mrf.mxu0
      %v5610 = vpop.f32.mrf.mxu0
      %v5611 = vadd.f32 0.0, %v5610
      %v5612 = vpop.f32.mrf.mxu0
      %5613 = vdwg.mxu0
      %v5614 = vadd.f32 %v5416, %v5488
      %v5615 = vadd.f32 %v5417, %v5491
      %v5616 = vadd.f32 %v5418, %v5496
      %v5617 = vadd.f32 %v5419, %v5499
      %v5618 = vadd.f32 %v5420, %v5504
      %v5619 = vadd.f32 %v5421, %v5507
      %v5620 = vadd.f32 %v5422, %v5512
      %v5621 = vadd.f32 %v5423, %v5515
      %v5622 = vadd.f32 %v5424, %v5520
      %v5623 = vadd.f32 %v5425, %v5523
      %v5624 = vadd.f32 %v5426, %v5528
      %v5625 = vadd.f32 %v5427, %v5531
      %v5626 = vadd.f32 %v5428, %v5536
      %v5627 = vadd.f32 %v5429, %v5539
      %v5628 = vadd.f32 %v5430, %v5544
      %v5629 = vadd.f32 %v5431, %v5547
      %v5630 = vadd.f32 %v5432, %v5552
      %v5631 = vadd.f32 %v5433, %v5555
      %v5632 = vadd.f32 %v5434, %v5560
      %v5633 = vadd.f32 %v5435, %v5563
      %v5634 = vadd.f32 %v5436, %v5568
      %v5635 = vadd.f32 %v5437, %v5571
      %v5636 = vadd.f32 %v5438, %v5576
      %v5637 = vadd.f32 %v5439, %v5579
      %v5638 = vadd.f32 %v5440, %v5584
      %v5639 = vadd.f32 %v5441, %v5587
      %v5640 = vadd.f32 %v5442, %v5592
      %v5641 = vadd.f32 %v5443, %v5595
      %v5642 = vadd.f32 %v5444, %v5600
      %v5643 = vadd.f32 %v5445, %v5603
      %v5644 = vadd.f32 %v5446, %v5608
      %v5645 = vadd.f32 %v5447, %v5611
      %v5646 = vld [vmem:[%s4] sm:$0x1]
      %v5648 = vlaneseq
      %v5649 = vshrl.u32 %v5648, 7
      %v5650 = vsub.s32 0, %v5649
      %v5651 = vrot.slane %v5646, %v5650
      %v5653 = vadd.f32 %v5614, %v5651
      %v5654 = vadd.f32 %v5615, %v5651
      %v5655 = vadd.f32 %v5616, %v5651
      %v5656 = vadd.f32 %v5617, %v5651
      %v5657 = vadd.f32 %v5618, %v5651
      %v5658 = vadd.f32 %v5619, %v5651
      %v5659 = vadd.f32 %v5620, %v5651
      %v5660 = vadd.f32 %v5621, %v5651
      %v5661 = vadd.f32 %v5622, %v5651
      %v5662 = vadd.f32 %v5623, %v5651
      %v5663 = vadd.f32 %v5624, %v5651
      %v5664 = vadd.f32 %v5625, %v5651
      %v5665 = vadd.f32 %v5626, %v5651
      %v5666 = vadd.f32 %v5627, %v5651
      %v5667 = vadd.f32 %v5628, %v5651
      %v5668 = vadd.f32 %v5629, %v5651
      %v5669 = vadd.f32 %v5630, %v5651
      %v5670 = vadd.f32 %v5631, %v5651
      %v5671 = vadd.f32 %v5632, %v5651
      %v5672 = vadd.f32 %v5633, %v5651
      %v5673 = vadd.f32 %v5634, %v5651
      %v5674 = vadd.f32 %v5635, %v5651
      %v5675 = vadd.f32 %v5636, %v5651
      %v5676 = vadd.f32 %v5637, %v5651
      %v5677 = vadd.f32 %v5638, %v5651
      %v5678 = vadd.f32 %v5639, %v5651
      %v5679 = vadd.f32 %v5640, %v5651
      %v5680 = vadd.f32 %v5641, %v5651
      %v5681 = vadd.f32 %v5642, %v5651
      %v5682 = vadd.f32 %v5643, %v5651
      %v5683 = vadd.f32 %v5644, %v5651
      %v5684 = vadd.f32 %v5645, %v5651
      %v5685 = vsel %vm718, %v5653, 0.0
      %v5686 = vsel %vm718, %v5654, 0.0
      %v5687 = vadd.f32 %v5685, %v5686
      %v5688 = vsel %vm718, %v5655, 0.0
      %v5689 = vadd.f32 %v5687, %v5688
      %v5690 = vsel %vm718, %v5656, 0.0
      %v5691 = vadd.f32 %v5689, %v5690
      %v5692 = vsel %vm718, %v5657, 0.0
      %v5693 = vadd.f32 %v5691, %v5692
      %v5694 = vsel %vm718, %v5658, 0.0
      %v5695 = vadd.f32 %v5693, %v5694
      %v5696 = vsel %vm718, %v5659, 0.0
      %v5697 = vadd.f32 %v5695, %v5696
      %v5698 = vsel %vm718, %v5660, 0.0
      %v5699 = vadd.f32 %v5697, %v5698
      %v5700 = vsel %vm718, %v5661, 0.0
      %v5701 = vadd.f32 %v5699, %v5700
      %v5702 = vsel %vm718, %v5662, 0.0
      %v5703 = vadd.f32 %v5701, %v5702
      %v5704 = vsel %vm718, %v5663, 0.0
      %v5705 = vadd.f32 %v5703, %v5704
      %v5706 = vsel %vm718, %v5664, 0.0
      %v5707 = vadd.f32 %v5705, %v5706
      %v5708 = vsel %vm718, %v5665, 0.0
      %v5709 = vadd.f32 %v5707, %v5708
      %v5710 = vsel %vm718, %v5666, 0.0
      %v5711 = vadd.f32 %v5709, %v5710
      %v5712 = vsel %vm718, %v5667, 0.0
      %v5713 = vadd.f32 %v5711, %v5712
      %v5714 = vsel %vm718, %v5668, 0.0
      %v5715 = vadd.f32 %v5713, %v5714
      %v5716 = vsel %vm718, %v5669, 0.0
      %v5717 = vadd.f32 %v5715, %v5716
      %v5718 = vsel %vm718, %v5670, 0.0
      %v5719 = vadd.f32 %v5717, %v5718
      %v5720 = vsel %vm718, %v5671, 0.0
      %v5721 = vadd.f32 %v5719, %v5720
      %v5722 = vsel %vm718, %v5672, 0.0
      %v5723 = vadd.f32 %v5721, %v5722
      %v5724 = vsel %vm718, %v5673, 0.0
      %v5725 = vadd.f32 %v5723, %v5724
      %v5726 = vsel %vm718, %v5674, 0.0
      %v5727 = vadd.f32 %v5725, %v5726
      %v5728 = vsel %vm718, %v5675, 0.0
      %v5729 = vadd.f32 %v5727, %v5728
      %v5730 = vsel %vm718, %v5676, 0.0
      %v5731 = vadd.f32 %v5729, %v5730
      %v5732 = vsel %vm718, %v5677, 0.0
      %v5733 = vadd.f32 %v5731, %v5732
      %v5734 = vsel %vm718, %v5678, 0.0
      %v5735 = vadd.f32 %v5733, %v5734
      %v5736 = vsel %vm718, %v5679, 0.0
      %v5737 = vadd.f32 %v5735, %v5736
      %v5738 = vsel %vm718, %v5680, 0.0
      %v5739 = vadd.f32 %v5737, %v5738
      %v5740 = vsel %vm718, %v5681, 0.0
      %v5741 = vadd.f32 %v5739, %v5740
      %v5742 = vsel %vm718, %v5682, 0.0
      %v5743 = vadd.f32 %v5741, %v5742
      %v5744 = vsel %vm718, %v5683, 0.0
      %v5745 = vadd.f32 %v5743, %v5744
      %v5746 = vsel %vm718, %v5684, 0.0
      %v5747 = vadd.f32 %v5745, %v5746
      %v5748 = vrot.slane %v5747, 4
      %v5749 = vadd.f32 %v5747, %v5748
      %v5750 = vrot.slane %v5749, 2
      %v5751 = vadd.f32 %v5749, %v5750
      %v5752 = vrot.slane %v5751, 1
      %v5753 = vadd.f32 %v5751, %v5752
      %v5754 = vmul.f32 %v5653, %v5653
      %v5755 = vmul.f32 %v5654, %v5654
      %v5756 = vmul.f32 %v5655, %v5655
      %v5757 = vmul.f32 %v5656, %v5656
      %v5758 = vmul.f32 %v5657, %v5657
      %v5759 = vmul.f32 %v5658, %v5658
      %v5760 = vmul.f32 %v5659, %v5659
      %v5761 = vmul.f32 %v5660, %v5660
      %v5762 = vmul.f32 %v5661, %v5661
      %v5763 = vmul.f32 %v5662, %v5662
      %v5764 = vmul.f32 %v5663, %v5663
      %v5765 = vmul.f32 %v5664, %v5664
      %v5766 = vmul.f32 %v5665, %v5665
      %v5767 = vmul.f32 %v5666, %v5666
      %v5768 = vmul.f32 %v5667, %v5667
      %v5769 = vmul.f32 %v5668, %v5668
      %v5770 = vmul.f32 %v5669, %v5669
      %v5771 = vmul.f32 %v5670, %v5670
      %v5772 = vmul.f32 %v5671, %v5671
      %v5773 = vmul.f32 %v5672, %v5672
      %v5774 = vmul.f32 %v5673, %v5673
      %v5775 = vmul.f32 %v5674, %v5674
      %v5776 = vmul.f32 %v5675, %v5675
      %v5777 = vmul.f32 %v5676, %v5676
      %v5778 = vmul.f32 %v5677, %v5677
      %v5779 = vmul.f32 %v5678, %v5678
      %v5780 = vmul.f32 %v5679, %v5679
      %v5781 = vmul.f32 %v5680, %v5680
      %v5782 = vmul.f32 %v5681, %v5681
      %v5783 = vmul.f32 %v5682, %v5682
      %v5784 = vmul.f32 %v5683, %v5683
      %v5785 = vmul.f32 %v5684, %v5684
      %v5786 = vsel %vm718, %v5754, 0.0
      %v5787 = vsel %vm718, %v5755, 0.0
      %v5788 = vadd.f32 %v5786, %v5787
      %v5789 = vsel %vm718, %v5756, 0.0
      %v5790 = vadd.f32 %v5788, %v5789
      %v5791 = vsel %vm718, %v5757, 0.0
      %v5792 = vadd.f32 %v5790, %v5791
      %v5793 = vsel %vm718, %v5758, 0.0
      %v5794 = vadd.f32 %v5792, %v5793
      %v5795 = vsel %vm718, %v5759, 0.0
      %v5796 = vadd.f32 %v5794, %v5795
      %v5797 = vsel %vm718, %v5760, 0.0
      %v5798 = vadd.f32 %v5796, %v5797
      %v5799 = vsel %vm718, %v5761, 0.0
      %v5800 = vadd.f32 %v5798, %v5799
      %v5801 = vsel %vm718, %v5762, 0.0
      %v5802 = vadd.f32 %v5800, %v5801
      %v5803 = vsel %vm718, %v5763, 0.0
      %v5804 = vadd.f32 %v5802, %v5803
      %v5805 = vsel %vm718, %v5764, 0.0
      %v5806 = vadd.f32 %v5804, %v5805
      %v5807 = vsel %vm718, %v5765, 0.0
      %v5808 = vadd.f32 %v5806, %v5807
      %v5809 = vsel %vm718, %v5766, 0.0
      %v5810 = vadd.f32 %v5808, %v5809
      %v5811 = vsel %vm718, %v5767, 0.0
      %v5812 = vadd.f32 %v5810, %v5811
      %v5813 = vsel %vm718, %v5768, 0.0
      %v5814 = vadd.f32 %v5812, %v5813
      %v5815 = vsel %vm718, %v5769, 0.0
      %v5816 = vadd.f32 %v5814, %v5815
      %v5817 = vsel %vm718, %v5770, 0.0
      %v5818 = vadd.f32 %v5816, %v5817
      %v5819 = vsel %vm718, %v5771, 0.0
      %v5820 = vadd.f32 %v5818, %v5819
      %v5821 = vsel %vm718, %v5772, 0.0
      %v5822 = vadd.f32 %v5820, %v5821
      %v5823 = vsel %vm718, %v5773, 0.0
      %v5824 = vadd.f32 %v5822, %v5823
      %v5825 = vsel %vm718, %v5774, 0.0
      %v5826 = vadd.f32 %v5824, %v5825
      %v5827 = vsel %vm718, %v5775, 0.0
      %v5828 = vadd.f32 %v5826, %v5827
      %v5829 = vsel %vm718, %v5776, 0.0
      %v5830 = vadd.f32 %v5828, %v5829
      %v5831 = vsel %vm718, %v5777, 0.0
      %v5832 = vadd.f32 %v5830, %v5831
      %v5833 = vsel %vm718, %v5778, 0.0
      %v5834 = vadd.f32 %v5832, %v5833
      %v5835 = vsel %vm718, %v5779, 0.0
      %v5836 = vadd.f32 %v5834, %v5835
      %v5837 = vsel %vm718, %v5780, 0.0
      %v5838 = vadd.f32 %v5836, %v5837
      %v5839 = vsel %vm718, %v5781, 0.0
      %v5840 = vadd.f32 %v5838, %v5839
      %v5841 = vsel %vm718, %v5782, 0.0
      %v5842 = vadd.f32 %v5840, %v5841
      %v5843 = vsel %vm718, %v5783, 0.0
      %v5844 = vadd.f32 %v5842, %v5843
      %v5845 = vsel %vm718, %v5784, 0.0
      %v5846 = vadd.f32 %v5844, %v5845
      %v5847 = vsel %vm718, %v5785, 0.0
      %v5848 = vadd.f32 %v5846, %v5847
      %v5849 = vrot.slane %v5848, 4
      %v5850 = vadd.f32 %v5848, %v5849
      %v5851 = vrot.slane %v5850, 2
      %v5852 = vadd.f32 %v5850, %v5851
      %v5853 = vrot.slane %v5852, 1
      %v5854 = vadd.f32 %v5852, %v5853
      %v5855 = vmul.f32 %v5753, 0.00390625
      %v5856 = vmul.f32 %v5854, 0.00390625
      %v5857 = vmul.f32 %v5855, %v5855
      %v5858 = vsub.f32 %v5856, %v5857
      %v5859 = vsub.f32 %v5653, %v5855
      %v5860 = vsub.f32 %v5654, %v5855
      %v5861 = vsub.f32 %v5655, %v5855
      %v5862 = vsub.f32 %v5656, %v5855
      %v5863 = vsub.f32 %v5657, %v5855
      %v5864 = vsub.f32 %v5658, %v5855
      %v5865 = vsub.f32 %v5659, %v5855
      %v5866 = vsub.f32 %v5660, %v5855
      %v5867 = vsub.f32 %v5661, %v5855
      %v5868 = vsub.f32 %v5662, %v5855
      %v5869 = vsub.f32 %v5663, %v5855
      %v5870 = vsub.f32 %v5664, %v5855
      %v5871 = vsub.f32 %v5665, %v5855
      %v5872 = vsub.f32 %v5666, %v5855
      %v5873 = vsub.f32 %v5667, %v5855
      %v5874 = vsub.f32 %v5668, %v5855
      %v5875 = vsub.f32 %v5669, %v5855
      %v5876 = vsub.f32 %v5670, %v5855
      %v5877 = vsub.f32 %v5671, %v5855
      %v5878 = vsub.f32 %v5672, %v5855
      %v5879 = vsub.f32 %v5673, %v5855
      %v5880 = vsub.f32 %v5674, %v5855
      %v5881 = vsub.f32 %v5675, %v5855
      %v5882 = vsub.f32 %v5676, %v5855
      %v5883 = vsub.f32 %v5677, %v5855
      %v5884 = vsub.f32 %v5678, %v5855
      %v5885 = vsub.f32 %v5679, %v5855
      %v5886 = vsub.f32 %v5680, %v5855
      %v5887 = vsub.f32 %v5681, %v5855
      %v5888 = vsub.f32 %v5682, %v5855
      %v5889 = vsub.f32 %v5683, %v5855
      %v5890 = vsub.f32 %v5684, %v5855
      %v5891 = vadd.f32 %v5858, 1e-05
      %v5892 = vrsqrt.pop %v5891
      %v5893 = vmul.f32 %v5859, %v5892
      %v5894 = vmul.f32 %v5860, %v5892
      %v5895 = vmul.f32 %v5861, %v5892
      %v5896 = vmul.f32 %v5862, %v5892
      %v5897 = vmul.f32 %v5863, %v5892
      %v5898 = vmul.f32 %v5864, %v5892
      %v5899 = vmul.f32 %v5865, %v5892
      %v5900 = vmul.f32 %v5866, %v5892
      %v5901 = vmul.f32 %v5867, %v5892
      %v5902 = vmul.f32 %v5868, %v5892
      %v5903 = vmul.f32 %v5869, %v5892
      %v5904 = vmul.f32 %v5870, %v5892
      %v5905 = vmul.f32 %v5871, %v5892
      %v5906 = vmul.f32 %v5872, %v5892
      %v5907 = vmul.f32 %v5873, %v5892
      %v5908 = vmul.f32 %v5874, %v5892
      %v5909 = vmul.f32 %v5875, %v5892
      %v5910 = vmul.f32 %v5876, %v5892
      %v5911 = vmul.f32 %v5877, %v5892
      %v5912 = vmul.f32 %v5878, %v5892
      %v5913 = vmul.f32 %v5879, %v5892
      %v5914 = vmul.f32 %v5880, %v5892
      %v5915 = vmul.f32 %v5881, %v5892
      %v5916 = vmul.f32 %v5882, %v5892
      %v5917 = vmul.f32 %v5883, %v5892
      %v5918 = vmul.f32 %v5884, %v5892
      %v5919 = vmul.f32 %v5885, %v5892
      %v5920 = vmul.f32 %v5886, %v5892
      %v5921 = vmul.f32 %v5887, %v5892
      %v5922 = vmul.f32 %v5888, %v5892
      %v5923 = vmul.f32 %v5889, %v5892
      %v5924 = vmul.f32 %v5890, %v5892
      %v5925 = vunpack.c.l.bf16 %v321
      %v5926 = vunpack.c.l.bf16 %v331
      %v5927 = vunpack.c.l.bf16 %v345
      %v5928 = vunpack.c.l.bf16 %v355
      %v5929 = vunpack.c.l.bf16 %v369
      %v5930 = vunpack.c.l.bf16 %v379
      %v5931 = vunpack.c.l.bf16 %v393
      %v5932 = vunpack.c.l.bf16 %v403
      %v5933 = vunpack.c.l.bf16 %v417
      %v5934 = vunpack.c.l.bf16 %v427
      %v5935 = vunpack.c.l.bf16 %v441
      %v5936 = vunpack.c.l.bf16 %v451
      %v5937 = vunpack.c.l.bf16 %v465
      %v5938 = vunpack.c.l.bf16 %v475
      %v5939 = vunpack.c.l.bf16 %v489
      %v5940 = vunpack.c.l.bf16 %v499
      %v5941 = vunpack.c.l.bf16 %v513
      %v5942 = vunpack.c.l.bf16 %v523
      %v5943 = vunpack.c.l.bf16 %v537
      %v5944 = vunpack.c.l.bf16 %v547
      %v5945 = vunpack.c.l.bf16 %v561
      %v5946 = vunpack.c.l.bf16 %v571
      %v5947 = vunpack.c.l.bf16 %v585
      %v5948 = vunpack.c.l.bf16 %v595
      %v5949 = vunpack.c.l.bf16 %v609
      %v5950 = vunpack.c.l.bf16 %v619
      %v5951 = vunpack.c.l.bf16 %v633
      %v5952 = vunpack.c.l.bf16 %v643
      %v5953 = vunpack.c.l.bf16 %v657
      %v5954 = vunpack.c.l.bf16 %v667
      %v5955 = vunpack.c.l.bf16 %v1868
      %v5956 = vunpack.c.l.bf16 %v1878
      %v5957 = vadd.f32 %v5925, %v5893
      %v5958 = vadd.f32 %v5926, %v5894
      %v5959 = vadd.f32 %v5927, %v5895
      %v5960 = vadd.f32 %v5928, %v5896
      %v5961 = vadd.f32 %v5929, %v5897
      %v5962 = vadd.f32 %v5930, %v5898
      %v5963 = vadd.f32 %v5931, %v5899
      %v5964 = vadd.f32 %v5932, %v5900
      %v5965 = vadd.f32 %v5933, %v5901
      %v5966 = vadd.f32 %v5934, %v5902
      %v5967 = vadd.f32 %v5935, %v5903
      %v5968 = vadd.f32 %v5936, %v5904
      %v5969 = vadd.f32 %v5937, %v5905
      %v5970 = vadd.f32 %v5938, %v5906
      %v5971 = vadd.f32 %v5939, %v5907
      %v5972 = vadd.f32 %v5940, %v5908
      %v5973 = vadd.f32 %v5941, %v5909
      %v5974 = vadd.f32 %v5942, %v5910
      %v5975 = vadd.f32 %v5943, %v5911
      %v5976 = vadd.f32 %v5944, %v5912
      %v5977 = vadd.f32 %v5945, %v5913
      %v5978 = vadd.f32 %v5946, %v5914
      %v5979 = vadd.f32 %v5947, %v5915
      %v5980 = vadd.f32 %v5948, %v5916
      %v5981 = vadd.f32 %v5949, %v5917
      %v5982 = vadd.f32 %v5950, %v5918
      %v5983 = vadd.f32 %v5951, %v5919
      %v5984 = vadd.f32 %v5952, %v5920
      %v5985 = vadd.f32 %v5953, %v5921
      %v5986 = vadd.f32 %v5954, %v5922
      %v5987 = vadd.f32 %v5955, %v5923
      %v5988 = vadd.f32 %v5956, %v5924
      %v5989 = vmax.f32 %v5957, 0.0
      %v5990 = vmax.f32 %v5958, 0.0
      %v5991 = vmax.f32 %v5959, 0.0
      %v5992 = vmax.f32 %v5960, 0.0
      %v5993 = vmax.f32 %v5961, 0.0
      %v5994 = vmax.f32 %v5962, 0.0
      %v5995 = vmax.f32 %v5963, 0.0
      %v5996 = vmax.f32 %v5964, 0.0
      %v5997 = vmax.f32 %v5965, 0.0
      %v5998 = vmax.f32 %v5966, 0.0
      %v5999 = vmax.f32 %v5967, 0.0
      %v6000 = vmax.f32 %v5968, 0.0
      %v6001 = vmax.f32 %v5969, 0.0
      %v6002 = vmax.f32 %v5970, 0.0
      %v6003 = vmax.f32 %v5971, 0.0
      %v6004 = vmax.f32 %v5972, 0.0
      %v6005 = vmax.f32 %v5973, 0.0
      %v6006 = vmax.f32 %v5974, 0.0
      %v6007 = vmax.f32 %v5975, 0.0
      %v6008 = vmax.f32 %v5976, 0.0
      %v6009 = vmax.f32 %v5977, 0.0
      %v6010 = vmax.f32 %v5978, 0.0
      %v6011 = vmax.f32 %v5979, 0.0
      %v6012 = vmax.f32 %v5980, 0.0
      %v6013 = vmax.f32 %v5981, 0.0
      %v6014 = vmax.f32 %v5982, 0.0
      %v6015 = vmax.f32 %v5983, 0.0
      %v6016 = vmax.f32 %v5984, 0.0
      %v6017 = vmax.f32 %v5985, 0.0
      %v6018 = vmax.f32 %v5986, 0.0
      %v6019 = vmax.f32 %v5987, 0.0
      %v6020 = vmax.f32 %v5988, 0.0
      %6021 = vst.msk [vmem:[%s224] sm:$0xff] %vm718, %v5989
      %6022 = vst.msk [vmem:[%s224 + $0x8] sm:$0xff] %vm718, %v5990
      %6023 = vst.msk [vmem:[%s224 + $0x10] sm:$0xff] %vm718, %v5991
      %6024 = vst.msk [vmem:[%s224 + $0x18] sm:$0xff] %vm718, %v5992
      %6025 = vst.msk [vmem:[%s224 + $0x20] sm:$0xff] %vm718, %v5993
      %6026 = vst.msk [vmem:[%s224 + $0x28] sm:$0xff] %vm718, %v5994
      %6027 = vst.msk [vmem:[%s224 + $0x30] sm:$0xff] %vm718, %v5995
      %6028 = vst.msk [vmem:[%s224 + $0x38] sm:$0xff] %vm718, %v5996
      %6029 = vst.msk [vmem:[%s224 + $0x40] sm:$0xff] %vm718, %v5997
      %6030 = vst.msk [vmem:[%s224 + $0x48] sm:$0xff] %vm718, %v5998
      %6031 = vst.msk [vmem:[%s224 + $0x50] sm:$0xff] %vm718, %v5999
      %6032 = vst.msk [vmem:[%s224 + $0x58] sm:$0xff] %vm718, %v6000
      %6033 = vst.msk [vmem:[%s224 + $0x60] sm:$0xff] %vm718, %v6001
      %6034 = vst.msk [vmem:[%s224 + $0x68] sm:$0xff] %vm718, %v6002
      %6035 = vst.msk [vmem:[%s224 + $0x70] sm:$0xff] %vm718, %v6003
      %6036 = vst.msk [vmem:[%s224 + $0x78] sm:$0xff] %vm718, %v6004
      %6037 = vst.msk [vmem:[%s224 + $0x80] sm:$0xff] %vm718, %v6005
      %6038 = vst.msk [vmem:[%s224 + $0x88] sm:$0xff] %vm718, %v6006
      %6039 = vst.msk [vmem:[%s224 + $0x90] sm:$0xff] %vm718, %v6007
      %6040 = vst.msk [vmem:[%s224 + $0x98] sm:$0xff] %vm718, %v6008
      %6041 = vst.msk [vmem:[%s224 + $0xa0] sm:$0xff] %vm718, %v6009
      %6042 = vst.msk [vmem:[%s224 + $0xa8] sm:$0xff] %vm718, %v6010
      %6043 = vst.msk [vmem:[%s224 + $0xb0] sm:$0xff] %vm718, %v6011
      %6044 = vst.msk [vmem:[%s224 + $0xb8] sm:$0xff] %vm718, %v6012
      %6045 = vst.msk [vmem:[%s224 + $0xc0] sm:$0xff] %vm718, %v6013
      %6046 = vst.msk [vmem:[%s224 + $0xc8] sm:$0xff] %vm718, %v6014
      %6047 = vst.msk [vmem:[%s224 + $0xd0] sm:$0xff] %vm718, %v6015
      %6048 = vst.msk [vmem:[%s224 + $0xd8] sm:$0xff] %vm718, %v6016
      %6049 = vst.msk [vmem:[%s224 + $0xe0] sm:$0xff] %vm718, %v6017
      %6050 = vst.msk [vmem:[%s224 + $0xe8] sm:$0xff] %vm718, %v6018
      %6051 = vst.msk [vmem:[%s224 + $0xf0] sm:$0xff] %vm718, %v6019
      %6052 = vst.msk [vmem:[%s224 + $0xf8] sm:$0xff] %vm718, %v6020
      %p6053 = scmp.lt.s32.totalorder %s16, 1
      %s6054 = scalar_select %p6053, %s16, 1
      %s6055 = smul.addr %s6054, 32
      %s6056 = smul.addr %s6055, 8
      %s6057 = scalar_lea.vmem %s5, %s6056
      // Predicated region
      $region41: #{tpu_custom_call.1} parent=39 // pred_check
        %p6058 = pneg %p144
      $region42: #{tpu_custom_call.1} parent=39 // pred_check_branch
        %6060 = sbr.rel (%p6058) target = $region44
      $region43: #{tpu_custom_call.1} parent=39 // pred_region
        _
      $region44: #{tpu_custom_call.1} parent=39 // pred_fallthru
        _
    $region40: #{tpu_custom_call.1} parent=5 // pred_fallthru
      _
    %p6061 = scmp.le.s32.totalorder 2, %s11
    // Predicated region
    $region45: #{tpu_custom_call.1} parent=5 // pred_check
      %p6062 = pneg %p6061
    $region46: #{tpu_custom_call.1} parent=5 // pred_check_branch
      %6064 = sbr.rel (%p6062) target = $region48
    $region47: #{tpu_custom_call.1} parent=5 // pred_region
      %s6065 = ssub.s32 %s11, 2
      // Predicated region
      $region49: #{tpu_custom_call.1} parent=47 // pred_check
        %p6066 = pneg %p150
      $region50: #{tpu_custom_call.1} parent=47 // pred_check_branch
        %6068 = sbr.rel (%p6066) target = $region52
      $region51: #{tpu_custom_call.1} parent=47 // pred_region
        %p6069 = scmp.lt.s32.totalorder %s17, 1
        %s6070 = scalar_select %p6069, %s17, 1
        %s6071 = smul.addr %s6070, 32
        %s6072 = smul.addr %s6071, 8
        %s6073 = scalar_lea.vmem %s5, %s6072
      $region52: #{tpu_custom_call.1} parent=47 // pred_fallthru
        _
    $region48: #{tpu_custom_call.1} parent=5 // pred_fallthru
      _
  $region6: #{tpu_custom_call.1} parent=0 // loop_footer
    %s15 = sadd.s32 1, %s11
  $region7: #{tpu_custom_call.1} parent=0 // loop_footer_branch
    %10 = sbr.rel target = $region3
  $region8: #{tpu_custom_call.1} parent=0 // loop_exit
    _

</llo_original>
